<compile_context>
chip_gen: v6e
topology: v6e:2x2x1
jax: 0.10.0
libtpu: 0.0.40
codegen_flags: <defaults>
</compile_context>

<pallas_src>
import functools

import jax
import jax.numpy as jnp
from jax import lax
from jax.experimental import pallas as pl
from jax.experimental.pallas import tpu as pltpu

EPS = 1e-8
KSIZE = 5
PAD = (KSIZE - 1) // 2   # 2


def _round_up(n, m):
    return ((n + m - 1) // m) * m


# --------------------------------------------------------------------------------------
# Pass A: per-batch Gram matrix S = X X^T and row-sums r = sum_t x[:, t], streamed over
#         lane tiles.  This is everything GroupNorm-1 needs (see module docstring).
# --------------------------------------------------------------------------------------
def _xstats_kernel(x_ref, gram_ref, rsum_ref):
    t = pl.program_id(1)

    @pl.when(t == 0)
    def _():
        gram_ref[...] = jnp.zeros_like(gram_ref)
        rsum_ref[...] = jnp.zeros_like(rsum_ref)

    xf = x_ref[0].astype(jnp.float32)                       # (Cp, TT)
    # Contract the lane (time) axis of both operands: X_tile @ X_tile^T -> (Cp, Cp).
    gram_ref[0] += lax.dot_general(xf, xf, (((1,), (1,)), ((), ())),
                                   preferred_element_type=jnp.float32)
    rsum_ref[0] += jnp.sum(xf, axis=1, keepdims=True)


# --------------------------------------------------------------------------------------
# Pass B: fc1 (1x1 conv) + GroupNorm-1 folded to per-channel affine + depthwise conv
#         (k=5, pad=2) + ReLU + fc2, plus streamed GroupNorm-2 statistics.
# --------------------------------------------------------------------------------------
def _main_kernel(x_ref, xl_ref, xr_ref, sc1_ref, sh1_ref, w1_ref, dww_ref, dwb_ref,
                 w2_ref, z_ref, stats2_ref, *, t_real, tile_t):
    t = pl.program_id(1)
    TT = tile_t
    Hp = w1_ref.shape[0]

    scale = sc1_ref[0]                                      # (Hp, 1) f32
    shift = sh1_ref[0]                                      # (Hp, 1) f32
    w1 = w1_ref[...]                                        # (Hp, Cp) bf16

    col = lax.broadcasted_iota(jnp.int32, (Hp, TT), 1)
    in_range = col + t * TT < t_real                        # real (non padded) T columns

    # fc1 + GroupNorm-1 (per-channel affine) on the current tile; padded T columns are
    # forced to zero so the conv sees proper zero padding and stats stay clean.
    h = jnp.dot(w1, x_ref[0], preferred_element_type=jnp.float32)        # (Hp, TT)
    hn = jnp.where(in_range, h * scale + shift, 0.0)

    # 128-column halos: recompute fc1 on the neighbouring x columns (x is cheap to
    # re-read; the hidden activation h is never written to / read from HBM).
    col128 = lax.broadcasted_iota(jnp.int32, (Hp, 128), 1)
    hl = jnp.dot(w1, xl_ref[0], preferred_element_type=jnp.float32)      # (Hp, 128)
    hr = jnp.dot(w1, xr_ref[0], preferred_element_type=jnp.float32)      # (Hp, 128)
    hln = jnp.where(t > 0, hl * scale + shift, 0.0)                 # zeros at seq start
    hrn = jnp.where(col128 + (t + 1) * TT < t_real,                 # zeros at seq end
                    hr * scale + shift, 0.0)

    # Depthwise conv (k=5, pad=2): taps via XLU lane rotations on the current tile;
    # the <=2 wrapped boundary columns per tap are patched from the halo columns.
    l_m1 = hln[:, 127:128]        # value at global column t*TT - 1
    l_m2 = hln[:, 126:127]        # value at global column t*TT - 2
    r_p0 = hrn[:, 0:1]            # value at global column (t+1)*TT
    r_p1 = hrn[:, 1:2]            # value at global column (t+1)*TT + 1
    patches = {-2: ((0, l_m2), (1, l_m1)),
               -1: ((0, l_m1),),
               1: ((TT - 1, r_p0),),
               2: ((TT - 2, r_p0), (TT - 1, r_p1))}

    dww = dww_ref[...]                                      # (Hp, KSIZE) f32
    acc = dww[:, PAD:PAD + 1] * hn                          # centre tap (offset 0)
    for d in (-2, -1, 1, 2):
        src = pltpu.roll(hn, shift=(-d) % TT, axis=1)
        for j, v in patches[d]:
            src = jnp.where(col == j, v, src)
        acc = acc + dww[:, d + PAD:d + PAD + 1] * src

    # Bias + ReLU.  Dropout(0.1) is identity at inference.
    # TODO(synk): training-mode dropout (random masking) is not implemented.
    y = jnp.maximum(acc + dwb_ref[...], 0.0)
    y = jnp.where(in_range, y, 0.0)          # keep padded T columns out of the stats

    # fc2: (Cp, Hp) @ (Hp, TT) with bf16 operands, f32 accumulation.
    z = jnp.dot(w2_ref[...], y.astype(w2_ref.dtype), preferred_element_type=jnp.float32)
    z_ref[0] = z

    # Streaming GroupNorm-2 statistics (sum & sum-of-squares), resident accumulator.
    row = lax.broadcasted_iota(jnp.int32, (1, 2, 128), 1)

    @pl.when(t == 0)
    def _():
        stats2_ref[...] = jnp.zeros_like(stats2_ref)

    stats2_ref[...] += jnp.where(row == 0, jnp.sum(z), jnp.sum(z * z))


# --------------------------------------------------------------------------------------
# Pass C: apply GroupNorm-2 (needs the completed global z statistics).
# --------------------------------------------------------------------------------------
def _norm2_kernel(z_ref, stats_ref, g2_ref, b2_ref, o_ref, *, n2):
    st = stats_ref[...]                                     # (1, 2, 128), lanes equal
    total = jnp.max(st[:, 0:1, :])
    total_sq = jnp.max(st[:, 1:2, :])
    mean = total * (1.0 / n2)
    var = jnp.maximum(total_sq * (1.0 / n2) - mean * mean, 0.0)
    inv = lax.rsqrt(var + EPS)
    scale = inv * g2_ref[...]                               # (Cp, 1)
    shift = b2_ref[...] - mean * scale
    o_ref[0] = (z_ref[0] * scale + shift).astype(o_ref.dtype)


# --------------------------------------------------------------------------------------
# Forward (jitted): three pallas_calls + a tiny per-batch stats reduction in between.
# --------------------------------------------------------------------------------------
def _forward(x_p, w1, g1, b1, dw_w, dw_b, w2, g2, b2, *, B, Cin, H, T,
             Cp, Hp, TT, T_pad, n_tt, vmem_limit_bytes):
    f32 = jnp.float32
    R = TT // 128
    n128 = T_pad // 128

    def cparams(sem):
        return pltpu.CompilerParams(dimension_semantics=sem,
                                    vmem_limit_bytes=vmem_limit_bytes)

    # ---- pass A: x Gram / row-sum statistics ----
    gram, rsum = pl.pallas_call(
        _xstats_kernel,
        out_shape=(jax.ShapeDtypeStruct((B, Cp, Cp), f32),
                   jax.ShapeDtypeStruct((B, Cp, 1), f32)),
        grid_spec=pltpu.PrefetchScalarGridSpec(
            num_scalar_prefetch=0, grid=(B, n_tt),
            in_specs=[pl.BlockSpec((1, Cp, TT), lambda b, t: (b, 0, t))],
            out_specs=[pl.BlockSpec((1, Cp, Cp), lambda b, t: (b, 0, 0)),
                       pl.BlockSpec((1, Cp, 1), lambda b, t: (b, 0, 0))]),
        compiler_params=cparams(("parallel", "arbitrary")),
    )(x_p)

    # ---- GroupNorm-1 stats from the Gram (tiny per-batch reduction) ----
    n1 = float(H * T)
    w1f = w1.astype(f32)                                    # bf16-rounded fc1 weights
    G = jnp.dot(w1f.T, w1f)                                 # (Cp, Cp)
    u = jnp.sum(w1f, axis=0)                                # (Cp,)
    sum1 = jnp.einsum("bc,c->b", rsum[:, :, 0], u)
    sumsq1 = jnp.einsum("bij,ij->b", gram, G)
    mean1 = sum1 / n1
    var1 = jnp.maximum(sumsq1 / n1 - mean1 * mean1, 0.0)
    inv1 = lax.rsqrt(var1 + EPS)
    scale1 = inv1[:, None, None] * g1[None]                 # (B, Hp, 1)
    shift1 = b1[None] - mean1[:, None, None] * scale1       # (B, Hp, 1)

    # ---- pass B: fc1 + norm-1 + dwconv + ReLU + fc2 + z statistics ----
    kernel_b = functools.partial(_main_kernel, t_real=T, tile_t=TT)
    z, stats2 = pl.pallas_call(
        kernel_b,
        out_shape=(jax.ShapeDtypeStruct((B, Cp, T_pad), f32),
                   jax.ShapeDtypeStruct((B, 2, 128), f32)),
        grid_spec=pltpu.PrefetchScalarGridSpec(
            num_scalar_prefetch=0, grid=(B, n_tt),
            in_specs=[
                pl.BlockSpec((1, Cp, TT), lambda b, t: (b, 0, t)),
                pl.BlockSpec((1, Cp, 128),
                             lambda b, t: (b, 0, jnp.maximum(t * R - 1, 0))),
                pl.BlockSpec((1, Cp, 128),
                             lambda b, t: (b, 0, jnp.minimum((t + 1) * R, n128 - 1))),
                pl.BlockSpec((1, Hp, 1), lambda b, t: (b, 0, 0)),
                pl.BlockSpec((1, Hp, 1), lambda b, t: (b, 0, 0)),
                pl.BlockSpec((Hp, Cp), lambda b, t: (0, 0)),
                pl.BlockSpec((Hp, KSIZE), lambda b, t: (0, 0)),
                pl.BlockSpec((Hp, 1), lambda b, t: (0, 0)),
                pl.BlockSpec((Cp, Hp), lambda b, t: (0, 0)),
            ],
            out_specs=[pl.BlockSpec((1, Cp, TT), lambda b, t: (b, 0, t)),
                       pl.BlockSpec((1, 2, 128), lambda b, t: (b, 0, 0))]),
        compiler_params=cparams(("parallel", "arbitrary")),
    )(x_p, x_p, x_p, scale1, shift1, w1, dw_w, dw_b, w2)

    # ---- pass C: apply GroupNorm-2 ----
    kernel_c = functools.partial(_norm2_kernel, n2=float(Cin * T))
    out = pl.pallas_call(
        kernel_c,
        out_shape=jax.ShapeDtypeStruct((B, Cp, T_pad), f32),
        grid_spec=pltpu.PrefetchScalarGridSpec(
            num_scalar_prefetch=0, grid=(B, n_tt),
            in_specs=[pl.BlockSpec((1, Cp, TT), lambda b, t: (b, 0, t)),
                      pl.BlockSpec((1, 2, 128), lambda b, t: (b, 0, 0)),
                      pl.BlockSpec((Cp, 1), lambda b, t: (0, 0)),
                      pl.BlockSpec((Cp, 1), lambda b, t: (0, 0))],
            out_specs=pl.BlockSpec((1, Cp, TT), lambda b, t: (b, 0, t))),
        compiler_params=cparams(("parallel", "parallel")),
    )(z, stats2, g2, b2)
    return out


def mlp_pallas(x, params, *, tile_t=512, channel_align=128,
               compute_dtype=jnp.bfloat16, vmem_limit_bytes=48 * 1024 * 1024):
    """x: (B, Cin, T) float32.  tile_t: lane tile width (use 256 on v7x for big H)."""
    B, Cin, T = x.shape
    H = params["w1"].shape[0]

    Cp = _round_up(Cin, channel_align)
    Hp = _round_up(H, channel_align)
    TT = tile_t if T >= tile_t else _round_up(T, 128)
    TT = _round_up(TT, 128)
    T_pad = _round_up(T, TT)
    n_tt = T_pad // TT

    f32 = jnp.float32
    # Zero padding: zero weight / gamma / beta rows keep every padded channel exactly
    # zero end-to-end; zero time columns contribute nothing to the streamed statistics.
    x_p = jnp.pad(x.astype(f32), ((0, 0), (0, Cp - Cin), (0, T_pad - T))).astype(compute_dtype)
    w1 = jnp.pad(params["w1"], ((0, Hp - H), (0, Cp - Cin))).astype(compute_dtype)
    w2 = jnp.pad(params["w2"], ((0, Cp - Cin), (0, Hp - H))).astype(compute_dtype)
    g1 = jnp.pad(params["g1"], ((0, Hp - H), (0, 0))).astype(f32)
    b1 = jnp.pad(params["b1"], ((0, Hp - H), (0, 0))).astype(f32)
    dw_w = jnp.pad(params["dw_w"], ((0, Hp - H), (0, 0))).astype(f32)
    dw_b = jnp.pad(params["dw_b"], ((0, Hp - H), (0, 0))).astype(f32)
    g2 = jnp.pad(params["g2"], ((0, Cp - Cin), (0, 0))).astype(f32)
    b2 = jnp.pad(params["b2"], ((0, Cp - Cin), (0, 0))).astype(f32)

    fwd = jax.jit(functools.partial(
        _forward, B=B, Cin=Cin, H=H, T=T, Cp=Cp, Hp=Hp, TT=TT,
        T_pad=T_pad, n_tt=n_tt, vmem_limit_bytes=vmem_limit_bytes))
    out = fwd(x_p, w1, g1, b1, dw_w, dw_b, w2, g2, b2)
    return out[:, :Cin, :T]


# --------------------------------------------------------------------------------------
# Pure-JAX reference (mirrors the PyTorch forward in eval mode).
# --------------------------------------------------------------------------------------
def mlp_reference(x, params, compute_dtype=jnp.bfloat16):
    f32 = jnp.float32
    w1 = params["w1"].astype(compute_dtype)
    w2 = params["w2"].astype(compute_dtype)
    g1, b1 = params["g1"], params["b1"]
    dw_w, dw_b = params["dw_w"], params["dw_b"]
    g2, b2 = params["g2"], params["b2"]

    def gln(v, g, b):   # GroupNorm(1, C), eps=1e-8, biased variance over (C, T)
        m = jnp.mean(v, axis=(1, 2), keepdims=True)
        var = jnp.mean((v - m) ** 2, axis=(1, 2), keepdims=True)
        return (v - m) / jnp.sqrt(var + EPS) * g[None] + b[None]

    h = jnp.einsum("hc,bct->bht", w1, x.astype(compute_dtype),
                   preferred_element_type=f32)
    h = gln(h, g1, b1)
    B, H, T = h.shape
    hp = jnp.pad(h, ((0, 0), (0, 0), (PAD, PAD)))
    y = jnp.zeros_like(h)
    for k in range(KSIZE):
        y = y + dw_w[None, :, k:k + 1] * hp[:, :, k:k + T]
    y = jnp.maximum(y + dw_b[None], 0.0)
    z = jnp.einsum("ch,bht->bct", w2, y.astype(compute_dtype),
                   preferred_element_type=f32)
    return gln(z, g2, b2)


def init_params(key, in_features, hidden):
    ks = jax.random.split(key, 4)
    w1 = jax.random.uniform(ks[0], (hidden, in_features), jnp.float32, -0.5, 0.5)
    w2 = jax.random.uniform(ks[1], (in_features, hidden), jnp.float32, -0.3, 0.3)
    dw_w = jax.random.uniform(ks[2], (hidden, KSIZE), jnp.float32, -0.4, 0.4)
    dw_b = jax.random.uniform(ks[3], (hidden, 1), jnp.float32, -0.1, 0.1)
    g1 = jnp.ones((hidden, 1), jnp.float32)
    b1 = jnp.zeros((hidden, 1), jnp.float32)
    g2 = jnp.ones((in_features, 1), jnp.float32)
    b2 = jnp.zeros((in_features, 1), jnp.float32)
    return dict(w1=w1, g1=g1, b1=b1, dw_w=dw_w, dw_b=dw_b, w2=w2, g2=g2, b2=b2)


if __name__ == "__main__":
    # Small but non-trivial: T=300 pads to 384 -> three 128-lane tiles, exercising the
    # left/right conv halos, a right halo that overlaps the padded tail, the padded-tail
    # masking of the last tile, and the streamed GroupNorm statistics.
    B, Cin, T, H = 2, 4, 300, 32
    key = jax.random.PRNGKey(0)
    kx, kp = jax.random.split(key)
    x = jax.random.normal(kx, (B, Cin, T), dtype=jnp.float32)
    params = init_params(kp, Cin, H)

    out = mlp_pallas(x, params, tile_t=128)
    out = jax.block_until_ready(out)
    assert out.shape == (B, Cin, T)

    # Reference with matching bf16 matmul operands (TPU-standard precision choice).
    ref = mlp_reference(x, params, compute_dtype=jnp.bfloat16)
    err = float(jnp.max(jnp.abs(out - ref)))
    assert jnp.allclose(out, ref, rtol=5e-3, atol=5e-3), f"mismatch: max abs err {err}"

    # Sanity bound against pure-f32 math (bf16 operands introduce ~1% rel. error).
    ref32 = mlp_reference(x, params, compute_dtype=jnp.float32)
    assert jnp.allclose(out, ref32, rtol=1e-1, atol=1e-1)

    print("KERNEL_OK")
</pallas_src>

<mosaic_0001>
module attributes {stable_mosaic.version = 11 : i64} {
  func.func @_xstats_kernel(%arg0: i32, %arg1: i32, %arg2: memref<1x128x128xbf16, #tpu.memory_space<vmem>>, %arg3: memref<1x128x128xf32, #tpu.memory_space<vmem>>, %arg4: memref<1x128x1xf32, #tpu.memory_space<vmem>>) attributes {dimension_semantics = [#tpu.dimension_semantics<parallel>, #tpu.dimension_semantics<arbitrary>], iteration_bounds = array<i64: 2, 3>, scalar_prefetch = 0 : i64, scratch_operands = 0 : i64, tpu.core_type = #tpu.core_type<tc>, window_params = [{transform_indices = @transform_0, window_bounds = array<i64: 1, 128, 128>}, {transform_indices = @transform_1, window_bounds = array<i64: 1, 128, 128>}, {transform_indices = @transform_2, window_bounds = array<i64: 1, 128, 1>}]} {
    %c0_i32 = arith.constant 0 : i32
    %0 = arith.cmpi eq, %arg1, %c0_i32 : i32
    %1 = arith.extui %0 : i1 to i32
    %c0_i32_0 = arith.constant 0 : i32
    %2 = arith.cmpi ne, %1, %c0_i32_0 : i32
    scf.if %2 {
      %cst_16 = arith.constant 0.000000e+00 : f32
      %21 = vector.broadcast %cst_16 : f32 to vector<1x128x128xf32>
      %c0_17 = arith.constant 0 : index
      %c0_18 = arith.constant 0 : index
      %c0_19 = arith.constant 0 : index
      %22 = vector.load %arg3[%c0_17, %c0_18, %c0_19] : memref<1x128x128xf32, #tpu.memory_space<vmem>>, vector<1x128x128xf32>
      tpu.vector_store %arg3[%c0_17, %c0_18, %c0_19], %21 {strides = array<i32>} : memref<1x128x128xf32, #tpu.memory_space<vmem>>, vector<1x128x128xf32>,
      %cst_20 = arith.constant 0.000000e+00 : f32
      %23 = vector.broadcast %cst_20 : f32 to vector<1x128x1xf32>
      %c0_21 = arith.constant 0 : index
      %c0_22 = arith.constant 0 : index
      %c0_23 = arith.constant 0 : index
      %24 = vector.load %arg4[%c0_21, %c0_22, %c0_23] : memref<1x128x1xf32, #tpu.memory_space<vmem>>, vector<1x128x1xf32>
      tpu.vector_store %arg4[%c0_21, %c0_22, %c0_23], %23 {strides = array<i32>} : memref<1x128x1xf32, #tpu.memory_space<vmem>>, vector<1x128x1xf32>,
    } else {
    }
    %c0 = arith.constant 0 : index
    %c0_1 = arith.constant 0 : index
    %c0_2 = arith.constant 0 : index
    %3 = vector.load %arg2[%c0, %c0_1, %c0_2] : memref<1x128x128xbf16, #tpu.memory_space<vmem>>, vector<1x128x128xbf16>
    %4 = vector.shape_cast %3 : vector<1x128x128xbf16> to vector<128x128xbf16>
    %5 = arith.extf %4 : vector<128x128xbf16> to vector<128x128xf32>
    %c0_3 = arith.constant 0 : index
    %c0_4 = arith.constant 0 : index
    %c0_5 = arith.constant 0 : index
    %6 = vector.load %arg3[%c0_3, %c0_4, %c0_5] : memref<1x128x128xf32, #tpu.memory_space<vmem>>, vector<1x128x128xf32>
    %7 = vector.shape_cast %6 : vector<1x128x128xf32> to vector<128x128xf32>
    %cst = arith.constant dense<0.000000e+00> : vector<128x128xf32>
    %8 = tpu.matmul %5, %5, %cst {dimension_numbers = #tpu.dot_dimension_numbers<[1], [1], [0], [0], [0, 0, 1, 0], [], []>} : vector<128x128xf32>, vector<128x128xf32>, vector<128x128xf32> -> vector<128x128xf32>
    %9 = arith.addf %7, %8 : vector<128x128xf32>
    %c0_6 = arith.constant 0 : index
    %c0_7 = arith.constant 0 : index
    %c0_8 = arith.constant 0 : index
    %10 = vector.load %arg3[%c0_6, %c0_7, %c0_8] : memref<1x128x128xf32, #tpu.memory_space<vmem>>, vector<1x128x128xf32>
    %11 = vector.shape_cast %10 : vector<1x128x128xf32> to vector<128x128xf32>
    %12 = vector.shape_cast %9 : vector<128x128xf32> to vector<1x128x128xf32>
    tpu.vector_store %arg3[%c0_6, %c0_7, %c0_8], %12 {strides = array<i32>} : memref<1x128x128xf32, #tpu.memory_space<vmem>>, vector<1x128x128xf32>,
    %c0_9 = arith.constant 0 : index
    %c0_10 = arith.constant 0 : index
    %c0_11 = arith.constant 0 : index
    %13 = vector.load %arg4[%c0_9, %c0_10, %c0_11] : memref<1x128x1xf32, #tpu.memory_space<vmem>>, vector<1x128x1xf32>
    %14 = vector.shape_cast %13 : vector<1x128x1xf32> to vector<128x1xf32>
    %cst_12 = arith.constant dense<0.000000e+00> : vector<128xf32>
    %15 = vector.multi_reduction <add>, %5, %cst_12 [1] : vector<128x128xf32> to vector<128xf32>
    %16 = vector.shape_cast %15 : vector<128xf32> to vector<128x1xf32>
    %17 = arith.addf %14, %16 : vector<128x1xf32>
    %c0_13 = arith.constant 0 : index
    %c0_14 = arith.constant 0 : index
    %c0_15 = arith.constant 0 : index
    %18 = vector.load %arg4[%c0_13, %c0_14, %c0_15] : memref<1x128x1xf32, #tpu.memory_space<vmem>>, vector<1x128x1xf32>
    %19 = vector.shape_cast %18 : vector<1x128x1xf32> to vector<128x1xf32>
    %20 = vector.shape_cast %17 : vector<128x1xf32> to vector<1x128x1xf32>
    tpu.vector_store %arg4[%c0_13, %c0_14, %c0_15], %20 {strides = array<i32>} : memref<1x128x1xf32, #tpu.memory_space<vmem>>, vector<1x128x1xf32>,
    return
  }
  func.func @transform_0(%arg0: i32, %arg1: i32) -> (i32, i32, i32) {
    %c0_i32 = arith.constant 0 : i32
    %c0_i32_0 = arith.constant 0 : i32
    return %arg0, %c0_i32, %arg1 : i32, i32, i32
  }
  func.func @transform_1(%arg0: i32, %arg1: i32) -> (i32, i32, i32) {
    %c0_i32 = arith.constant 0 : i32
    %c0_i32_0 = arith.constant 0 : i32
    %c0_i32_1 = arith.constant 0 : i32
    return %arg0, %c0_i32, %c0_i32_0 : i32, i32, i32
  }
  func.func @transform_2(%arg0: i32, %arg1: i32) -> (i32, i32, i32) {
    %c0_i32 = arith.constant 0 : i32
    %c0_i32_0 = arith.constant 0 : i32
    %c0_i32_1 = arith.constant 0 : i32
    return %arg0, %c0_i32, %c0_i32_0 : i32, i32, i32
  }
}

module attributes {stable_mosaic.version = 11 : i64} {
  func.func @_main_kernel(%arg0: i32, %arg1: i32, %arg2: memref<1x128x128xbf16, #tpu.memory_space<vmem>>, %arg3: memref<1x128x128xbf16, #tpu.memory_space<vmem>>, %arg4: memref<1x128x128xbf16, #tpu.memory_space<vmem>>, %arg5: memref<1x128x1xf32, #tpu.memory_space<vmem>>, %arg6: memref<1x128x1xf32, #tpu.memory_space<vmem>>, %arg7: memref<128x128xbf16, #tpu.memory_space<vmem>>, %arg8: memref<128x5xf32, #tpu.memory_space<vmem>>, %arg9: memref<128x1xf32, #tpu.memory_space<vmem>>, %arg10: memref<128x128xbf16, #tpu.memory_space<vmem>>, %arg11: memref<1x128x128xf32, #tpu.memory_space<vmem>>, %arg12: memref<1x2x128xf32, #tpu.memory_space<vmem>>) attributes {dimension_semantics = [#tpu.dimension_semantics<parallel>, #tpu.dimension_semantics<arbitrary>], iteration_bounds = array<i64: 2, 3>, scalar_prefetch = 0 : i64, scratch_operands = 0 : i64, tpu.core_type = #tpu.core_type<tc>, window_params = [{transform_indices = @transform_0, window_bounds = array<i64: 1, 128, 128>}, {transform_indices = @transform_1, window_bounds = array<i64: 1, 128, 128>}, {transform_indices = @transform_2, window_bounds = array<i64: 1, 128, 128>}, {transform_indices = @transform_3, window_bounds = array<i64: 1, 128, 1>}, {transform_indices = @transform_4, window_bounds = array<i64: 1, 128, 1>}, {pipeline_mode = #tpu.pipeline_mode<synchronous>, transform_indices = @transform_5, window_bounds = array<i64: 128, 128>}, {pipeline_mode = #tpu.pipeline_mode<synchronous>, transform_indices = @transform_6, window_bounds = array<i64: 128, 5>}, {pipeline_mode = #tpu.pipeline_mode<synchronous>, transform_indices = @transform_7, window_bounds = array<i64: 128, 1>}, {pipeline_mode = #tpu.pipeline_mode<synchronous>, transform_indices = @transform_8, window_bounds = array<i64: 128, 128>}, {transform_indices = @transform_9, window_bounds = array<i64: 1, 128, 128>}, {transform_indices = @transform_10, window_bounds = array<i64: 1, 2, 128>}]} {
    %c0 = arith.constant 0 : index
    %c0_0 = arith.constant 0 : index
    %c0_1 = arith.constant 0 : index
    %0 = vector.load %arg5[%c0, %c0_0, %c0_1] : memref<1x128x1xf32, #tpu.memory_space<vmem>>, vector<1x128x1xf32>
    %1 = vector.shape_cast %0 : vector<1x128x1xf32> to vector<128x1xf32>
    %c0_2 = arith.constant 0 : index
    %c0_3 = arith.constant 0 : index
    %c0_4 = arith.constant 0 : index
    %2 = vector.load %arg6[%c0_2, %c0_3, %c0_4] : memref<1x128x1xf32, #tpu.memory_space<vmem>>, vector<1x128x1xf32>
    %3 = vector.shape_cast %2 : vector<1x128x1xf32> to vector<128x1xf32>
    %c0_5 = arith.constant 0 : index
    %c0_6 = arith.constant 0 : index
    %4 = vector.load %arg7[%c0_5, %c0_6] : memref<128x128xbf16, #tpu.memory_space<vmem>>, vector<128x128xbf16>
    %5 = tpu.iota {dimensions = array<i32: 1>} : vector<128x128xi32>
    %c128_i32 = arith.constant 128 : i32
    %6 = arith.muli %arg1, %c128_i32 : i32
    %7 = vector.broadcast %6 : i32 to vector<128x128xi32>
    %8 = arith.addi %5, %7 : vector<128x128xi32>
    %c300_i32 = arith.constant 300 : i32
    %9 = vector.broadcast %c300_i32 : i32 to vector<128x128xi32>
    %10 = arith.cmpi slt, %8, %9 : vector<128x128xi32>
    %c0_7 = arith.constant 0 : index
    %c0_8 = arith.constant 0 : index
    %c0_9 = arith.constant 0 : index
    %11 = vector.load %arg2[%c0_7, %c0_8, %c0_9] : memref<1x128x128xbf16, #tpu.memory_space<vmem>>, vector<1x128x128xbf16>
    %12 = vector.shape_cast %11 : vector<1x128x128xbf16> to vector<128x128xbf16>
    %cst = arith.constant dense<0.000000e+00> : vector<128x128xf32>
    %13 = tpu.matmul %4, %12, %cst {dimension_numbers = #tpu.dot_dimension_numbers<[1], [0], [0], [1], [0, 0, 1, 1], [], []>} : vector<128x128xbf16>, vector<128x128xbf16>, vector<128x128xf32> -> vector<128x128xf32>
    %14 = vector.broadcast %1 : vector<128x1xf32> to vector<128x128xf32>
    %15 = arith.mulf %13, %14 : vector<128x128xf32>
    %16 = vector.broadcast %3 : vector<128x1xf32> to vector<128x128xf32>
    %17 = arith.addf %15, %16 : vector<128x128xf32>
    %cst_10 = arith.constant 0.000000e+00 : f32
    %18 = vector.broadcast %cst_10 : f32 to vector<128x128xf32>
    %19 = arith.select %10, %17, %18 : vector<128x128xi1>, vector<128x128xf32>
    %20 = tpu.iota {dimensions = array<i32: 1>} : vector<128x128xi32>
    %c0_11 = arith.constant 0 : index
    %c0_12 = arith.constant 0 : index
    %c0_13 = arith.constant 0 : index
    %21 = vector.load %arg3[%c0_11, %c0_12, %c0_13] : memref<1x128x128xbf16, #tpu.memory_space<vmem>>, vector<1x128x128xbf16>
    %22 = vector.shape_cast %21 : vector<1x128x128xbf16> to vector<128x128xbf16>
    %cst_14 = arith.constant dense<0.000000e+00> : vector<128x128xf32>
    %23 = tpu.matmul %4, %22, %cst_14 {dimension_numbers = #tpu.dot_dimension_numbers<[1], [0], [0], [1], [0, 0, 1, 1], [], []>} : vector<128x128xbf16>, vector<128x128xbf16>, vector<128x128xf32> -> vector<128x128xf32>
    %c0_15 = arith.constant 0 : index
    %c0_16 = arith.constant 0 : index
    %c0_17 = arith.constant 0 : index
    %24 = vector.load %arg4[%c0_15, %c0_16, %c0_17] : memref<1x128x128xbf16, #tpu.memory_space<vmem>>, vector<1x128x128xbf16>
    %25 = vector.shape_cast %24 : vector<1x128x128xbf16> to vector<128x128xbf16>
    %cst_18 = arith.constant dense<0.000000e+00> : vector<128x128xf32>
    %26 = tpu.matmul %4, %25, %cst_18 {dimension_numbers = #tpu.dot_dimension_numbers<[1], [0], [0], [1], [0, 0, 1, 1], [], []>} : vector<128x128xbf16>, vector<128x128xbf16>, vector<128x128xf32> -> vector<128x128xf32>
    %c0_i32 = arith.constant 0 : i32
    %27 = arith.cmpi sgt, %arg1, %c0_i32 : i32
    %28 = vector.broadcast %1 : vector<128x1xf32> to vector<128x128xf32>
    %29 = arith.mulf %23, %28 : vector<128x128xf32>
    %30 = vector.broadcast %3 : vector<128x1xf32> to vector<128x128xf32>
    %31 = arith.addf %29, %30 : vector<128x128xf32>
    %cst_19 = arith.constant 0.000000e+00 : f32
    %32 = vector.broadcast %cst_19 : f32 to vector<128x128xf32>
    %33 = arith.select %27, %31, %32 : vector<128x128xf32>
    %c1_i32 = arith.constant 1 : i32
    %34 = arith.addi %arg1, %c1_i32 : i32
    %c128_i32_20 = arith.constant 128 : i32
    %35 = arith.muli %34, %c128_i32_20 : i32
    %36 = vector.broadcast %35 : i32 to vector<128x128xi32>
    %37 = arith.addi %20, %36 : vector<128x128xi32>
    %c300_i32_21 = arith.constant 300 : i32
    %38 = vector.broadcast %c300_i32_21 : i32 to vector<128x128xi32>
    %39 = arith.cmpi slt, %37, %38 : vector<128x128xi32>
    %40 = vector.broadcast %1 : vector<128x1xf32> to vector<128x128xf32>
    %41 = arith.mulf %26, %40 : vector<128x128xf32>
    %42 = vector.broadcast %3 : vector<128x1xf32> to vector<128x128xf32>
    %43 = arith.addf %41, %42 : vector<128x128xf32>
    %cst_22 = arith.constant 0.000000e+00 : f32
    %44 = vector.broadcast %cst_22 : f32 to vector<128x128xf32>
    %45 = arith.select %39, %43, %44 : vector<128x128xi1>, vector<128x128xf32>
    %46 = vector.extract_strided_slice %33 {offsets = [0, 127], sizes = [128, 1], strides = [1, 1]} : vector<128x128xf32> to vector<128x1xf32>
    %47 = vector.extract_strided_slice %33 {offsets = [0, 126], sizes = [128, 1], strides = [1, 1]} : vector<128x128xf32> to vector<128x1xf32>
    %48 = vector.extract_strided_slice %45 {offsets = [0, 0], sizes = [128, 1], strides = [1, 1]} : vector<128x128xf32> to vector<128x1xf32>
    %49 = vector.extract_strided_slice %45 {offsets = [0, 1], sizes = [128, 1], strides = [1, 1]} : vector<128x128xf32> to vector<128x1xf32>
    %c0_23 = arith.constant 0 : index
    %c0_24 = arith.constant 0 : index
    %50 = vector.load %arg8[%c0_23, %c0_24] : memref<128x5xf32, #tpu.memory_space<vmem>>, vector<128x5xf32>
    %51 = vector.extract_strided_slice %50 {offsets = [0, 2], sizes = [128, 1], strides = [1, 1]} : vector<128x5xf32> to vector<128x1xf32>
    %52 = vector.broadcast %51 : vector<128x1xf32> to vector<128x128xf32>
    %53 = arith.mulf %52, %19 : vector<128x128xf32>
    %c2_i32 = arith.constant 2 : i32
    %54 = tpu.dynamic_rotate %19 by %c2_i32 dim 1 : vector<128x128xf32>, i32 -> vector<128x128xf32>
    %c0_i32_25 = arith.constant 0 : i32
    %55 = vector.broadcast %c0_i32_25 : i32 to vector<128x128xi32>
    %56 = arith.cmpi eq, %5, %55 : vector<128x128xi32>
    %57 = vector.shape_cast %47 : vector<128x1xf32> to vector<128x1xf32>
    %58 = vector.broadcast %57 : vector<128x1xf32> to vector<128x128xf32>
    %59 = arith.select %56, %58, %54 : vector<128x128xi1>, vector<128x128xf32>
    %c1_i32_26 = arith.constant 1 : i32
    %60 = vector.broadcast %c1_i32_26 : i32 to vector<128x128xi32>
    %61 = arith.cmpi eq, %5, %60 : vector<128x128xi32>
    %62 = vector.shape_cast %46 : vector<128x1xf32> to vector<128x1xf32>
    %63 = vector.broadcast %62 : vector<128x1xf32> to vector<128x128xf32>
    %64 = arith.select %61, %63, %59 : vector<128x128xi1>, vector<128x128xf32>
    %65 = vector.extract_strided_slice %50 {offsets = [0, 0], sizes = [128, 1], strides = [1, 1]} : vector<128x5xf32> to vector<128x1xf32>
    %66 = vector.broadcast %65 : vector<128x1xf32> to vector<128x128xf32>
    %67 = arith.mulf %66, %64 : vector<128x128xf32>
    %68 = arith.addf %53, %67 : vector<128x128xf32>
    %c1_i32_27 = arith.constant 1 : i32
    %69 = tpu.dynamic_rotate %19 by %c1_i32_27 dim 1 : vector<128x128xf32>, i32 -> vector<128x128xf32>
    %c0_i32_28 = arith.constant 0 : i32
    %70 = vector.broadcast %c0_i32_28 : i32 to vector<128x128xi32>
    %71 = arith.cmpi eq, %5, %70 : vector<128x128xi32>
    %72 = vector.shape_cast %46 : vector<128x1xf32> to vector<128x1xf32>
    %73 = vector.broadcast %72 : vector<128x1xf32> to vector<128x128xf32>
    %74 = arith.select %71, %73, %69 : vector<128x128xi1>, vector<128x128xf32>
    %75 = vector.extract_strided_slice %50 {offsets = [0, 1], sizes = [128, 1], strides = [1, 1]} : vector<128x5xf32> to vector<128x1xf32>
    %76 = vector.broadcast %75 : vector<128x1xf32> to vector<128x128xf32>
    %77 = arith.mulf %76, %74 : vector<128x128xf32>
    %78 = arith.addf %68, %77 : vector<128x128xf32>
    %c127_i32 = arith.constant 127 : i32
    %79 = tpu.dynamic_rotate %19 by %c127_i32 dim 1 : vector<128x128xf32>, i32 -> vector<128x128xf32>
    %c127_i32_29 = arith.constant 127 : i32
    %80 = vector.broadcast %c127_i32_29 : i32 to vector<128x128xi32>
    %81 = arith.cmpi eq, %5, %80 : vector<128x128xi32>
    %82 = vector.shape_cast %48 : vector<128x1xf32> to vector<128x1xf32>
    %83 = vector.broadcast %82 : vector<128x1xf32> to vector<128x128xf32>
    %84 = arith.select %81, %83, %79 : vector<128x128xi1>, vector<128x128xf32>
    %85 = vector.extract_strided_slice %50 {offsets = [0, 3], sizes = [128, 1], strides = [1, 1]} : vector<128x5xf32> to vector<128x1xf32>
    %86 = vector.broadcast %85 : vector<128x1xf32> to vector<128x128xf32>
    %87 = arith.mulf %86, %84 : vector<128x128xf32>
    %88 = arith.addf %78, %87 : vector<128x128xf32>
    %c126_i32 = arith.constant 126 : i32
    %89 = tpu.dynamic_rotate %19 by %c126_i32 dim 1 : vector<128x128xf32>, i32 -> vector<128x128xf32>
    %c126_i32_30 = arith.constant 126 : i32
    %90 = vector.broadcast %c126_i32_30 : i32 to vector<128x128xi32>
    %91 = arith.cmpi eq, %5, %90 : vector<128x128xi32>
    %92 = vector.shape_cast %48 : vector<128x1xf32> to vector<128x1xf32>
    %93 = vector.broadcast %92 : vector<128x1xf32> to vector<128x128xf32>
    %94 = arith.select %91, %93, %89 : vector<128x128xi1>, vector<128x128xf32>
    %c127_i32_31 = arith.constant 127 : i32
    %95 = vector.broadcast %c127_i32_31 : i32 to vector<128x128xi32>
    %96 = arith.cmpi eq, %5, %95 : vector<128x128xi32>
    %97 = vector.shape_cast %49 : vector<128x1xf32> to vector<128x1xf32>
    %98 = vector.broadcast %97 : vector<128x1xf32> to vector<128x128xf32>
    %99 = arith.select %96, %98, %94 : vector<128x128xi1>, vector<128x128xf32>
    %100 = vector.extract_strided_slice %50 {offsets = [0, 4], sizes = [128, 1], strides = [1, 1]} : vector<128x5xf32> to vector<128x1xf32>
    %101 = vector.broadcast %100 : vector<128x1xf32> to vector<128x128xf32>
    %102 = arith.mulf %101, %99 : vector<128x128xf32>
    %103 = arith.addf %88, %102 : vector<128x128xf32>
    %c0_32 = arith.constant 0 : index
    %c0_33 = arith.constant 0 : index
    %104 = vector.load %arg9[%c0_32, %c0_33] : memref<128x1xf32, #tpu.memory_space<vmem>>, vector<128x1xf32>
    %105 = vector.broadcast %104 : vector<128x1xf32> to vector<128x128xf32>
    %106 = arith.addf %103, %105 : vector<128x128xf32>
    %cst_34 = arith.constant 0.000000e+00 : f32
    %107 = vector.broadcast %cst_34 : f32 to vector<128x128xf32>
    %108 = arith.maximumf %106, %107 : vector<128x128xf32>
    %cst_35 = arith.constant 0.000000e+00 : f32
    %109 = vector.broadcast %cst_35 : f32 to vector<128x128xf32>
    %110 = arith.select %10, %108, %109 : vector<128x128xi1>, vector<128x128xf32>
    %c0_36 = arith.constant 0 : index
    %c0_37 = arith.constant 0 : index
    %111 = vector.load %arg10[%c0_36, %c0_37] : memref<128x128xbf16, #tpu.memory_space<vmem>>, vector<128x128xbf16>
    %112 = arith.truncf %110 : vector<128x128xf32> to vector<128x128xbf16>
    %cst_38 = arith.constant dense<0.000000e+00> : vector<128x128xf32>
    %113 = tpu.matmul %111, %112, %cst_38 {dimension_numbers = #tpu.dot_dimension_numbers<[1], [0], [0], [1], [0, 0, 1, 1], [], []>} : vector<128x128xbf16>, vector<128x128xbf16>, vector<128x128xf32> -> vector<128x128xf32>
    %c0_39 = arith.constant 0 : index
    %c0_40 = arith.constant 0 : index
    %c0_41 = arith.constant 0 : index
    %114 = vector.load %arg11[%c0_39, %c0_40, %c0_41] : memref<1x128x128xf32, #tpu.memory_space<vmem>>, vector<1x128x128xf32>
    %115 = vector.shape_cast %114 : vector<1x128x128xf32> to vector<128x128xf32>
    %116 = vector.shape_cast %113 : vector<128x128xf32> to vector<1x128x128xf32>
    tpu.vector_store %arg11[%c0_39, %c0_40, %c0_41], %116 {strides = array<i32>} : memref<1x128x128xf32, #tpu.memory_space<vmem>>, vector<1x128x128xf32>,
    %117 = tpu.iota {dimensions = array<i32: 1>} : vector<1x2x128xi32>
    %c0_i32_42 = arith.constant 0 : i32
    %118 = arith.cmpi eq, %arg1, %c0_i32_42 : i32
    %119 = arith.extui %118 : i1 to i32
    %c0_i32_43 = arith.constant 0 : i32
    %120 = arith.cmpi ne, %119, %c0_i32_43 : i32
    scf.if %120 {
      %cst_53 = arith.constant 0.000000e+00 : f32
      %138 = vector.broadcast %cst_53 : f32 to vector<1x2x128xf32>
      %c0_54 = arith.constant 0 : index
      %c0_55 = arith.constant 0 : index
      %c0_56 = arith.constant 0 : index
      %139 = vector.load %arg12[%c0_54, %c0_55, %c0_56] : memref<1x2x128xf32, #tpu.memory_space<vmem>>, vector<1x2x128xf32>
      tpu.vector_store %arg12[%c0_54, %c0_55, %c0_56], %138 {strides = array<i32>} : memref<1x2x128xf32, #tpu.memory_space<vmem>>, vector<1x2x128xf32>,
    } else {
    }
    %c0_44 = arith.constant 0 : index
    %c0_45 = arith.constant 0 : index
    %c0_46 = arith.constant 0 : index
    %121 = vector.load %arg12[%c0_44, %c0_45, %c0_46] : memref<1x2x128xf32, #tpu.memory_space<vmem>>, vector<1x2x128xf32>
    %c0_i32_47 = arith.constant 0 : i32
    %122 = vector.broadcast %c0_i32_47 : i32 to vector<1x2x128xi32>
    %123 = arith.cmpi eq, %117, %122 : vector<1x2x128xi32>
    %124 = vector.shape_cast %113 : vector<128x128xf32> to vector<1x128x128xf32>
    %cst_48 = arith.constant dense<0.000000e+00> : vector<1xf32>
    %125 = vector.multi_reduction <add>, %124, %cst_48 [1, 2] : vector<1x128x128xf32> to vector<1xf32>
    %126 = vector.shape_cast %125 : vector<1xf32> to vector<1x1x1xf32>
    %127 = vector.extract %126[0, 0, 0] : f32 from vector<1x1x1xf32>
    %128 = arith.mulf %113, %113 : vector<128x128xf32>
    %129 = vector.shape_cast %128 : vector<128x128xf32> to vector<1x128x128xf32>
    %cst_49 = arith.constant dense<0.000000e+00> : vector<1xf32>
    %130 = vector.multi_reduction <add>, %129, %cst_49 [1, 2] : vector<1x128x128xf32> to vector<1xf32>
    %131 = vector.shape_cast %130 : vector<1xf32> to vector<1x1x1xf32>
    %132 = vector.extract %131[0, 0, 0] : f32 from vector<1x1x1xf32>
    %133 = vector.broadcast %127 : f32 to vector<1x2x128xf32>
    %134 = vector.broadcast %132 : f32 to vector<1x2x128xf32>
    %135 = arith.select %123, %133, %134 : vector<1x2x128xi1>, vector<1x2x128xf32>
    %136 = arith.addf %121, %135 : vector<1x2x128xf32>
    %c0_50 = arith.constant 0 : index
    %c0_51 = arith.constant 0 : index
    %c0_52 = arith.constant 0 : index
    %137 = vector.load %arg12[%c0_50, %c0_51, %c0_52] : memref<1x2x128xf32, #tpu.memory_space<vmem>>, vector<1x2x128xf32>
    tpu.vector_store %arg12[%c0_50, %c0_51, %c0_52], %136 {strides = array<i32>} : memref<1x2x128xf32, #tpu.memory_space<vmem>>, vector<1x2x128xf32>,
    return
  }
  func.func @transform_0(%arg0: i32, %arg1: i32) -> (i32, i32, i32) {
    %c0_i32 = arith.constant 0 : i32
    %c0_i32_0 = arith.constant 0 : i32
    return %arg0, %c0_i32, %arg1 : i32, i32, i32
  }
  func.func @transform_1(%arg0: i32, %arg1: i32) -> (i32, i32, i32) {
    %c1_i32 = arith.constant 1 : i32
    %0 = arith.muli %arg1, %c1_i32 : i32
    %c1_i32_0 = arith.constant 1 : i32
    %1 = arith.subi %0, %c1_i32_0 : i32
    %c0_i32 = arith.constant 0 : i32
    %2 = arith.maxsi %1, %c0_i32 : i32
    %c0_i32_1 = arith.constant 0 : i32
    %c0_i32_2 = arith.constant 0 : i32
    return %arg0, %c0_i32_1, %2 : i32, i32, i32
  }
  func.func @transform_2(%arg0: i32, %arg1: i32) -> (i32, i32, i32) {
    %c1_i32 = arith.constant 1 : i32
    %0 = arith.addi %arg1, %c1_i32 : i32
    %c1_i32_0 = arith.constant 1 : i32
    %1 = arith.muli %0, %c1_i32_0 : i32
    %c2_i32 = arith.constant 2 : i32
    %2 = arith.minsi %1, %c2_i32 : i32
    %c0_i32 = arith.constant 0 : i32
    %c0_i32_1 = arith.constant 0 : i32
    return %arg0, %c0_i32, %2 : i32, i32, i32
  }
  func.func @transform_3(%arg0: i32, %arg1: i32) -> (i32, i32, i32) {
    %c0_i32 = arith.constant 0 : i32
    %c0_i32_0 = arith.constant 0 : i32
    %c0_i32_1 = arith.constant 0 : i32
    return %arg0, %c0_i32, %c0_i32_0 : i32, i32, i32
  }
  func.func @transform_4(%arg0: i32, %arg1: i32) -> (i32, i32, i32) {
    %c0_i32 = arith.constant 0 : i32
    %c0_i32_0 = arith.constant 0 : i32
    %c0_i32_1 = arith.constant 0 : i32
    return %arg0, %c0_i32, %c0_i32_0 : i32, i32, i32
  }
  func.func @transform_5(%arg0: i32, %arg1: i32) -> (i32, i32) {
    %c0_i32 = arith.constant 0 : i32
    %c0_i32_0 = arith.constant 0 : i32
    %c0_i32_1 = arith.constant 0 : i32
    return %c0_i32, %c0_i32_0 : i32, i32
  }
  func.func @transform_6(%arg0: i32, %arg1: i32) -> (i32, i32) {
    %c0_i32 = arith.constant 0 : i32
    %c0_i32_0 = arith.constant 0 : i32
    %c0_i32_1 = arith.constant 0 : i32
    return %c0_i32, %c0_i32_0 : i32, i32
  }
  func.func @transform_7(%arg0: i32, %arg1: i32) -> (i32, i32) {
    %c0_i32 = arith.constant 0 : i32
    %c0_i32_0 = arith.constant 0 : i32
    %c0_i32_1 = arith.constant 0 : i32
    return %c0_i32, %c0_i32_0 : i32, i32
  }
  func.func @transform_8(%arg0: i32, %arg1: i32) -> (i32, i32) {
    %c0_i32 = arith.constant 0 : i32
    %c0_i32_0 = arith.constant 0 : i32
    %c0_i32_1 = arith.constant 0 : i32
    return %c0_i32, %c0_i32_0 : i32, i32
  }
  func.func @transform_9(%arg0: i32, %arg1: i32) -> (i32, i32, i32) {
    %c0_i32 = arith.constant 0 : i32
    %c0_i32_0 = arith.constant 0 : i32
    return %arg0, %c0_i32, %arg1 : i32, i32, i32
  }
  func.func @transform_10(%arg0: i32, %arg1: i32) -> (i32, i32, i32) {
    %c0_i32 = arith.constant 0 : i32
    %c0_i32_0 = arith.constant 0 : i32
    %c0_i32_1 = arith.constant 0 : i32
    return %arg0, %c0_i32, %c0_i32_0 : i32, i32, i32
  }
}

module attributes {stable_mosaic.version = 11 : i64} {
  func.func @_norm2_kernel(%arg0: i32, %arg1: i32, %arg2: memref<1x128x128xf32, #tpu.memory_space<vmem>>, %arg3: memref<1x2x128xf32, #tpu.memory_space<vmem>>, %arg4: memref<128x1xf32, #tpu.memory_space<vmem>>, %arg5: memref<128x1xf32, #tpu.memory_space<vmem>>, %arg6: memref<1x128x128xf32, #tpu.memory_space<vmem>>) attributes {dimension_semantics = [#tpu.dimension_semantics<parallel>, #tpu.dimension_semantics<parallel>], iteration_bounds = array<i64: 2, 3>, scalar_prefetch = 0 : i64, scratch_operands = 0 : i64, tpu.core_type = #tpu.core_type<tc>, window_params = [{transform_indices = @transform_0, window_bounds = array<i64: 1, 128, 128>}, {transform_indices = @transform_1, window_bounds = array<i64: 1, 2, 128>}, {pipeline_mode = #tpu.pipeline_mode<synchronous>, transform_indices = @transform_2, window_bounds = array<i64: 128, 1>}, {pipeline_mode = #tpu.pipeline_mode<synchronous>, transform_indices = @transform_3, window_bounds = array<i64: 128, 1>}, {transform_indices = @transform_4, window_bounds = array<i64: 1, 128, 128>}]} {
    %c0 = arith.constant 0 : index
    %c0_0 = arith.constant 0 : index
    %c0_1 = arith.constant 0 : index
    %0 = vector.load %arg3[%c0, %c0_0, %c0_1] : memref<1x2x128xf32, #tpu.memory_space<vmem>>, vector<1x2x128xf32>
    %1 = vector.extract_strided_slice %0 {offsets = [0, 0, 0], sizes = [1, 1, 128], strides = [1, 1, 1]} : vector<1x2x128xf32> to vector<1x1x128xf32>
    %2 = vector.shape_cast %1 : vector<1x1x128xf32> to vector<1x1x1x128xf32>
    %cst = arith.constant dense<0xFF800000> : vector<1xf32>
    %3 = vector.multi_reduction <maximumf>, %2, %cst [1, 2, 3] : vector<1x1x1x128xf32> to vector<1xf32>
    %4 = vector.shape_cast %3 : vector<1xf32> to vector<1x1x1x1xf32>
    %5 = vector.extract %4[0, 0, 0, 0] : f32 from vector<1x1x1x1xf32>
    %6 = vector.extract_strided_slice %0 {offsets = [0, 1, 0], sizes = [1, 1, 128], strides = [1, 1, 1]} : vector<1x2x128xf32> to vector<1x1x128xf32>
    %7 = vector.shape_cast %6 : vector<1x1x128xf32> to vector<1x1x1x128xf32>
    %cst_2 = arith.constant dense<0xFF800000> : vector<1xf32>
    %8 = vector.multi_reduction <maximumf>, %7, %cst_2 [1, 2, 3] : vector<1x1x1x128xf32> to vector<1xf32>
    %9 = vector.shape_cast %8 : vector<1xf32> to vector<1x1x1x1xf32>
    %10 = vector.extract %9[0, 0, 0, 0] : f32 from vector<1x1x1x1xf32>
    %cst_3 = arith.constant 8.33333353E-4 : f32
    %11 = arith.mulf %5, %cst_3 : f32
    %cst_4 = arith.constant 8.33333353E-4 : f32
    %12 = arith.mulf %10, %cst_4 : f32
    %13 = arith.mulf %11, %11 : f32
    %14 = arith.subf %12, %13 : f32
    %cst_5 = arith.constant 0.000000e+00 : f32
    %15 = arith.maximumf %14, %cst_5 : f32
    %cst_6 = arith.constant 9.99999993E-9 : f32
    %16 = arith.addf %15, %cst_6 : f32
    %17 = math.rsqrt %16 : f32
    %c0_7 = arith.constant 0 : index
    %c0_8 = arith.constant 0 : index
    %18 = vector.load %arg4[%c0_7, %c0_8] : memref<128x1xf32, #tpu.memory_space<vmem>>, vector<128x1xf32>
    %19 = vector.broadcast %17 : f32 to vector<128x1xf32>
    %20 = arith.mulf %19, %18 : vector<128x1xf32>
    %c0_9 = arith.constant 0 : index
    %c0_10 = arith.constant 0 : index
    %21 = vector.load %arg5[%c0_9, %c0_10] : memref<128x1xf32, #tpu.memory_space<vmem>>, vector<128x1xf32>
    %22 = vector.broadcast %11 : f32 to vector<128x1xf32>
    %23 = arith.mulf %22, %20 : vector<128x1xf32>
    %24 = arith.subf %21, %23 : vector<128x1xf32>
    %c0_11 = arith.constant 0 : index
    %c0_12 = arith.constant 0 : index
    %c0_13 = arith.constant 0 : index
    %25 = vector.load %arg2[%c0_11, %c0_12, %c0_13] : memref<1x128x128xf32, #tpu.memory_space<vmem>>, vector<1x128x128xf32>
    %26 = vector.shape_cast %25 : vector<1x128x128xf32> to vector<128x128xf32>
    %27 = vector.broadcast %20 : vector<128x1xf32> to vector<128x128xf32>
    %28 = arith.mulf %26, %27 : vector<128x128xf32>
    %29 = vector.broadcast %24 : vector<128x1xf32> to vector<128x128xf32>
    %30 = arith.addf %28, %29 : vector<128x128xf32>
    %c0_14 = arith.constant 0 : index
    %c0_15 = arith.constant 0 : index
    %c0_16 = arith.constant 0 : index
    %31 = vector.load %arg6[%c0_14, %c0_15, %c0_16] : memref<1x128x128xf32, #tpu.memory_space<vmem>>, vector<1x128x128xf32>
    %32 = vector.shape_cast %31 : vector<1x128x128xf32> to vector<128x128xf32>
    %33 = vector.shape_cast %30 : vector<128x128xf32> to vector<1x128x128xf32>
    tpu.vector_store %arg6[%c0_14, %c0_15, %c0_16], %33 {strides = array<i32>} : memref<1x128x128xf32, #tpu.memory_space<vmem>>, vector<1x128x128xf32>,
    return
  }
  func.func @transform_0(%arg0: i32, %arg1: i32) -> (i32, i32, i32) {
    %c0_i32 = arith.constant 0 : i32
    %c0_i32_0 = arith.constant 0 : i32
    return %arg0, %c0_i32, %arg1 : i32, i32, i32
  }
  func.func @transform_1(%arg0: i32, %arg1: i32) -> (i32, i32, i32) {
    %c0_i32 = arith.constant 0 : i32
    %c0_i32_0 = arith.constant 0 : i32
    %c0_i32_1 = arith.constant 0 : i32
    return %arg0, %c0_i32, %c0_i32_0 : i32, i32, i32
  }
  func.func @transform_2(%arg0: i32, %arg1: i32) -> (i32, i32) {
    %c0_i32 = arith.constant 0 : i32
    %c0_i32_0 = arith.constant 0 : i32
    %c0_i32_1 = arith.constant 0 : i32
    return %c0_i32, %c0_i32_0 : i32, i32
  }
  func.func @transform_3(%arg0: i32, %arg1: i32) -> (i32, i32) {
    %c0_i32 = arith.constant 0 : i32
    %c0_i32_0 = arith.constant 0 : i32
    %c0_i32_1 = arith.constant 0 : i32
    return %c0_i32, %c0_i32_0 : i32, i32
  }
  func.func @transform_4(%arg0: i32, %arg1: i32) -> (i32, i32, i32) {
    %c0_i32 = arith.constant 0 : i32
    %c0_i32_0 = arith.constant 0 : i32
    return %arg0, %c0_i32, %arg1 : i32, i32, i32
  }
}

</mosaic_0001>

<llo_original>
// kernel: _forward.3
$region0: #{_forward.3}
  #allocation0 [shape = 'u32[]', space=smem, size = 0x4, offset = 0x4, fixed_abs, tag = 'smem constant byte address 0x4 - core index']
  #allocation1 [shape = 'u32[144,128]{1,0:T(1,128)}', space=vmem, size = 0x12000, scoped, tag = 'internal scratch']
  %s0 = inlined_call_operand.hbm [shape: bf16[2,128,384], index: 0, kind: input, shape index: {}]
  %s1 = inlined_call_operand.vmem [shape: f32[2,128,128], index: 1, kind: output, shape index: {0}]
  %s2 = inlined_call_operand.vmem [shape: f32[2,128,1], index: 2, kind: output, shape index: {1}]
  %3 = xla_tuple %s1, %s2
  %s4 = sld [smem:[#allocation0]]
  $region53: #{_forward.3} parent=0
    _
  %s6 = ssub.s32 1, %s4
  %s7 = scalar_select 0, %s6, %s4
  $region1: #{_forward.3} parent=0
    #allocation2 [shape = 'u8[65536]{0}', space=vmem, size = 0x10000, scoped, tag = 'input window, operand 0']
    #allocation3 [shape = 's32[2]{0}', space=sflag, size = 0x8, scoped, tag = 'scoped memory for _forward.3']
    %8 = vsyncpa [#allocation3], 0
    %s9 = scalar_lea.sflag [#allocation3], 1
    %10 = vsyncpa %s9, 0
    loop: start=0, step=1, limit=8
    $region2: #{_forward.3} parent=1 // loop_pre_header
      _
    $region3: #{_forward.3} parent=1 // loop_header
      %s12 = sphi 0, %s16
      %p13 = scmp.ge.s32.totalorder %s12, 8
      %s19 = sphi 0, %s31
      %s20 = sphi 0, %s27
      %s21 = sphi 0, %s19
      %s22 = sphi 0, %s20
      %s23 = sphi 0, %s21
      %s24 = sphi 0, %s22
      %s36 = sphi 0, %s38
      %s39 = sphi 0, %s36
      %s40 = sphi 0, %s39
      %s56 = sphi 0, %s40
      %s62 = sphi 0, %s64
      %s65 = sphi 0, %s62
      %s66 = sphi 0, %s65
      %s82 = sphi 0, %s66
      %s88 = sphi 0, %s90
      %s91 = sphi 0, %s88
      %s92 = sphi 0, %s91
      %s108 = sphi 0, %s92
    $region4: #{_forward.3} parent=1 // loop_header_branch
      %15 = sbr.rel (%p13) target = $region8
    $region5: #{_forward.3} parent=1 // loop_body
      %s17 = ssub.s32 %s12, 1
      %s18 = ssub.s32 %s12, 2
      %s25 = sadd.s32 1, %s20
      %p26 = scmp.ge.s32.totalorder %s25, 3
      %s27 = scalar_select %p26, 0, %s25
      %s28 = sadd.s32 1, %s19
      %s29 = scalar_select %p26, %s28, %s19
      %p30 = scmp.ge.s32.totalorder %s29, 2
      %s31 = scalar_select %p30, 0, %s29
      %s32 = ssub.s32 %s19, %s31
      %s33 = ssub.s32 %s20, %s27
      %s34 = sor.u32 %s32, %s33
      %p35 = scmp.eq.s32.totalorder %s34, 0
      %s37 = sadd.s32 %s36, 1
      %s38 = scalar_select %p35, %s36, %s37
      %p41 = pneg %p35
      %p42 = scmp.eq.s32.totalorder %s12, 5
      %p43 = por %p41, %p42
      %p44 = scmp.ne.s32.totalorder %s36, %s39
      %p45 = scmp.eq.s32.totalorder %s12, 0
      %p46 = por %p44, %p45
      %p47 = scmp.ne.s32.totalorder %s36, %s39
      %p48 = scmp.eq.s32.totalorder %s17, 5
      %p49 = por %p47, %p48
      %p50 = scmp.ne.s32.totalorder %s39, %s40
      %p51 = scmp.eq.s32.totalorder %s17, 0
      %p52 = por %p50, %p51
      %p53 = scmp.ne.s32.totalorder %s39, %s40
      %p54 = scmp.eq.s32.totalorder %s18, 5
      %p55 = por %p53, %p54
      %p57 = scmp.ne.s32.totalorder %s40, %s56
      %p58 = scmp.eq.s32.totalorder %s18, 0
      %p59 = por %p57, %p58
      %s60 = ssub.s32 %s19, %s31
      %p61 = scmp.eq.s32.totalorder %s60, 0
      %s63 = sadd.s32 %s62, 1
      %s64 = scalar_select %p61, %s62, %s63
      %p67 = pneg %p61
      %p68 = scmp.eq.s32.totalorder %s12, 5
      %p69 = por %p67, %p68
      %p70 = scmp.ne.s32.totalorder %s62, %s65
      %p71 = scmp.eq.s32.totalorder %s12, 0
      %p72 = por %p70, %p71
      %p73 = scmp.ne.s32.totalorder %s62, %s65
      %p74 = scmp.eq.s32.totalorder %s17, 5
      %p75 = por %p73, %p74
      %p76 = scmp.ne.s32.totalorder %s65, %s66
      %p77 = scmp.eq.s32.totalorder %s17, 0
      %p78 = por %p76, %p77
      %p79 = scmp.ne.s32.totalorder %s65, %s66
      %p80 = scmp.eq.s32.totalorder %s18, 5
      %p81 = por %p79, %p80
      %p83 = scmp.ne.s32.totalorder %s66, %s82
      %p84 = scmp.eq.s32.totalorder %s18, 0
      %p85 = por %p83, %p84
      %s86 = ssub.s32 %s19, %s31
      %p87 = scmp.eq.s32.totalorder %s86, 0
      %s89 = sadd.s32 %s88, 1
      %s90 = scalar_select %p87, %s88, %s89
      %p93 = pneg %p87
      %p94 = scmp.eq.s32.totalorder %s12, 5
      %p95 = por %p93, %p94
      %p96 = scmp.ne.s32.totalorder %s88, %s91
      %p97 = scmp.eq.s32.totalorder %s12, 0
      %p98 = por %p96, %p97
      %p99 = scmp.ne.s32.totalorder %s88, %s91
      %p100 = scmp.eq.s32.totalorder %s17, 5
      %p101 = por %p99, %p100
      %p102 = scmp.ne.s32.totalorder %s91, %s92
      %p103 = scmp.eq.s32.totalorder %s17, 0
      %p104 = por %p102, %p103
      %p105 = scmp.ne.s32.totalorder %s91, %s92
      %p106 = scmp.eq.s32.totalorder %s18, 5
      %p107 = por %p105, %p106
      %p109 = scmp.ne.s32.totalorder %s92, %s108
      %p110 = scmp.eq.s32.totalorder %s18, 0
      %p111 = por %p109, %p110
      %p112 = scmp.le.s32.totalorder 1, %s12
      %p113 = scmp.lt.s32.totalorder %s12, 7
      %p114 = pnand %p112, %p113
      %p115 = pneg %p114
      // Predicated region
      $region9: #{_forward.3} parent=5 // pred_check
        _
      $region10: #{_forward.3} parent=5 // pred_check_branch
        %117 = sbr.rel (%p114) target = $region12
      $region11: #{_forward.3} parent=5 // pred_region
        %s118 = ssub.s32 %s12, 1
      $region12: #{_forward.3} parent=5 // pred_fallthru
        _
      %p119 = scmp.lt.s32.totalorder %s12, 6
      // Predicated region
      $region13: #{_forward.3} parent=5 // pred_check
        %p120 = pneg %p119
      $region14: #{_forward.3} parent=5 // pred_check_branch
        %122 = sbr.rel (%p120) target = $region16
      $region15: #{_forward.3} parent=5 // pred_region
        // Predicated region
        $region17: #{_forward.3} parent=15 // pred_check
          %p123 = pneg %p46
        $region18: #{_forward.3} parent=15 // pred_check_branch
          %125 = sbr.rel (%p123) target = $region20
        $region19: #{_forward.3} parent=15 // pred_region
          %s126 = sand.u32 %s36, 1
          %s127 = scalar_lea.sflag [#allocation3], %s126
          %s128 = sand.u32 %s36, 1
          %s129 = smul.addr %s128, 64
          %s130 = scalar_lea.vmem [#allocation2], %s129
          %s132 = ssub.s32 1024, 1024
          %133 = vsyncadd %s127, %s132
          %s134 = smul.addr %s19, 48
          %s135 = sadd.s32 %s20, %s134
          %s136 = smul.addr %s135, 64
          %s137 = scalar_lea.hbm %s0, %s136
          %s138 = sshll.u32 %s130, 4
          %s139 = int_to_ptr.vmem [resolvable:$true] %s138
          %144 = dma.hbm_to_vmem [thread:$0]  %s137, 1024, %s139, %s127, 192, 64, 4
        $region20: #{_forward.3} parent=15 // pred_fallthru
          _
      $region16: #{_forward.3} parent=5 // pred_fallthru
        _
      %p145 = scmp.le.s32.totalorder 1, %s12
      %p146 = scmp.lt.s32.totalorder %s12, 7
      %p147 = pnand %p145, %p146
      %p148 = pneg %p147
      // Predicated region
      $region21: #{_forward.3} parent=5 // pred_check
        _
      $region22: #{_forward.3} parent=5 // pred_check_branch
        %150 = sbr.rel (%p147) target = $region24
      $region23: #{_forward.3} parent=5 // pred_region
        %s151 = ssub.s32 %s12, 1
        %s152 = sand.u32 %s39, 1
        %s153 = scalar_lea.sflag [#allocation3], %s152
        %s154 = sand.u32 %s39, 1
        %s155 = smul.addr %s154, 64
        %s156 = scalar_lea.vmem [#allocation2], %s155
        // Predicated region
        $region25: #{_forward.3} parent=23 // pred_check
          %p157 = pneg %p52
        $region26: #{_forward.3} parent=23 // pred_check_branch
          %159 = sbr.rel (%p157) target = $region28
        $region27: #{_forward.3} parent=23 // pred_region
          %160 = dma.done %s153, 1024
        $region28: #{_forward.3} parent=23 // pred_fallthru
          _
        %s161 = sand.u32 %s39, 1
        %s162 = scalar_lea.sflag [#allocation3], %s161
        %s163 = sand.u32 %s39, 1
        %s164 = smul.addr %s163, 64
        %s165 = scalar_lea.vmem [#allocation2], %s164
        %p166 = pneg %p52
        %p167 = pneg %p49
        %p168 = pneg %p78
        %p169 = pneg %p75
        %p170 = scmp.lt.s32.totalorder %s21, 1
        %s171 = scalar_select %p170, %s21, 1
        %s172 = smul.addr %s171, 16
        %s173 = smul.addr %s172, 8
        %s174 = scalar_lea.vmem %s1, %s173
        %p175 = pneg %p104
        %p176 = pneg %p101
        %p177 = scmp.lt.s32.totalorder %s21, 1
        %s178 = scalar_select %p177, %s21, 1
        %s179 = smul.addr %s178, 16
        %s180 = smul.addr %s179, 8
        %s181 = scalar_lea.vmem %s2, %s180
        %p182 = scmp.lt.s32.totalorder %s21, 1
        %s183 = scalar_select %p182, %s21, 1
        %s184 = smul.addr %s183, 16
        %s185 = smul.addr %s184, 8
        %s186 = scalar_lea.vmem %s1, %s185
        %p187 = scmp.lt.s32.totalorder %s21, 1
        %s188 = scalar_select %p187, %s21, 1
        %s189 = smul.addr %s188, 16
        %s190 = smul.addr %s189, 8
        %s191 = scalar_lea.vmem %s2, %s190
        %p192 = scmp.eq.s32.totalorder %s22, 0
        // Predicated region
        $region29: #{_forward.3} parent=23 // pred_check
          %p193 = pneg %p192
        $region30: #{_forward.3} parent=23 // pred_check_branch
          %195 = sbr.rel (%p193) target = $region32
        $region31: #{_forward.3} parent=23 // pred_region
          %196 = vst [vmem:[%s186] sm:$0xff] 0.0
          %197 = vst [vmem:[%s186 + $0x8] sm:$0xff] 0.0
          %198 = vst [vmem:[%s186 + $0x10] sm:$0xff] 0.0
          %199 = vst [vmem:[%s186 + $0x18] sm:$0xff] 0.0
          %200 = vst [vmem:[%s186 + $0x20] sm:$0xff] 0.0
          %201 = vst [vmem:[%s186 + $0x28] sm:$0xff] 0.0
          %202 = vst [vmem:[%s186 + $0x30] sm:$0xff] 0.0
          %203 = vst [vmem:[%s186 + $0x38] sm:$0xff] 0.0
          %204 = vst [vmem:[%s186 + $0x40] sm:$0xff] 0.0
          %205 = vst [vmem:[%s186 + $0x48] sm:$0xff] 0.0
          %206 = vst [vmem:[%s186 + $0x50] sm:$0xff] 0.0
          %207 = vst [vmem:[%s186 + $0x58] sm:$0xff] 0.0
          %208 = vst [vmem:[%s186 + $0x60] sm:$0xff] 0.0
          %209 = vst [vmem:[%s186 + $0x68] sm:$0xff] 0.0
          %210 = vst [vmem:[%s186 + $0x70] sm:$0xff] 0.0
          %211 = vst [vmem:[%s186 + $0x78] sm:$0xff] 0.0
          %vm212 = vcmask 7168
          %213 = vst.msk [vmem:[%s191] sm:$0xff] %vm212, 0.0
          %214 = vst.msk [vmem:[%s191 + $0x8] sm:$0xff] %vm212, 0.0
          %215 = vst.msk [vmem:[%s191 + $0x10] sm:$0xff] %vm212, 0.0
          %216 = vst.msk [vmem:[%s191 + $0x18] sm:$0xff] %vm212, 0.0
          %217 = vst.msk [vmem:[%s191 + $0x20] sm:$0xff] %vm212, 0.0
          %218 = vst.msk [vmem:[%s191 + $0x28] sm:$0xff] %vm212, 0.0
          %219 = vst.msk [vmem:[%s191 + $0x30] sm:$0xff] %vm212, 0.0
          %220 = vst.msk [vmem:[%s191 + $0x38] sm:$0xff] %vm212, 0.0
          %221 = vst.msk [vmem:[%s191 + $0x40] sm:$0xff] %vm212, 0.0
          %222 = vst.msk [vmem:[%s191 + $0x48] sm:$0xff] %vm212, 0.0
          %223 = vst.msk [vmem:[%s191 + $0x50] sm:$0xff] %vm212, 0.0
          %224 = vst.msk [vmem:[%s191 + $0x58] sm:$0xff] %vm212, 0.0
          %225 = vst.msk [vmem:[%s191 + $0x60] sm:$0xff] %vm212, 0.0
          %226 = vst.msk [vmem:[%s191 + $0x68] sm:$0xff] %vm212, 0.0
          %227 = vst.msk [vmem:[%s191 + $0x70] sm:$0xff] %vm212, 0.0
          %228 = vst.msk [vmem:[%s191 + $0x78] sm:$0xff] %vm212, 0.0
        $region32: #{_forward.3} parent=23 // pred_fallthru
          _
        %v229 = vld [vmem:[%s156] sm:$0xf]
        %v230 = vld [vmem:[%s156 + $0x4] sm:$0xf]
        %v231 = vld [vmem:[%s156 + $0x8] sm:$0xf]
        %v232 = vld [vmem:[%s156 + $0xc] sm:$0xf]
        %v233 = vld [vmem:[%s156 + $0x10] sm:$0xf]
        %v234 = vld [vmem:[%s156 + $0x14] sm:$0xf]
        %v235 = vld [vmem:[%s156 + $0x18] sm:$0xf]
        %v236 = vld [vmem:[%s156 + $0x1c] sm:$0xf]
        %v237 = vld [vmem:[%s156 + $0x20] sm:$0xf]
        %v238 = vld [vmem:[%s156 + $0x24] sm:$0xf]
        %v239 = vld [vmem:[%s156 + $0x28] sm:$0xf]
        %v240 = vld [vmem:[%s156 + $0x2c] sm:$0xf]
        %v241 = vld [vmem:[%s156 + $0x30] sm:$0xf]
        %v242 = vld [vmem:[%s156 + $0x34] sm:$0xf]
        %v243 = vld [vmem:[%s156 + $0x38] sm:$0xf]
        %v244 = vld [vmem:[%s156 + $0x3c] sm:$0xf]
        %v245 = vunpack.c.l.bf16 %v229
        %v246 = vunpack.c.l.bf16 %v230
        %v247 = vunpack.c.l.bf16 %v231
        %v248 = vunpack.c.l.bf16 %v232
        %v249 = vunpack.c.l.bf16 %v233
        %v250 = vunpack.c.l.bf16 %v234
        %v251 = vunpack.c.l.bf16 %v235
        %v252 = vunpack.c.l.bf16 %v236
        %v253 = vunpack.c.l.bf16 %v237
        %v254 = vunpack.c.l.bf16 %v238
        %v255 = vunpack.c.l.bf16 %v239
        %v256 = vunpack.c.l.bf16 %v240
        %v257 = vunpack.c.l.bf16 %v241
        %v258 = vunpack.c.l.bf16 %v242
        %v259 = vunpack.c.l.bf16 %v243
        %v260 = vunpack.c.l.bf16 %v244
        %v261 = vld [vmem:[%s186] sm:$0xff]
        %v262 = vld [vmem:[%s186 + $0x8] sm:$0xff]
        %v263 = vld [vmem:[%s186 + $0x10] sm:$0xff]
        %v264 = vld [vmem:[%s186 + $0x18] sm:$0xff]
        %v265 = vld [vmem:[%s186 + $0x20] sm:$0xff]
        %v266 = vld [vmem:[%s186 + $0x28] sm:$0xff]
        %v267 = vld [vmem:[%s186 + $0x30] sm:$0xff]
        %v268 = vld [vmem:[%s186 + $0x38] sm:$0xff]
        %v269 = vld [vmem:[%s186 + $0x40] sm:$0xff]
        %v270 = vld [vmem:[%s186 + $0x48] sm:$0xff]
        %v271 = vld [vmem:[%s186 + $0x50] sm:$0xff]
        %v272 = vld [vmem:[%s186 + $0x58] sm:$0xff]
        %v273 = vld [vmem:[%s186 + $0x60] sm:$0xff]
        %v274 = vld [vmem:[%s186 + $0x68] sm:$0xff]
        %v275 = vld [vmem:[%s186 + $0x70] sm:$0xff]
        %v276 = vld [vmem:[%s186 + $0x78] sm:$0xff]
        %277 = vmatprep.subr.mxu0 0.0
        %278 = vmatpush1.xpose.msra.mxu0 %v260
        %279 = vmatprep.subr.mxu0 0.0
        %280 = vmatpush1.xpose.msra.mxu0 %v259
        %281 = vmatprep.subr.mxu0 0.0
        %282 = vmatpush1.xpose.msra.mxu0 %v258
        %283 = vmatprep.subr.mxu0 0.0
        %284 = vmatpush1.xpose.msra.mxu0 %v257
        %285 = vmatprep.subr.mxu0 0.0
        %286 = vmatpush1.xpose.msra.mxu0 %v256
        %287 = vmatprep.subr.mxu0 0.0
        %288 = vmatpush1.xpose.msra.mxu0 %v255
        %289 = vmatprep.subr.mxu0 0.0
        %290 = vmatpush1.xpose.msra.mxu0 %v254
        %291 = vmatprep.subr.mxu0 0.0
        %292 = vmatpush1.xpose.msra.mxu0 %v253
        %293 = vmatprep.subr.mxu0 0.0
        %294 = vmatpush1.xpose.msra.mxu0 %v252
        %295 = vmatprep.subr.mxu0 0.0
        %296 = vmatpush1.xpose.msra.mxu0 %v251
        %297 = vmatprep.subr.mxu0 0.0
        %298 = vmatpush1.xpose.msra.mxu0 %v250
        %299 = vmatprep.subr.mxu0 0.0
        %300 = vmatpush1.xpose.msra.mxu0 %v249
        %301 = vmatprep.subr.mxu0 0.0
        %302 = vmatpush1.xpose.msra.mxu0 %v248
        %303 = vmatprep.subr.mxu0 0.0
        %304 = vmatpush1.xpose.msra.mxu0 %v247
        %305 = vmatprep.subr.mxu0 0.0
        %306 = vmatpush1.xpose.msra.mxu0 %v246
        %307 = vmatprep.subr.mxu0 0.0
        %308 = vmatpush1.xpose.msra.mxu0 %v245
        %309 = vmatprep.subr.mxu0 0.0
        %310 = vmatpush2.xpose.msra.mxu0 0.0
        %311 = vmatprep.subr.mxu0 0.0
        %312 = vmatpush2.xpose.msra.mxu0 0.0
        %313 = vmatprep.subr.mxu0 0.0
        %314 = vmatpush2.xpose.msra.mxu0 0.0
        %315 = vmatprep.subr.mxu0 0.0
        %316 = vmatpush2.xpose.msra.mxu0 0.0
        %317 = vmatprep.subr.mxu0 0.0
        %318 = vmatpush2.xpose.msra.mxu0 0.0
        %319 = vmatprep.subr.mxu0 0.0
        %320 = vmatpush2.xpose.msra.mxu0 0.0
        %321 = vmatprep.subr.mxu0 0.0
        %322 = vmatpush2.xpose.msra.mxu0 0.0
        %323 = vmatprep.subr.mxu0 0.0
        %324 = vmatpush2.xpose.msra.mxu0 0.0
        %325 = vmatprep.subr.mxu0 0.0
        %326 = vmatpush2.xpose.msra.mxu0 0.0
        %327 = vmatprep.subr.mxu0 0.0
        %328 = vmatpush2.xpose.msra.mxu0 0.0
        %329 = vmatprep.subr.mxu0 0.0
        %330 = vmatpush2.xpose.msra.mxu0 0.0
        %331 = vmatprep.subr.mxu0 0.0
        %332 = vmatpush2.xpose.msra.mxu0 0.0
        %333 = vmatprep.subr.mxu0 0.0
        %334 = vmatpush2.xpose.msra.mxu0 0.0
        %335 = vmatprep.subr.mxu0 0.0
        %336 = vmatpush2.xpose.msra.mxu0 0.0
        %337 = vmatprep.subr.mxu0 0.0
        %338 = vmatpush2.xpose.msra.mxu0 0.0
        %339 = vmatprep.subr.mxu0 0.0
        %340 = vmatpush2.xpose.msra.mxu0 0.0
        %341 = vmatprep.mubr.f32.mxu0 0.0
        %342 = vmatmul.mubr.f32.gmra.mxu0 %v245
        %v343 = vpop.f32.mrf.mxu0
        %v344 = vadd.f32 0.0, %v343
        %v345 = vpop.f32.mrf.mxu0
        %346 = vmatprep.mubr.f32.mxu0 0.0
        %347 = vmatmul.mubr.f32.gmra.mxu0 %v246
        %v348 = vpop.f32.mrf.mxu0
        %v349 = vadd.f32 0.0, %v348
        %v350 = vpop.f32.mrf.mxu0
        %351 = vmatprep.mubr.f32.mxu0 0.0
        %352 = vmatmul.mubr.f32.gmra.mxu0 %v247
        %v353 = vpop.f32.mrf.mxu0
        %v354 = vadd.f32 0.0, %v353
        %v355 = vpop.f32.mrf.mxu0
        %356 = vmatprep.mubr.f32.mxu0 0.0
        %357 = vmatmul.mubr.f32.gmra.mxu0 %v248
        %v358 = vpop.f32.mrf.mxu0
        %v359 = vadd.f32 0.0, %v358
        %v360 = vpop.f32.mrf.mxu0
        %361 = vmatprep.mubr.f32.mxu0 0.0
        %362 = vmatmul.mubr.f32.gmra.mxu0 %v249
        %v363 = vpop.f32.mrf.mxu0
        %v364 = vadd.f32 0.0, %v363
        %v365 = vpop.f32.mrf.mxu0
        %366 = vmatprep.mubr.f32.mxu0 0.0
        %367 = vmatmul.mubr.f32.gmra.mxu0 %v250
        %v368 = vpop.f32.mrf.mxu0
        %v369 = vadd.f32 0.0, %v368
        %v370 = vpop.f32.mrf.mxu0
        %371 = vmatprep.mubr.f32.mxu0 0.0
        %372 = vmatmul.mubr.f32.gmra.mxu0 %v251
        %v373 = vpop.f32.mrf.mxu0
        %v374 = vadd.f32 0.0, %v373
        %v375 = vpop.f32.mrf.mxu0
        %376 = vmatprep.mubr.f32.mxu0 0.0
        %377 = vmatmul.mubr.f32.gmra.mxu0 %v252
        %v378 = vpop.f32.mrf.mxu0
        %v379 = vadd.f32 0.0, %v378
        %v380 = vpop.f32.mrf.mxu0
        %381 = vmatprep.mubr.f32.mxu0 0.0
        %382 = vmatmul.mubr.f32.gmra.mxu0 %v253
        %v383 = vpop.f32.mrf.mxu0
        %v384 = vadd.f32 0.0, %v383
        %v385 = vpop.f32.mrf.mxu0
        %386 = vmatprep.mubr.f32.mxu0 0.0
        %387 = vmatmul.mubr.f32.gmra.mxu0 %v254
        %v388 = vpop.f32.mrf.mxu0
        %v389 = vadd.f32 0.0, %v388
        %v390 = vpop.f32.mrf.mxu0
        %391 = vmatprep.mubr.f32.mxu0 0.0
        %392 = vmatmul.mubr.f32.gmra.mxu0 %v255
        %v393 = vpop.f32.mrf.mxu0
        %v394 = vadd.f32 0.0, %v393
        %v395 = vpop.f32.mrf.mxu0
        %396 = vmatprep.mubr.f32.mxu0 0.0
        %397 = vmatmul.mubr.f32.gmra.mxu0 %v256
        %v398 = vpop.f32.mrf.mxu0
        %v399 = vadd.f32 0.0, %v398
        %v400 = vpop.f32.mrf.mxu0
        %401 = vmatprep.mubr.f32.mxu0 0.0
        %402 = vmatmul.mubr.f32.gmra.mxu0 %v257
        %v403 = vpop.f32.mrf.mxu0
        %v404 = vadd.f32 0.0, %v403
        %v405 = vpop.f32.mrf.mxu0
        %406 = vmatprep.mubr.f32.mxu0 0.0
        %407 = vmatmul.mubr.f32.gmra.mxu0 %v258
        %v408 = vpop.f32.mrf.mxu0
        %v409 = vadd.f32 0.0, %v408
        %v410 = vpop.f32.mrf.mxu0
        %411 = vmatprep.mubr.f32.mxu0 0.0
        %412 = vmatmul.mubr.f32.gmra.mxu0 %v259
        %v413 = vpop.f32.mrf.mxu0
        %v414 = vadd.f32 0.0, %v413
        %v415 = vpop.f32.mrf.mxu0
        %416 = vmatprep.mubr.f32.mxu0 0.0
        %417 = vmatmul.mubr.f32.gmra.mxu0 %v260
        %v418 = vpop.f32.mrf.mxu0
        %v419 = vadd.f32 0.0, %v418
        %v420 = vpop.f32.mrf.mxu0
        %421 = vdwg.mxu0
        %v422 = vadd.f32 %v261, %v344
        %v423 = vadd.f32 %v262, %v349
        %v424 = vadd.f32 %v263, %v354
        %v425 = vadd.f32 %v264, %v359
        %v426 = vadd.f32 %v265, %v364
        %v427 = vadd.f32 %v266, %v369
        %v428 = vadd.f32 %v267, %v374
        %v429 = vadd.f32 %v268, %v379
        %v430 = vadd.f32 %v269, %v384
        %v431 = vadd.f32 %v270, %v389
        %v432 = vadd.f32 %v271, %v394
        %v433 = vadd.f32 %v272, %v399
        %v434 = vadd.f32 %v273, %v404
        %v435 = vadd.f32 %v274, %v409
        %v436 = vadd.f32 %v275, %v414
        %v437 = vadd.f32 %v276, %v419
        %438 = vst [vmem:[%s186] sm:$0xff] %v422
        %439 = vst [vmem:[%s186 + $0x8] sm:$0xff] %v423
        %440 = vst [vmem:[%s186 + $0x10] sm:$0xff] %v424
        %441 = vst [vmem:[%s186 + $0x18] sm:$0xff] %v425
        %442 = vst [vmem:[%s186 + $0x20] sm:$0xff] %v426
        %443 = vst [vmem:[%s186 + $0x28] sm:$0xff] %v427
        %444 = vst [vmem:[%s186 + $0x30] sm:$0xff] %v428
        %445 = vst [vmem:[%s186 + $0x38] sm:$0xff] %v429
        %446 = vst [vmem:[%s186 + $0x40] sm:$0xff] %v430
        %447 = vst [vmem:[%s186 + $0x48] sm:$0xff] %v431
        %448 = vst [vmem:[%s186 + $0x50] sm:$0xff] %v432
        %449 = vst [vmem:[%s186 + $0x58] sm:$0xff] %v433
        %450 = vst [vmem:[%s186 + $0x60] sm:$0xff] %v434
        %451 = vst [vmem:[%s186 + $0x68] sm:$0xff] %v435
        %452 = vst [vmem:[%s186 + $0x70] sm:$0xff] %v436
        %453 = vst [vmem:[%s186 + $0x78] sm:$0xff] %v437
        %v454 = vld [vmem:[%s191] sm:$0xff]
        %v455 = vld [vmem:[%s191 + $0x8] sm:$0xff]
        %v456 = vld [vmem:[%s191 + $0x10] sm:$0xff]
        %v457 = vld [vmem:[%s191 + $0x18] sm:$0xff]
        %v458 = vld [vmem:[%s191 + $0x20] sm:$0xff]
        %v459 = vld [vmem:[%s191 + $0x28] sm:$0xff]
        %v460 = vld [vmem:[%s191 + $0x30] sm:$0xff]
        %v461 = vld [vmem:[%s191 + $0x38] sm:$0xff]
        %v462 = vld [vmem:[%s191 + $0x40] sm:$0xff]
        %v463 = vld [vmem:[%s191 + $0x48] sm:$0xff]
        %v464 = vld [vmem:[%s191 + $0x50] sm:$0xff]
        %v465 = vld [vmem:[%s191 + $0x58] sm:$0xff]
        %v466 = vld [vmem:[%s191 + $0x60] sm:$0xff]
        %v467 = vld [vmem:[%s191 + $0x68] sm:$0xff]
        %v468 = vld [vmem:[%s191 + $0x70] sm:$0xff]
        %v469 = vld [vmem:[%s191 + $0x78] sm:$0xff]
        %470 = vadd.xlane.f32.xlu0 %v245
        %v471 = vpop.xlane.xlu0 %470
        %472 = vadd.xlane.f32.xlu0 %v246
        %v473 = vpop.xlane.xlu0 %472
        %474 = vadd.xlane.f32.xlu0 %v247
        %v475 = vpop.xlane.xlu0 %474
        %476 = vadd.xlane.f32.xlu0 %v248
        %v477 = vpop.xlane.xlu0 %476
        %478 = vadd.xlane.f32.xlu0 %v249
        %v479 = vpop.xlane.xlu0 %478
        %480 = vadd.xlane.f32.xlu0 %v250
        %v481 = vpop.xlane.xlu0 %480
        %482 = vadd.xlane.f32.xlu0 %v251
        %v483 = vpop.xlane.xlu0 %482
        %484 = vadd.xlane.f32.xlu0 %v252
        %v485 = vpop.xlane.xlu0 %484
        %486 = vadd.xlane.f32.xlu0 %v253
        %v487 = vpop.xlane.xlu0 %486
        %488 = vadd.xlane.f32.xlu0 %v254
        %v489 = vpop.xlane.xlu0 %488
        %490 = vadd.xlane.f32.xlu0 %v255
        %v491 = vpop.xlane.xlu0 %490
        %492 = vadd.xlane.f32.xlu0 %v256
        %v493 = vpop.xlane.xlu0 %492
        %494 = vadd.xlane.f32.xlu0 %v257
        %v495 = vpop.xlane.xlu0 %494
        %496 = vadd.xlane.f32.xlu0 %v258
        %v497 = vpop.xlane.xlu0 %496
        %498 = vadd.xlane.f32.xlu0 %v259
        %v499 = vpop.xlane.xlu0 %498
        %500 = vadd.xlane.f32.xlu0 %v260
        %v501 = vpop.xlane.xlu0 %500
        %v502 = vadd.f32 %v454, %v471
        %v503 = vadd.f32 %v455, %v473
        %v504 = vadd.f32 %v456, %v475
        %v505 = vadd.f32 %v457, %v477
        %v506 = vadd.f32 %v458, %v479
        %v507 = vadd.f32 %v459, %v481
        %v508 = vadd.f32 %v460, %v483
        %v509 = vadd.f32 %v461, %v485
        %v510 = vadd.f32 %v462, %v487
        %v511 = vadd.f32 %v463, %v489
        %v512 = vadd.f32 %v464, %v491
        %v513 = vadd.f32 %v465, %v493
        %v514 = vadd.f32 %v466, %v495
        %v515 = vadd.f32 %v467, %v497
        %v516 = vadd.f32 %v468, %v499
        %v517 = vadd.f32 %v469, %v501
        %vm518 = vcmask 7168
        %519 = vst.msk [vmem:[%s191] sm:$0xff] %vm518, %v502
        %520 = vst.msk [vmem:[%s191 + $0x8] sm:$0xff] %vm518, %v503
        %521 = vst.msk [vmem:[%s191 + $0x10] sm:$0xff] %vm518, %v504
        %522 = vst.msk [vmem:[%s191 + $0x18] sm:$0xff] %vm518, %v505
        %523 = vst.msk [vmem:[%s191 + $0x20] sm:$0xff] %vm518, %v506
        %524 = vst.msk [vmem:[%s191 + $0x28] sm:$0xff] %vm518, %v507
        %525 = vst.msk [vmem:[%s191 + $0x30] sm:$0xff] %vm518, %v508
        %526 = vst.msk [vmem:[%s191 + $0x38] sm:$0xff] %vm518, %v509
        %527 = vst.msk [vmem:[%s191 + $0x40] sm:$0xff] %vm518, %v510
        %528 = vst.msk [vmem:[%s191 + $0x48] sm:$0xff] %vm518, %v511
        %529 = vst.msk [vmem:[%s191 + $0x50] sm:$0xff] %vm518, %v512
        %530 = vst.msk [vmem:[%s191 + $0x58] sm:$0xff] %vm518, %v513
        %531 = vst.msk [vmem:[%s191 + $0x60] sm:$0xff] %vm518, %v514
        %532 = vst.msk [vmem:[%s191 + $0x68] sm:$0xff] %vm518, %v515
        %533 = vst.msk [vmem:[%s191 + $0x70] sm:$0xff] %vm518, %v516
        %534 = vst.msk [vmem:[%s191 + $0x78] sm:$0xff] %vm518, %v517
        %p535 = scmp.lt.s32.totalorder %s21, 1
        %s536 = scalar_select %p535, %s21, 1
        %s537 = smul.addr %s536, 16
        %s538 = smul.addr %s537, 8
        %s539 = scalar_lea.vmem %s1, %s538
        %p540 = scmp.lt.s32.totalorder %s21, 1
        %s541 = scalar_select %p540, %s21, 1
        %s542 = smul.addr %s541, 16
        %s543 = smul.addr %s542, 8
        %s544 = scalar_lea.vmem %s2, %s543
        // Predicated region
        $region33: #{_forward.3} parent=23 // pred_check
          %p545 = pneg %p75
        $region34: #{_forward.3} parent=23 // pred_check_branch
          %547 = sbr.rel (%p545) target = $region36
        $region35: #{_forward.3} parent=23 // pred_region
          _
        $region36: #{_forward.3} parent=23 // pred_fallthru
          _
        // Predicated region
        $region37: #{_forward.3} parent=23 // pred_check
          %p548 = pneg %p101
        $region38: #{_forward.3} parent=23 // pred_check_branch
          %550 = sbr.rel (%p548) target = $region40
        $region39: #{_forward.3} parent=23 // pred_region
          _
        $region40: #{_forward.3} parent=23 // pred_fallthru
          _
      $region24: #{_forward.3} parent=5 // pred_fallthru
        _
      %p551 = scmp.le.s32.totalorder 2, %s12
      // Predicated region
      $region41: #{_forward.3} parent=5 // pred_check
        %p552 = pneg %p551
      $region42: #{_forward.3} parent=5 // pred_check_branch
        %554 = sbr.rel (%p552) target = $region44
      $region43: #{_forward.3} parent=5 // pred_region
        %s555 = ssub.s32 %s12, 2
        // Predicated region
        $region45: #{_forward.3} parent=43 // pred_check
          %p556 = pneg %p81
        $region46: #{_forward.3} parent=43 // pred_check_branch
          %558 = sbr.rel (%p556) target = $region48
        $region47: #{_forward.3} parent=43 // pred_region
          %p559 = scmp.lt.s32.totalorder %s23, 1
          %s560 = scalar_select %p559, %s23, 1
          %s561 = smul.addr %s560, 16
          %s562 = smul.addr %s561, 8
          %s563 = scalar_lea.vmem %s1, %s562
        $region48: #{_forward.3} parent=43 // pred_fallthru
          _
        // Predicated region
        $region49: #{_forward.3} parent=43 // pred_check
          %p564 = pneg %p107
        $region50: #{_forward.3} parent=43 // pred_check_branch
          %566 = sbr.rel (%p564) target = $region52
        $region51: #{_forward.3} parent=43 // pred_region
          %p567 = scmp.lt.s32.totalorder %s23, 1
          %s568 = scalar_select %p567, %s23, 1
          %s569 = smul.addr %s568, 16
          %s570 = smul.addr %s569, 8
          %s571 = scalar_lea.vmem %s2, %s570
        $region52: #{_forward.3} parent=43 // pred_fallthru
          _
      $region44: #{_forward.3} parent=5 // pred_fallthru
        _
    $region6: #{_forward.3} parent=1 // loop_footer
      %s16 = sadd.s32 1, %s12
    $region7: #{_forward.3} parent=1 // loop_footer_branch
      %11 = sbr.rel target = $region3
    $region8: #{_forward.3} parent=1 // loop_exit
      _
    %572 = vsyncpa [#allocation3], 1
    %s573 = scalar_lea.sflag [#allocation3], 1
    %574 = vsyncpa %s573, 1

// kernel: _forward.5
$region0: #{_forward.5}
  #allocation0 [shape = 'u32[]', space=smem, size = 0x4, offset = 0x4, fixed_abs, tag = 'smem constant byte address 0x4 - core index']
  #allocation1 [shape = 'u32[144,128]{1,0:T(1,128)}', space=vmem, size = 0x12000, scoped, tag = 'internal scratch']
  %s0 = inlined_call_operand.vmem [shape: f32[2,128,384], index: 0, kind: input, shape index: {}]
  %s1 = inlined_call_operand.vmem [shape: f32[2,2,128], index: 1, kind: input, shape index: {}]
  %s2 = inlined_call_operand.vmem [shape: f32[128,1], index: 2, kind: input, shape index: {}]
  %s3 = inlined_call_operand.vmem [shape: f32[128,1], index: 3, kind: input, shape index: {}]
  %s4 = inlined_call_operand.hbm [shape: f32[2,128,384], index: 4, kind: output, shape index: {}]
  %s5 = sld [smem:[#allocation0]]
  $region87: #{_forward.5} parent=0
    _
  %s7 = ssub.s32 1, %s5
  %s8 = scalar_select 0, %s7, %s5
  $region1: #{_forward.5} parent=0
    #allocation2 [shape = 'u8[131072]{0}', space=vmem, size = 0x20000, scoped, tag = 'input window, operand 0']
    #allocation3 [shape = 'u8[131072]{0}', space=vmem, size = 0x20000, scoped, tag = 'output window, operand 0']
    #allocation4 [shape = 's32[2]{0}', space=sflag, size = 0x8, scoped, tag = 'scoped memory for _forward.5']
    %9 = vsyncpa [#allocation4], 0
    %s10 = scalar_lea.sflag [#allocation4], 1
    %11 = vsyncpa %s10, 0
    loop: start=0, step=1, limit=8
    $region2: #{_forward.5} parent=1 // loop_pre_header
      _
    $region3: #{_forward.5} parent=1 // loop_header
      %s13 = sphi 0, %s17
      %p14 = scmp.ge.s32.totalorder %s13, 8
      %s20 = sphi 0, %s32
      %s21 = sphi 0, %s28
      %s22 = sphi 0, %s20
      %s23 = sphi 0, %s21
      %s24 = sphi 0, %s22
      %s25 = sphi 0, %s23
      %s37 = sphi 0, %s39
      %s40 = sphi 0, %s37
      %s41 = sphi 0, %s40
      %s57 = sphi 0, %s41
      %s63 = sphi 0, %s65
      %s66 = sphi 0, %s63
      %s67 = sphi 0, %s66
      %s83 = sphi 0, %s67
      %s87 = sphi 0, %s87
      %s89 = sphi 0, %s87
      %s90 = sphi 0, %s89
      %s104 = sphi 0, %s90
      %s108 = sphi 0, %s108
      %s110 = sphi 0, %s108
      %s111 = sphi 0, %s110
      %s125 = sphi 0, %s111
      %s133 = sphi 0, %s135
      %s136 = sphi 0, %s133
      %s137 = sphi 0, %s136
      %s153 = sphi 0, %s137
    $region4: #{_forward.5} parent=1 // loop_header_branch
      %16 = sbr.rel (%p14) target = $region8
    $region5: #{_forward.5} parent=1 // loop_body
      %s18 = ssub.s32 %s13, 1
      %s19 = ssub.s32 %s13, 2
      %s26 = sadd.s32 1, %s21
      %p27 = scmp.ge.s32.totalorder %s26, 3
      %s28 = scalar_select %p27, 0, %s26
      %s29 = sadd.s32 1, %s20
      %s30 = scalar_select %p27, %s29, %s20
      %p31 = scmp.ge.s32.totalorder %s30, 2
      %s32 = scalar_select %p31, 0, %s30
      %s33 = ssub.s32 %s20, %s32
      %s34 = ssub.s32 %s21, %s28
      %s35 = sor.u32 %s33, %s34
      %p36 = scmp.eq.s32.totalorder %s35, 0
      %s38 = sadd.s32 %s37, 1
      %s39 = scalar_select %p36, %s37, %s38
      %p42 = pneg %p36
      %p43 = scmp.eq.s32.totalorder %s13, 5
      %p44 = por %p42, %p43
      %p45 = scmp.ne.s32.totalorder %s37, %s40
      %p46 = scmp.eq.s32.totalorder %s13, 0
      %p47 = por %p45, %p46
      %p48 = scmp.ne.s32.totalorder %s37, %s40
      %p49 = scmp.eq.s32.totalorder %s18, 5
      %p50 = por %p48, %p49
      %p51 = scmp.ne.s32.totalorder %s40, %s41
      %p52 = scmp.eq.s32.totalorder %s18, 0
      %p53 = por %p51, %p52
      %p54 = scmp.ne.s32.totalorder %s40, %s41
      %p55 = scmp.eq.s32.totalorder %s19, 5
      %p56 = por %p54, %p55
      %p58 = scmp.ne.s32.totalorder %s41, %s57
      %p59 = scmp.eq.s32.totalorder %s19, 0
      %p60 = por %p58, %p59
      %s61 = ssub.s32 %s20, %s32
      %p62 = scmp.eq.s32.totalorder %s61, 0
      %s64 = sadd.s32 %s63, 1
      %s65 = scalar_select %p62, %s63, %s64
      %p68 = pneg %p62
      %p69 = scmp.eq.s32.totalorder %s13, 5
      %p70 = por %p68, %p69
      %p71 = scmp.ne.s32.totalorder %s63, %s66
      %p72 = scmp.eq.s32.totalorder %s13, 0
      %p73 = por %p71, %p72
      %p74 = scmp.ne.s32.totalorder %s63, %s66
      %p75 = scmp.eq.s32.totalorder %s18, 5
      %p76 = por %p74, %p75
      %p77 = scmp.ne.s32.totalorder %s66, %s67
      %p78 = scmp.eq.s32.totalorder %s18, 0
      %p79 = por %p77, %p78
      %p80 = scmp.ne.s32.totalorder %s66, %s67
      %p81 = scmp.eq.s32.totalorder %s19, 5
      %p82 = por %p80, %p81
      %p84 = scmp.ne.s32.totalorder %s67, %s83
      %p85 = scmp.eq.s32.totalorder %s19, 0
      %p86 = por %p84, %p85
      %s88 = sadd.s32 %s87, 1
      %p91 = scmp.eq.s32.totalorder %s13, 5
      %p92 = scmp.ne.s32.totalorder %s87, %s89
      %p93 = scmp.eq.s32.totalorder %s13, 0
      %p94 = por %p92, %p93
      %p95 = scmp.ne.s32.totalorder %s87, %s89
      %p96 = scmp.eq.s32.totalorder %s18, 5
      %p97 = por %p95, %p96
      %p98 = scmp.ne.s32.totalorder %s89, %s90
      %p99 = scmp.eq.s32.totalorder %s18, 0
      %p100 = por %p98, %p99
      %p101 = scmp.ne.s32.totalorder %s89, %s90
      %p102 = scmp.eq.s32.totalorder %s19, 5
      %p103 = por %p101, %p102
      %p105 = scmp.ne.s32.totalorder %s90, %s104
      %p106 = scmp.eq.s32.totalorder %s19, 0
      %p107 = por %p105, %p106
      %s109 = sadd.s32 %s108, 1
      %p112 = scmp.eq.s32.totalorder %s13, 5
      %p113 = scmp.ne.s32.totalorder %s108, %s110
      %p114 = scmp.eq.s32.totalorder %s13, 0
      %p115 = por %p113, %p114
      %p116 = scmp.ne.s32.totalorder %s108, %s110
      %p117 = scmp.eq.s32.totalorder %s18, 5
      %p118 = por %p116, %p117
      %p119 = scmp.ne.s32.totalorder %s110, %s111
      %p120 = scmp.eq.s32.totalorder %s18, 0
      %p121 = por %p119, %p120
      %p122 = scmp.ne.s32.totalorder %s110, %s111
      %p123 = scmp.eq.s32.totalorder %s19, 5
      %p124 = por %p122, %p123
      %p126 = scmp.ne.s32.totalorder %s111, %s125
      %p127 = scmp.eq.s32.totalorder %s19, 0
      %p128 = por %p126, %p127
      %s129 = ssub.s32 %s20, %s32
      %s130 = ssub.s32 %s21, %s28
      %s131 = sor.u32 %s129, %s130
      %p132 = scmp.eq.s32.totalorder %s131, 0
      %s134 = sadd.s32 %s133, 1
      %s135 = scalar_select %p132, %s133, %s134
      %p138 = pneg %p132
      %p139 = scmp.eq.s32.totalorder %s13, 5
      %p140 = por %p138, %p139
      %p141 = scmp.ne.s32.totalorder %s133, %s136
      %p142 = scmp.eq.s32.totalorder %s13, 0
      %p143 = por %p141, %p142
      %p144 = scmp.ne.s32.totalorder %s133, %s136
      %p145 = scmp.eq.s32.totalorder %s18, 5
      %p146 = por %p144, %p145
      %p147 = scmp.ne.s32.totalorder %s136, %s137
      %p148 = scmp.eq.s32.totalorder %s18, 0
      %p149 = por %p147, %p148
      %p150 = scmp.ne.s32.totalorder %s136, %s137
      %p151 = scmp.eq.s32.totalorder %s19, 5
      %p152 = por %p150, %p151
      %p154 = scmp.ne.s32.totalorder %s137, %s153
      %p155 = scmp.eq.s32.totalorder %s19, 0
      %p156 = por %p154, %p155
      %p157 = scmp.le.s32.totalorder 1, %s13
      %p158 = scmp.lt.s32.totalorder %s13, 7
      %p159 = pnand %p157, %p158
      %p160 = pneg %p159
      // Predicated region
      $region9: #{_forward.5} parent=5 // pred_check
        _
      $region10: #{_forward.5} parent=5 // pred_check_branch
        %162 = sbr.rel (%p159) target = $region12
      $region11: #{_forward.5} parent=5 // pred_region
        %s163 = ssub.s32 %s13, 1
        // Predicated region
        $region13: #{_forward.5} parent=11 // pred_check
          %p164 = pneg %p100
        $region14: #{_forward.5} parent=11 // pred_check_branch
          %166 = sbr.rel (%p164) target = $region16
        $region15: #{_forward.5} parent=11 // pred_region
          _
        $region16: #{_forward.5} parent=11 // pred_fallthru
          _
        // Predicated region
        $region17: #{_forward.5} parent=11 // pred_check
          %p167 = pneg %p121
        $region18: #{_forward.5} parent=11 // pred_check_branch
          %169 = sbr.rel (%p167) target = $region20
        $region19: #{_forward.5} parent=11 // pred_region
          _
        $region20: #{_forward.5} parent=11 // pred_fallthru
          _
      $region12: #{_forward.5} parent=5 // pred_fallthru
        _
      %p170 = scmp.lt.s32.totalorder %s13, 6
      // Predicated region
      $region21: #{_forward.5} parent=5 // pred_check
        %p171 = pneg %p170
      $region22: #{_forward.5} parent=5 // pred_check_branch
        %173 = sbr.rel (%p171) target = $region24
      $region23: #{_forward.5} parent=5 // pred_region
        // Predicated region
        $region25: #{_forward.5} parent=23 // pred_check
          %p174 = pneg %p47
        $region26: #{_forward.5} parent=23 // pred_check_branch
          %176 = sbr.rel (%p174) target = $region28
        $region27: #{_forward.5} parent=23 // pred_region
          %s177 = sand.u32 %s37, 1
          %s178 = sand.u32 %s37, 1
          %s179 = smul.addr %s178, 128
          %s180 = scalar_lea.vmem [#allocation2], %s179
          %s181 = smul.addr %s20, 48
          %s182 = sadd.s32 %s21, %s181
          %s183 = smul.addr %s182, 8
          %s184 = scalar_lea.vmem %s0, %s183
          // Predicated region
          $region29: #{_forward.5} parent=27 // pred_check
            _
          $region30: #{_forward.5} parent=27 // pred_check_branch
            %186 = sbr.rel (0) target = $region32
          $region31: #{_forward.5} parent=27 // pred_region
            // Predicated region
            $region33: #{_forward.5} parent=31 // pred_check
              _
            $region34: #{_forward.5} parent=31 // pred_check_branch
              %188 = sbr.rel (0) target = $region36
            $region35: #{_forward.5} parent=31 // pred_region
              // Predicated region
              $region48: #{_forward.5} parent=35 // pred_check
                _
              $region49: #{_forward.5} parent=35 // pred_check_branch
                %234 = sbr.rel (0) target = $region51
              $region50: #{_forward.5} parent=35 // pred_region
                loop: start=0, step=1, limit=1
                $region52: #{_forward.5} parent=50 // loop_pre_header
                  _
                $region53: #{_forward.5} parent=50 // loop_header
                  %s236 = sphi 0, %s240
                  %p237 = scmp.ge.s32.totalorder %s236, 1
                  %s241 = sphi %s184, %s184
                  %s242 = sphi %s180, %s180
                $region54: #{_forward.5} parent=50 // loop_header_branch
                  %239 = sbr.rel (%p237) target = $region58
                $region55: #{_forward.5} parent=50 // loop_body
                  %v243 = vld [vmem:[%s241] sm:$0xff]
                  %244 = vst [vmem:[%s242] sm:$0xff] %v243
                  %v245 = vld [vmem:[%s241 + $0x18] sm:$0xff]
                  %246 = vst [vmem:[%s242 + $0x8] sm:$0xff] %v245
                  %v247 = vld [vmem:[%s241 + $0x30] sm:$0xff]
                  %248 = vst [vmem:[%s242 + $0x10] sm:$0xff] %v247
                  %v249 = vld [vmem:[%s241 + $0x48] sm:$0xff]
                  %250 = vst [vmem:[%s242 + $0x18] sm:$0xff] %v249
                  %v251 = vld [vmem:[%s241 + $0x60] sm:$0xff]
                  %252 = vst [vmem:[%s242 + $0x20] sm:$0xff] %v251
                  %v253 = vld [vmem:[%s241 + $0x78] sm:$0xff]
                  %254 = vst [vmem:[%s242 + $0x28] sm:$0xff] %v253
                  %v255 = vld [vmem:[%s241 + $0x90] sm:$0xff]
                  %256 = vst [vmem:[%s242 + $0x30] sm:$0xff] %v255
                  %v257 = vld [vmem:[%s241 + $0xa8] sm:$0xff]
                  %258 = vst [vmem:[%s242 + $0x38] sm:$0xff] %v257
                  %v259 = vld [vmem:[%s241 + $0xc0] sm:$0xff]
                  %260 = vst [vmem:[%s242 + $0x40] sm:$0xff] %v259
                  %v261 = vld [vmem:[%s241 + $0xd8] sm:$0xff]
                  %262 = vst [vmem:[%s242 + $0x48] sm:$0xff] %v261
                  %v263 = vld [vmem:[%s241 + $0xf0] sm:$0xff]
                  %264 = vst [vmem:[%s242 + $0x50] sm:$0xff] %v263
                  %v265 = vld [vmem:[%s241 + $0x108] sm:$0xff]
                  %266 = vst [vmem:[%s242 + $0x58] sm:$0xff] %v265
                  %v267 = vld [vmem:[%s241 + $0x120] sm:$0xff]
                  %268 = vst [vmem:[%s242 + $0x60] sm:$0xff] %v267
                  %v269 = vld [vmem:[%s241 + $0x138] sm:$0xff]
                  %270 = vst [vmem:[%s242 + $0x68] sm:$0xff] %v269
                  %v271 = vld [vmem:[%s241 + $0x150] sm:$0xff]
                  %272 = vst [vmem:[%s242 + $0x70] sm:$0xff] %v271
                  %v273 = vld [vmem:[%s241 + $0x168] sm:$0xff]
                  %274 = vst [vmem:[%s242 + $0x78] sm:$0xff] %v273
                $region56: #{_forward.5} parent=50 // loop_footer
                  %s240 = sadd.s32 1, %s236
                $region57: #{_forward.5} parent=50 // loop_footer_branch
                  %235 = sbr.rel target = $region53
                $region58: #{_forward.5} parent=50 // loop_exit
                  _
              $region51: #{_forward.5} parent=35 // pred_fallthru
                _
              // Predicated region
              $region59: #{_forward.5} parent=35 // pred_check
                _
              $region60: #{_forward.5} parent=35 // pred_check_branch
                %276 = sbr.rel target = $region62
              $region61: #{_forward.5} parent=35 // pred_region
                _
              $region62: #{_forward.5} parent=35 // pred_fallthru
                _
            $region36: #{_forward.5} parent=31 // pred_fallthru
              _
            // Predicated region
            $region37: #{_forward.5} parent=31 // pred_check
              _
            $region38: #{_forward.5} parent=31 // pred_check_branch
              %190 = sbr.rel target = $region40
            $region39: #{_forward.5} parent=31 // pred_region
              %s192 = ssub.s32 256, 1
              loop: start=0, step=1, limit=1
              $region41: #{_forward.5} parent=39 // loop_pre_header
                _
              $region42: #{_forward.5} parent=39 // loop_header
                %s194 = sphi 0, %s198
                %p195 = scmp.ge.s32.totalorder %s194, 1
                %s199 = sphi %s184, %s184
                %s200 = sphi %s180, %s180
              $region43: #{_forward.5} parent=39 // loop_header_branch
                %197 = sbr.rel (%p195) target = $region47
              $region44: #{_forward.5} parent=39 // loop_body
                %v201 = vld [vmem:[%s199] sm:%s192]
                %202 = vst [vmem:[%s200] sm:%s192] %v201
                %v203 = vld [vmem:[%s199 + $0x18] sm:%s192]
                %204 = vst [vmem:[%s200 + $0x8] sm:%s192] %v203
                %v205 = vld [vmem:[%s199 + $0x30] sm:%s192]
                %206 = vst [vmem:[%s200 + $0x10] sm:%s192] %v205
                %v207 = vld [vmem:[%s199 + $0x48] sm:%s192]
                %208 = vst [vmem:[%s200 + $0x18] sm:%s192] %v207
                %v209 = vld [vmem:[%s199 + $0x60] sm:%s192]
                %210 = vst [vmem:[%s200 + $0x20] sm:%s192] %v209
                %v211 = vld [vmem:[%s199 + $0x78] sm:%s192]
                %212 = vst [vmem:[%s200 + $0x28] sm:%s192] %v211
                %v213 = vld [vmem:[%s199 + $0x90] sm:%s192]
                %214 = vst [vmem:[%s200 + $0x30] sm:%s192] %v213
                %v215 = vld [vmem:[%s199 + $0xa8] sm:%s192]
                %216 = vst [vmem:[%s200 + $0x38] sm:%s192] %v215
                %v217 = vld [vmem:[%s199 + $0xc0] sm:%s192]
                %218 = vst [vmem:[%s200 + $0x40] sm:%s192] %v217
                %v219 = vld [vmem:[%s199 + $0xd8] sm:%s192]
                %220 = vst [vmem:[%s200 + $0x48] sm:%s192] %v219
                %v221 = vld [vmem:[%s199 + $0xf0] sm:%s192]
                %222 = vst [vmem:[%s200 + $0x50] sm:%s192] %v221
                %v223 = vld [vmem:[%s199 + $0x108] sm:%s192]
                %224 = vst [vmem:[%s200 + $0x58] sm:%s192] %v223
                %v225 = vld [vmem:[%s199 + $0x120] sm:%s192]
                %226 = vst [vmem:[%s200 + $0x60] sm:%s192] %v225
                %v227 = vld [vmem:[%s199 + $0x138] sm:%s192]
                %228 = vst [vmem:[%s200 + $0x68] sm:%s192] %v227
                %v229 = vld [vmem:[%s199 + $0x150] sm:%s192]
                %230 = vst [vmem:[%s200 + $0x70] sm:%s192] %v229
                %v231 = vld [vmem:[%s199 + $0x168] sm:%s192]
                %232 = vst [vmem:[%s200 + $0x78] sm:%s192] %v231
              $region45: #{_forward.5} parent=39 // loop_footer
                %s198 = sadd.s32 1, %s194
              $region46: #{_forward.5} parent=39 // loop_footer_branch
                %193 = sbr.rel target = $region42
              $region47: #{_forward.5} parent=39 // loop_exit
                _
            $region40: #{_forward.5} parent=31 // pred_fallthru
              _
          $region32: #{_forward.5} parent=27 // pred_fallthru
            _
          %277 = vnop
        $region28: #{_forward.5} parent=23 // pred_fallthru
          _
        // Predicated region
        $region63: #{_forward.5} parent=23 // pred_check
          %p278 = pneg %p73
        $region64: #{_forward.5} parent=23 // pred_check_branch
          %280 = sbr.rel (%p278) target = $region66
        $region65: #{_forward.5} parent=23 // pred_region
          %p281 = scmp.lt.s32.totalorder %s20, 1
          %s282 = scalar_select %p281, %s20, 1
          %s283 = smul.addr %s282, 2
          %s284 = scalar_lea.vmem %s1, %s283
        $region66: #{_forward.5} parent=23 // pred_fallthru
          _
      $region24: #{_forward.5} parent=5 // pred_fallthru
        _
      %p285 = scmp.le.s32.totalorder 1, %s13
      %p286 = scmp.lt.s32.totalorder %s13, 7
      %p287 = pnand %p285, %p286
      %p288 = pneg %p287
      // Predicated region
      $region67: #{_forward.5} parent=5 // pred_check
        _
      $region68: #{_forward.5} parent=5 // pred_check_branch
        %290 = sbr.rel (%p287) target = $region70
      $region69: #{_forward.5} parent=5 // pred_region
        %s291 = ssub.s32 %s13, 1
        %s292 = sand.u32 %s40, 1
        %s293 = sand.u32 %s40, 1
        %s294 = smul.addr %s293, 128
        %s295 = scalar_lea.vmem [#allocation2], %s294
        // Predicated region
        $region71: #{_forward.5} parent=69 // pred_check
          %p296 = pneg %p53
        $region72: #{_forward.5} parent=69 // pred_check_branch
          %298 = sbr.rel (%p296) target = $region74
        $region73: #{_forward.5} parent=69 // pred_region
          _
        $region74: #{_forward.5} parent=69 // pred_fallthru
          _
        %s299 = sand.u32 %s40, 1
        %s300 = sand.u32 %s40, 1
        %s301 = smul.addr %s300, 128
        %s302 = scalar_lea.vmem [#allocation2], %s301
        %p303 = pneg %p53
        %p304 = pneg %p50
        %p305 = scmp.lt.s32.totalorder %s22, 1
        %s306 = scalar_select %p305, %s22, 1
        %s307 = smul.addr %s306, 2
        %s308 = scalar_lea.vmem %s1, %s307
        %p309 = pneg %p79
        %p310 = pneg %p76
        %p311 = pneg %p100
        %p312 = pneg %p97
        %p313 = pneg %p121
        %p314 = pneg %p118
        %p315 = pneg %p149
        %p316 = pneg %p146
        %s317 = sand.u32 %s136, 1
        %s318 = scalar_lea.sflag [#allocation4], %s317
        %s319 = sand.u32 %s136, 1
        %s320 = smul.addr %s319, 128
        %s321 = scalar_lea.vmem [#allocation3], %s320
        %p322 = scmp.lt.s32.totalorder %s22, 1
        %s323 = scalar_select %p322, %s22, 1
        %s324 = smul.addr %s323, 2
        %s325 = scalar_lea.vmem %s1, %s324
        %v326 = vld [vmem:[%s325] sm:$0x3]
        %vm327 = vcmask 1040384
        %v328 = vsel %vm327, %v326, -inf
        %329 = vmax.xlane.f32.xlu0 %v328
        %v330 = vpop.xlane.xlu0 %329
        %v331 = vrot.slane %v330, 4
        %v332 = vmax.f32 %v330, %v331
        %v333 = vrot.slane %v332, 2
        %v334 = vmax.f32 %v332, %v333
        %v335 = vrot.slane %v334, 1
        %v336 = vmax.f32 %v334, %v335
        %s337 = vtos %v336
        %vm338 = vcmask 1041409
        %v339 = vsel %vm338, %v326, -inf
        %340 = vmax.xlane.f32.xlu0 %v339
        %v341 = vpop.xlane.xlu0 %340
        %v342 = vrot.slane %v341, 4
        %v343 = vmax.f32 %v341, %v342
        %v344 = vrot.slane %v343, 2
        %v345 = vmax.f32 %v343, %v344
        %v346 = vrot.slane %v345, 1
        %v347 = vmax.f32 %v345, %v346
        %s348 = vtos %v347
        %s349 = smul.f32 %s337, 0.00083333335
        %s350 = smul.f32 %s348, 0.00083333335
        %s351 = smul.f32 %s349, %s349
        %s352 = ssub.f32 %s350, %s351
        %s353 = smax.f32 %s352, 0.0
        %s354 = sadd.f32 %s353, 1e-08
        %v355 = vstv %s354
        %v356 = vrsqrt.pop %v355
        %s357 = vtos %v356
        %v358 = vld [vmem:[%s2] sm:$0xff]
        %v359 = vld [vmem:[%s2 + $0x8] sm:$0xff]
        %v360 = vld [vmem:[%s2 + $0x10] sm:$0xff]
        %v361 = vld [vmem:[%s2 + $0x18] sm:$0xff]
        %v362 = vld [vmem:[%s2 + $0x20] sm:$0xff]
        %v363 = vld [vmem:[%s2 + $0x28] sm:$0xff]
        %v364 = vld [vmem:[%s2 + $0x30] sm:$0xff]
        %v365 = vld [vmem:[%s2 + $0x38] sm:$0xff]
        %v366 = vld [vmem:[%s2 + $0x40] sm:$0xff]
        %v367 = vld [vmem:[%s2 + $0x48] sm:$0xff]
        %v368 = vld [vmem:[%s2 + $0x50] sm:$0xff]
        %v369 = vld [vmem:[%s2 + $0x58] sm:$0xff]
        %v370 = vld [vmem:[%s2 + $0x60] sm:$0xff]
        %v371 = vld [vmem:[%s2 + $0x68] sm:$0xff]
        %v372 = vld [vmem:[%s2 + $0x70] sm:$0xff]
        %v373 = vld [vmem:[%s2 + $0x78] sm:$0xff]
        %v374 = vstv %s357
        %v375 = vmul.f32 %v374, %v358
        %v376 = vmul.f32 %v374, %v359
        %v377 = vmul.f32 %v374, %v360
        %v378 = vmul.f32 %v374, %v361
        %v379 = vmul.f32 %v374, %v362
        %v380 = vmul.f32 %v374, %v363
        %v381 = vmul.f32 %v374, %v364
        %v382 = vmul.f32 %v374, %v365
        %v383 = vmul.f32 %v374, %v366
        %v384 = vmul.f32 %v374, %v367
        %v385 = vmul.f32 %v374, %v368
        %v386 = vmul.f32 %v374, %v369
        %v387 = vmul.f32 %v374, %v370
        %v388 = vmul.f32 %v374, %v371
        %v389 = vmul.f32 %v374, %v372
        %v390 = vmul.f32 %v374, %v373
        %v391 = vld [vmem:[%s3] sm:$0xff]
        %v392 = vld [vmem:[%s3 + $0x8] sm:$0xff]
        %v393 = vld [vmem:[%s3 + $0x10] sm:$0xff]
        %v394 = vld [vmem:[%s3 + $0x18] sm:$0xff]
        %v395 = vld [vmem:[%s3 + $0x20] sm:$0xff]
        %v396 = vld [vmem:[%s3 + $0x28] sm:$0xff]
        %v397 = vld [vmem:[%s3 + $0x30] sm:$0xff]
        %v398 = vld [vmem:[%s3 + $0x38] sm:$0xff]
        %v399 = vld [vmem:[%s3 + $0x40] sm:$0xff]
        %v400 = vld [vmem:[%s3 + $0x48] sm:$0xff]
        %v401 = vld [vmem:[%s3 + $0x50] sm:$0xff]
        %v402 = vld [vmem:[%s3 + $0x58] sm:$0xff]
        %v403 = vld [vmem:[%s3 + $0x60] sm:$0xff]
        %v404 = vld [vmem:[%s3 + $0x68] sm:$0xff]
        %v405 = vld [vmem:[%s3 + $0x70] sm:$0xff]
        %v406 = vld [vmem:[%s3 + $0x78] sm:$0xff]
        %v407 = vstv %s349
        %v408 = vmul.f32 %v407, %v375
        %v409 = vmul.f32 %v407, %v376
        %v410 = vmul.f32 %v407, %v377
        %v411 = vmul.f32 %v407, %v378
        %v412 = vmul.f32 %v407, %v379
        %v413 = vmul.f32 %v407, %v380
        %v414 = vmul.f32 %v407, %v381
        %v415 = vmul.f32 %v407, %v382
        %v416 = vmul.f32 %v407, %v383
        %v417 = vmul.f32 %v407, %v384
        %v418 = vmul.f32 %v407, %v385
        %v419 = vmul.f32 %v407, %v386
        %v420 = vmul.f32 %v407, %v387
        %v421 = vmul.f32 %v407, %v388
        %v422 = vmul.f32 %v407, %v389
        %v423 = vmul.f32 %v407, %v390
        %v424 = vsub.f32 %v391, %v408
        %v425 = vsub.f32 %v392, %v409
        %v426 = vsub.f32 %v393, %v410
        %v427 = vsub.f32 %v394, %v411
        %v428 = vsub.f32 %v395, %v412
        %v429 = vsub.f32 %v396, %v413
        %v430 = vsub.f32 %v397, %v414
        %v431 = vsub.f32 %v398, %v415
        %v432 = vsub.f32 %v399, %v416
        %v433 = vsub.f32 %v400, %v417
        %v434 = vsub.f32 %v401, %v418
        %v435 = vsub.f32 %v402, %v419
        %v436 = vsub.f32 %v403, %v420
        %v437 = vsub.f32 %v404, %v421
        %v438 = vsub.f32 %v405, %v422
        %v439 = vsub.f32 %v406, %v423
        %v440 = vld [vmem:[%s295] sm:$0xff]
        %v441 = vld [vmem:[%s295 + $0x8] sm:$0xff]
        %v442 = vld [vmem:[%s295 + $0x10] sm:$0xff]
        %v443 = vld [vmem:[%s295 + $0x18] sm:$0xff]
        %v444 = vld [vmem:[%s295 + $0x20] sm:$0xff]
        %v445 = vld [vmem:[%s295 + $0x28] sm:$0xff]
        %v446 = vld [vmem:[%s295 + $0x30] sm:$0xff]
        %v447 = vld [vmem:[%s295 + $0x38] sm:$0xff]
        %v448 = vld [vmem:[%s295 + $0x40] sm:$0xff]
        %v449 = vld [vmem:[%s295 + $0x48] sm:$0xff]
        %v450 = vld [vmem:[%s295 + $0x50] sm:$0xff]
        %v451 = vld [vmem:[%s295 + $0x58] sm:$0xff]
        %v452 = vld [vmem:[%s295 + $0x60] sm:$0xff]
        %v453 = vld [vmem:[%s295 + $0x68] sm:$0xff]
        %v454 = vld [vmem:[%s295 + $0x70] sm:$0xff]
        %v455 = vld [vmem:[%s295 + $0x78] sm:$0xff]
        %457 = vset.pattern.permute.xlu0 0
        %458 = vperm.xlu0 %457, %v375
        %v459 = vpop.permute.xlu0 %458
        %462 = vset.pattern.permute.xlu0 0
        %463 = vperm.xlu0 %462, %v376
        %v464 = vpop.permute.xlu0 %463
        %467 = vset.pattern.permute.xlu0 0
        %468 = vperm.xlu0 %467, %v377
        %v469 = vpop.permute.xlu0 %468
        %472 = vset.pattern.permute.xlu0 0
        %473 = vperm.xlu0 %472, %v378
        %v474 = vpop.permute.xlu0 %473
        %477 = vset.pattern.permute.xlu0 0
        %478 = vperm.xlu0 %477, %v379
        %v479 = vpop.permute.xlu0 %478
        %482 = vset.pattern.permute.xlu0 0
        %483 = vperm.xlu0 %482, %v380
        %v484 = vpop.permute.xlu0 %483
        %487 = vset.pattern.permute.xlu0 0
        %488 = vperm.xlu0 %487, %v381
        %v489 = vpop.permute.xlu0 %488
        %492 = vset.pattern.permute.xlu0 0
        %493 = vperm.xlu0 %492, %v382
        %v494 = vpop.permute.xlu0 %493
        %497 = vset.pattern.permute.xlu0 0
        %498 = vperm.xlu0 %497, %v383
        %v499 = vpop.permute.xlu0 %498
        %502 = vset.pattern.permute.xlu0 0
        %503 = vperm.xlu0 %502, %v384
        %v504 = vpop.permute.xlu0 %503
        %507 = vset.pattern.permute.xlu0 0
        %508 = vperm.xlu0 %507, %v385
        %v509 = vpop.permute.xlu0 %508
        %512 = vset.pattern.permute.xlu0 0
        %513 = vperm.xlu0 %512, %v386
        %v514 = vpop.permute.xlu0 %513
        %517 = vset.pattern.permute.xlu0 0
        %518 = vperm.xlu0 %517, %v387
        %v519 = vpop.permute.xlu0 %518
        %522 = vset.pattern.permute.xlu0 0
        %523 = vperm.xlu0 %522, %v388
        %v524 = vpop.permute.xlu0 %523
        %527 = vset.pattern.permute.xlu0 0
        %528 = vperm.xlu0 %527, %v389
        %v529 = vpop.permute.xlu0 %528
        %532 = vset.pattern.permute.xlu0 0
        %533 = vperm.xlu0 %532, %v390
        %v534 = vpop.permute.xlu0 %533
        %v536 = vmul.f32 %v440, %v459
        %v537 = vmul.f32 %v441, %v464
        %v538 = vmul.f32 %v442, %v469
        %v539 = vmul.f32 %v443, %v474
        %v540 = vmul.f32 %v444, %v479
        %v541 = vmul.f32 %v445, %v484
        %v542 = vmul.f32 %v446, %v489
        %v543 = vmul.f32 %v447, %v494
        %v544 = vmul.f32 %v448, %v499
        %v545 = vmul.f32 %v449, %v504
        %v546 = vmul.f32 %v450, %v509
        %v547 = vmul.f32 %v451, %v514
        %v548 = vmul.f32 %v452, %v519
        %v549 = vmul.f32 %v453, %v524
        %v550 = vmul.f32 %v454, %v529
        %v551 = vmul.f32 %v455, %v534
        %553 = vset.pattern.permute.xlu0 0
        %554 = vperm.xlu0 %553, %v424
        %v555 = vpop.permute.xlu0 %554
        %558 = vset.pattern.permute.xlu0 0
        %559 = vperm.xlu0 %558, %v425
        %v560 = vpop.permute.xlu0 %559
        %563 = vset.pattern.permute.xlu0 0
        %564 = vperm.xlu0 %563, %v426
        %v565 = vpop.permute.xlu0 %564
        %568 = vset.pattern.permute.xlu0 0
        %569 = vperm.xlu0 %568, %v427
        %v570 = vpop.permute.xlu0 %569
        %573 = vset.pattern.permute.xlu0 0
        %574 = vperm.xlu0 %573, %v428
        %v575 = vpop.permute.xlu0 %574
        %578 = vset.pattern.permute.xlu0 0
        %579 = vperm.xlu0 %578, %v429
        %v580 = vpop.permute.xlu0 %579
        %583 = vset.pattern.permute.xlu0 0
        %584 = vperm.xlu0 %583, %v430
        %v585 = vpop.permute.xlu0 %584
        %588 = vset.pattern.permute.xlu0 0
        %589 = vperm.xlu0 %588, %v431
        %v590 = vpop.permute.xlu0 %589
        %593 = vset.pattern.permute.xlu0 0
        %594 = vperm.xlu0 %593, %v432
        %v595 = vpop.permute.xlu0 %594
        %598 = vset.pattern.permute.xlu0 0
        %599 = vperm.xlu0 %598, %v433
        %v600 = vpop.permute.xlu0 %599
        %603 = vset.pattern.permute.xlu0 0
        %604 = vperm.xlu0 %603, %v434
        %v605 = vpop.permute.xlu0 %604
        %608 = vset.pattern.permute.xlu0 0
        %609 = vperm.xlu0 %608, %v435
        %v610 = vpop.permute.xlu0 %609
        %613 = vset.pattern.permute.xlu0 0
        %614 = vperm.xlu0 %613, %v436
        %v615 = vpop.permute.xlu0 %614
        %618 = vset.pattern.permute.xlu0 0
        %619 = vperm.xlu0 %618, %v437
        %v620 = vpop.permute.xlu0 %619
        %623 = vset.pattern.permute.xlu0 0
        %624 = vperm.xlu0 %623, %v438
        %v625 = vpop.permute.xlu0 %624
        %628 = vset.pattern.permute.xlu0 0
        %629 = vperm.xlu0 %628, %v439
        %v630 = vpop.permute.xlu0 %629
        %v632 = vadd.f32 %v536, %v555
        %v633 = vadd.f32 %v537, %v560
        %v634 = vadd.f32 %v538, %v565
        %v635 = vadd.f32 %v539, %v570
        %v636 = vadd.f32 %v540, %v575
        %v637 = vadd.f32 %v541, %v580
        %v638 = vadd.f32 %v542, %v585
        %v639 = vadd.f32 %v543, %v590
        %v640 = vadd.f32 %v544, %v595
        %v641 = vadd.f32 %v545, %v600
        %v642 = vadd.f32 %v546, %v605
        %v643 = vadd.f32 %v547, %v610
        %v644 = vadd.f32 %v548, %v615
        %v645 = vadd.f32 %v549, %v620
        %v646 = vadd.f32 %v550, %v625
        %v647 = vadd.f32 %v551, %v630
        %648 = vst [vmem:[%s321] sm:$0xff] %v632
        %649 = vst [vmem:[%s321 + $0x8] sm:$0xff] %v633
        %650 = vst [vmem:[%s321 + $0x10] sm:$0xff] %v634
        %651 = vst [vmem:[%s321 + $0x18] sm:$0xff] %v635
        %652 = vst [vmem:[%s321 + $0x20] sm:$0xff] %v636
        %653 = vst [vmem:[%s321 + $0x28] sm:$0xff] %v637
        %654 = vst [vmem:[%s321 + $0x30] sm:$0xff] %v638
        %655 = vst [vmem:[%s321 + $0x38] sm:$0xff] %v639
        %656 = vst [vmem:[%s321 + $0x40] sm:$0xff] %v640
        %657 = vst [vmem:[%s321 + $0x48] sm:$0xff] %v641
        %658 = vst [vmem:[%s321 + $0x50] sm:$0xff] %v642
        %659 = vst [vmem:[%s321 + $0x58] sm:$0xff] %v643
        %660 = vst [vmem:[%s321 + $0x60] sm:$0xff] %v644
        %661 = vst [vmem:[%s321 + $0x68] sm:$0xff] %v645
        %662 = vst [vmem:[%s321 + $0x70] sm:$0xff] %v646
        %663 = vst [vmem:[%s321 + $0x78] sm:$0xff] %v647
        %s664 = sand.u32 %s136, 1
        %s665 = scalar_lea.sflag [#allocation4], %s664
        %s666 = sand.u32 %s136, 1
        %s667 = smul.addr %s666, 128
        %s668 = scalar_lea.vmem [#allocation3], %s667
        // Predicated region
        $region75: #{_forward.5} parent=69 // pred_check
          %p669 = pneg %p146
        $region76: #{_forward.5} parent=69 // pred_check_branch
          %671 = sbr.rel (%p669) target = $region78
        $region77: #{_forward.5} parent=69 // pred_region
          %s673 = ssub.s32 2048, 2048
          %674 = vsyncadd %s665, %s673
          %s675 = smul.addr %s22, 48
          %s676 = sadd.s32 %s23, %s675
          %s677 = smul.addr %s676, 128
          %s678 = scalar_lea.hbm %s4, %s677
          %s679 = sshll.u32 %s668, 4
          %s680 = int_to_ptr.vmem [resolvable:$true] %s679
          %685 = dma.vmem_to_hbm [thread:$0]  %s680, 2048, %s678, %s665, 128, 384, 8
        $region78: #{_forward.5} parent=69 // pred_fallthru
          _
      $region70: #{_forward.5} parent=5 // pred_fallthru
        _
      %p686 = scmp.le.s32.totalorder 2, %s13
      // Predicated region
      $region79: #{_forward.5} parent=5 // pred_check
        %p687 = pneg %p686
      $region80: #{_forward.5} parent=5 // pred_check_branch
        %689 = sbr.rel (%p687) target = $region82
      $region81: #{_forward.5} parent=5 // pred_region
        %s690 = ssub.s32 %s13, 2
        // Predicated region
        $region83: #{_forward.5} parent=81 // pred_check
          %p691 = pneg %p152
        $region84: #{_forward.5} parent=81 // pred_check_branch
          %693 = sbr.rel (%p691) target = $region86
        $region85: #{_forward.5} parent=81 // pred_region
          %s694 = sand.u32 %s137, 1
          %s695 = scalar_lea.sflag [#allocation4], %s694
          %s696 = sand.u32 %s137, 1
          %s697 = smul.addr %s696, 128
          %s698 = scalar_lea.vmem [#allocation3], %s697
          %699 = dma.done %s695, 2048
        $region86: #{_forward.5} parent=81 // pred_fallthru
          _
      $region82: #{_forward.5} parent=5 // pred_fallthru
        _
    $region6: #{_forward.5} parent=1 // loop_footer
      %s17 = sadd.s32 1, %s13
    $region7: #{_forward.5} parent=1 // loop_footer_branch
      %12 = sbr.rel target = $region3
    $region8: #{_forward.5} parent=1 // loop_exit
      _
    %700 = vsyncpa [#allocation4], 1
    %s701 = scalar_lea.sflag [#allocation4], 1
    %702 = vsyncpa %s701, 1

// kernel: _forward.4
$region0: #{_forward.4}
  #allocation0 [shape = 'u32[]', space=smem, size = 0x4, offset = 0x4, fixed_abs, tag = 'smem constant byte address 0x4 - core index']
  #allocation1 [shape = 'u32[144,128]{1,0:T(1,128)}', space=vmem, size = 0x12000, scoped, tag = 'internal scratch']
  %s0 = inlined_call_operand.vmem [shape: bf16[2,128,384], index: 0, kind: input, shape index: {}, may-alias: {0,1,2}]
  %s1 = inlined_call_operand.vmem [shape: bf16[2,128,384], index: 1, kind: input, shape index: {}, may-alias: {0,1,2}]
  %s2 = inlined_call_operand.vmem [shape: bf16[2,128,384], index: 2, kind: input, shape index: {}, may-alias: {0,1,2}]
  %s3 = inlined_call_operand.vmem [shape: f32[2,128,1], index: 3, kind: input, shape index: {}]
  %s4 = inlined_call_operand.vmem [shape: f32[2,128,1], index: 4, kind: input, shape index: {}]
  %s5 = inlined_call_operand.vmem [shape: bf16[128,128], index: 5, kind: input, shape index: {}]
  %s6 = inlined_call_operand.vmem [shape: f32[128,5], index: 6, kind: input, shape index: {}]
  %s7 = inlined_call_operand.vmem [shape: f32[128,1], index: 7, kind: input, shape index: {}]
  %s8 = inlined_call_operand.vmem [shape: bf16[128,128], index: 8, kind: input, shape index: {}]
  %s9 = inlined_call_operand.vmem [shape: f32[2,128,384], index: 9, kind: output, shape index: {0}]
  %s10 = inlined_call_operand.vmem [shape: f32[2,2,128], index: 10, kind: output, shape index: {1}]
  %11 = xla_tuple %s9, %s10
  %s12 = sld [smem:[#allocation0]]
  $region238: #{_forward.4} parent=0
    _
  %s14 = ssub.s32 1, %s12
  %s15 = scalar_select 0, %s14, %s12
  $region1: #{_forward.4} parent=0
    #allocation2 [shape = 'u8[65536]{0}', space=vmem, size = 0x10000, scoped, tag = 'input window, operand 0']
    #allocation3 [shape = 'u8[65536]{0}', space=vmem, size = 0x10000, scoped, tag = 'input window, operand 1']
    #allocation4 [shape = 'u8[65536]{0}', space=vmem, size = 0x10000, scoped, tag = 'input window, operand 2']
    #allocation5 [shape = 'u8[131072]{0}', space=vmem, size = 0x20000, scoped, tag = 'output window, operand 0']
    loop: start=0, step=1, limit=8
    $region2: #{_forward.4} parent=1 // loop_pre_header
      _
    $region3: #{_forward.4} parent=1 // loop_header
      %s17 = sphi 0, %s21
      %p18 = scmp.ge.s32.totalorder %s17, 8
      %s24 = sphi 0, %s36
      %s25 = sphi 0, %s32
      %s26 = sphi 0, %s24
      %s27 = sphi 0, %s25
      %s28 = sphi 0, %s26
      %s29 = sphi 0, %s27
      %s41 = sphi 0, %s43
      %s44 = sphi 0, %s41
      %s45 = sphi 0, %s44
      %s61 = sphi 0, %s45
      %s75 = sphi 0, %s77
      %s78 = sphi 0, %s75
      %s79 = sphi 0, %s78
      %s95 = sphi 0, %s79
      %s109 = sphi 0, %s111
      %s112 = sphi 0, %s109
      %s113 = sphi 0, %s112
      %s129 = sphi 0, %s113
      %s135 = sphi 0, %s137
      %s138 = sphi 0, %s135
      %s139 = sphi 0, %s138
      %s155 = sphi 0, %s139
      %s161 = sphi 0, %s163
      %s164 = sphi 0, %s161
      %s165 = sphi 0, %s164
      %s181 = sphi 0, %s165
      %s185 = sphi 0, %s185
      %s187 = sphi 0, %s185
      %s188 = sphi 0, %s187
      %s202 = sphi 0, %s188
      %s206 = sphi 0, %s206
      %s208 = sphi 0, %s206
      %s209 = sphi 0, %s208
      %s223 = sphi 0, %s209
      %s227 = sphi 0, %s227
      %s229 = sphi 0, %s227
      %s230 = sphi 0, %s229
      %s244 = sphi 0, %s230
      %s248 = sphi 0, %s248
      %s250 = sphi 0, %s248
      %s251 = sphi 0, %s250
      %s265 = sphi 0, %s251
      %s273 = sphi 0, %s275
      %s276 = sphi 0, %s273
      %s277 = sphi 0, %s276
      %s293 = sphi 0, %s277
      %s299 = sphi 0, %s301
      %s302 = sphi 0, %s299
      %s303 = sphi 0, %s302
      %s319 = sphi 0, %s303
    $region4: #{_forward.4} parent=1 // loop_header_branch
      %20 = sbr.rel (%p18) target = $region8
    $region5: #{_forward.4} parent=1 // loop_body
      %s22 = ssub.s32 %s17, 1
      %s23 = ssub.s32 %s17, 2
      %s30 = sadd.s32 1, %s25
      %p31 = scmp.ge.s32.totalorder %s30, 3
      %s32 = scalar_select %p31, 0, %s30
      %s33 = sadd.s32 1, %s24
      %s34 = scalar_select %p31, %s33, %s24
      %p35 = scmp.ge.s32.totalorder %s34, 2
      %s36 = scalar_select %p35, 0, %s34
      %s37 = ssub.s32 %s24, %s36
      %s38 = ssub.s32 %s25, %s32
      %s39 = sor.u32 %s37, %s38
      %p40 = scmp.eq.s32.totalorder %s39, 0
      %s42 = sadd.s32 %s41, 1
      %s43 = scalar_select %p40, %s41, %s42
      %p46 = pneg %p40
      %p47 = scmp.eq.s32.totalorder %s17, 5
      %p48 = por %p46, %p47
      %p49 = scmp.ne.s32.totalorder %s41, %s44
      %p50 = scmp.eq.s32.totalorder %s17, 0
      %p51 = por %p49, %p50
      %p52 = scmp.ne.s32.totalorder %s41, %s44
      %p53 = scmp.eq.s32.totalorder %s22, 5
      %p54 = por %p52, %p53
      %p55 = scmp.ne.s32.totalorder %s44, %s45
      %p56 = scmp.eq.s32.totalorder %s22, 0
      %p57 = por %p55, %p56
      %p58 = scmp.ne.s32.totalorder %s44, %s45
      %p59 = scmp.eq.s32.totalorder %s23, 5
      %p60 = por %p58, %p59
      %p62 = scmp.ne.s32.totalorder %s45, %s61
      %p63 = scmp.eq.s32.totalorder %s23, 0
      %p64 = por %p62, %p63
      %s65 = ssub.s32 %s25, 1
      %p66 = scmp.gt.s32.totalorder %s65, 0
      %s67 = scalar_select %p66, %s65, 0
      %s68 = ssub.s32 %s32, 1
      %p69 = scmp.gt.s32.totalorder %s68, 0
      %s70 = scalar_select %p69, %s68, 0
      %s71 = ssub.s32 %s24, %s36
      %s72 = ssub.s32 %s67, %s70
      %s73 = sor.u32 %s71, %s72
      %p74 = scmp.eq.s32.totalorder %s73, 0
      %s76 = sadd.s32 %s75, 1
      %s77 = scalar_select %p74, %s75, %s76
      %p80 = pneg %p74
      %p81 = scmp.eq.s32.totalorder %s17, 5
      %p82 = por %p80, %p81
      %p83 = scmp.ne.s32.totalorder %s75, %s78
      %p84 = scmp.eq.s32.totalorder %s17, 0
      %p85 = por %p83, %p84
      %p86 = scmp.ne.s32.totalorder %s75, %s78
      %p87 = scmp.eq.s32.totalorder %s22, 5
      %p88 = por %p86, %p87
      %p89 = scmp.ne.s32.totalorder %s78, %s79
      %p90 = scmp.eq.s32.totalorder %s22, 0
      %p91 = por %p89, %p90
      %p92 = scmp.ne.s32.totalorder %s78, %s79
      %p93 = scmp.eq.s32.totalorder %s23, 5
      %p94 = por %p92, %p93
      %p96 = scmp.ne.s32.totalorder %s79, %s95
      %p97 = scmp.eq.s32.totalorder %s23, 0
      %p98 = por %p96, %p97
      %s99 = sadd.s32 %s25, 1
      %p100 = scmp.lt.s32.totalorder %s99, 2
      %s101 = scalar_select %p100, %s99, 2
      %s102 = sadd.s32 %s32, 1
      %p103 = scmp.lt.s32.totalorder %s102, 2
      %s104 = scalar_select %p103, %s102, 2
      %s105 = ssub.s32 %s24, %s36
      %s106 = ssub.s32 %s101, %s104
      %s107 = sor.u32 %s105, %s106
      %p108 = scmp.eq.s32.totalorder %s107, 0
      %s110 = sadd.s32 %s109, 1
      %s111 = scalar_select %p108, %s109, %s110
      %p114 = pneg %p108
      %p115 = scmp.eq.s32.totalorder %s17, 5
      %p116 = por %p114, %p115
      %p117 = scmp.ne.s32.totalorder %s109, %s112
      %p118 = scmp.eq.s32.totalorder %s17, 0
      %p119 = por %p117, %p118
      %p120 = scmp.ne.s32.totalorder %s109, %s112
      %p121 = scmp.eq.s32.totalorder %s22, 5
      %p122 = por %p120, %p121
      %p123 = scmp.ne.s32.totalorder %s112, %s113
      %p124 = scmp.eq.s32.totalorder %s22, 0
      %p125 = por %p123, %p124
      %p126 = scmp.ne.s32.totalorder %s112, %s113
      %p127 = scmp.eq.s32.totalorder %s23, 5
      %p128 = por %p126, %p127
      %p130 = scmp.ne.s32.totalorder %s113, %s129
      %p131 = scmp.eq.s32.totalorder %s23, 0
      %p132 = por %p130, %p131
      %s133 = ssub.s32 %s24, %s36
      %p134 = scmp.eq.s32.totalorder %s133, 0
      %s136 = sadd.s32 %s135, 1
      %s137 = scalar_select %p134, %s135, %s136
      %p140 = pneg %p134
      %p141 = scmp.eq.s32.totalorder %s17, 5
      %p142 = por %p140, %p141
      %p143 = scmp.ne.s32.totalorder %s135, %s138
      %p144 = scmp.eq.s32.totalorder %s17, 0
      %p145 = por %p143, %p144
      %p146 = scmp.ne.s32.totalorder %s135, %s138
      %p147 = scmp.eq.s32.totalorder %s22, 5
      %p148 = por %p146, %p147
      %p149 = scmp.ne.s32.totalorder %s138, %s139
      %p150 = scmp.eq.s32.totalorder %s22, 0
      %p151 = por %p149, %p150
      %p152 = scmp.ne.s32.totalorder %s138, %s139
      %p153 = scmp.eq.s32.totalorder %s23, 5
      %p154 = por %p152, %p153
      %p156 = scmp.ne.s32.totalorder %s139, %s155
      %p157 = scmp.eq.s32.totalorder %s23, 0
      %p158 = por %p156, %p157
      %s159 = ssub.s32 %s24, %s36
      %p160 = scmp.eq.s32.totalorder %s159, 0
      %s162 = sadd.s32 %s161, 1
      %s163 = scalar_select %p160, %s161, %s162
      %p166 = pneg %p160
      %p167 = scmp.eq.s32.totalorder %s17, 5
      %p168 = por %p166, %p167
      %p169 = scmp.ne.s32.totalorder %s161, %s164
      %p170 = scmp.eq.s32.totalorder %s17, 0
      %p171 = por %p169, %p170
      %p172 = scmp.ne.s32.totalorder %s161, %s164
      %p173 = scmp.eq.s32.totalorder %s22, 5
      %p174 = por %p172, %p173
      %p175 = scmp.ne.s32.totalorder %s164, %s165
      %p176 = scmp.eq.s32.totalorder %s22, 0
      %p177 = por %p175, %p176
      %p178 = scmp.ne.s32.totalorder %s164, %s165
      %p179 = scmp.eq.s32.totalorder %s23, 5
      %p180 = por %p178, %p179
      %p182 = scmp.ne.s32.totalorder %s165, %s181
      %p183 = scmp.eq.s32.totalorder %s23, 0
      %p184 = por %p182, %p183
      %s186 = sadd.s32 %s185, 1
      %p189 = scmp.eq.s32.totalorder %s17, 5
      %p190 = scmp.ne.s32.totalorder %s185, %s187
      %p191 = scmp.eq.s32.totalorder %s17, 0
      %p192 = por %p190, %p191
      %p193 = scmp.ne.s32.totalorder %s185, %s187
      %p194 = scmp.eq.s32.totalorder %s22, 5
      %p195 = por %p193, %p194
      %p196 = scmp.ne.s32.totalorder %s187, %s188
      %p197 = scmp.eq.s32.totalorder %s22, 0
      %p198 = por %p196, %p197
      %p199 = scmp.ne.s32.totalorder %s187, %s188
      %p200 = scmp.eq.s32.totalorder %s23, 5
      %p201 = por %p199, %p200
      %p203 = scmp.ne.s32.totalorder %s188, %s202
      %p204 = scmp.eq.s32.totalorder %s23, 0
      %p205 = por %p203, %p204
      %s207 = sadd.s32 %s206, 1
      %p210 = scmp.eq.s32.totalorder %s17, 5
      %p211 = scmp.ne.s32.totalorder %s206, %s208
      %p212 = scmp.eq.s32.totalorder %s17, 0
      %p213 = por %p211, %p212
      %p214 = scmp.ne.s32.totalorder %s206, %s208
      %p215 = scmp.eq.s32.totalorder %s22, 5
      %p216 = por %p214, %p215
      %p217 = scmp.ne.s32.totalorder %s208, %s209
      %p218 = scmp.eq.s32.totalorder %s22, 0
      %p219 = por %p217, %p218
      %p220 = scmp.ne.s32.totalorder %s208, %s209
      %p221 = scmp.eq.s32.totalorder %s23, 5
      %p222 = por %p220, %p221
      %p224 = scmp.ne.s32.totalorder %s209, %s223
      %p225 = scmp.eq.s32.totalorder %s23, 0
      %p226 = por %p224, %p225
      %s228 = sadd.s32 %s227, 1
      %p231 = scmp.eq.s32.totalorder %s17, 5
      %p232 = scmp.ne.s32.totalorder %s227, %s229
      %p233 = scmp.eq.s32.totalorder %s17, 0
      %p234 = por %p232, %p233
      %p235 = scmp.ne.s32.totalorder %s227, %s229
      %p236 = scmp.eq.s32.totalorder %s22, 5
      %p237 = por %p235, %p236
      %p238 = scmp.ne.s32.totalorder %s229, %s230
      %p239 = scmp.eq.s32.totalorder %s22, 0
      %p240 = por %p238, %p239
      %p241 = scmp.ne.s32.totalorder %s229, %s230
      %p242 = scmp.eq.s32.totalorder %s23, 5
      %p243 = por %p241, %p242
      %p245 = scmp.ne.s32.totalorder %s230, %s244
      %p246 = scmp.eq.s32.totalorder %s23, 0
      %p247 = por %p245, %p246
      %s249 = sadd.s32 %s248, 1
      %p252 = scmp.eq.s32.totalorder %s17, 5
      %p253 = scmp.ne.s32.totalorder %s248, %s250
      %p254 = scmp.eq.s32.totalorder %s17, 0
      %p255 = por %p253, %p254
      %p256 = scmp.ne.s32.totalorder %s248, %s250
      %p257 = scmp.eq.s32.totalorder %s22, 5
      %p258 = por %p256, %p257
      %p259 = scmp.ne.s32.totalorder %s250, %s251
      %p260 = scmp.eq.s32.totalorder %s22, 0
      %p261 = por %p259, %p260
      %p262 = scmp.ne.s32.totalorder %s250, %s251
      %p263 = scmp.eq.s32.totalorder %s23, 5
      %p264 = por %p262, %p263
      %p266 = scmp.ne.s32.totalorder %s251, %s265
      %p267 = scmp.eq.s32.totalorder %s23, 0
      %p268 = por %p266, %p267
      %s269 = ssub.s32 %s24, %s36
      %s270 = ssub.s32 %s25, %s32
      %s271 = sor.u32 %s269, %s270
      %p272 = scmp.eq.s32.totalorder %s271, 0
      %s274 = sadd.s32 %s273, 1
      %s275 = scalar_select %p272, %s273, %s274
      %p278 = pneg %p272
      %p279 = scmp.eq.s32.totalorder %s17, 5
      %p280 = por %p278, %p279
      %p281 = scmp.ne.s32.totalorder %s273, %s276
      %p282 = scmp.eq.s32.totalorder %s17, 0
      %p283 = por %p281, %p282
      %p284 = scmp.ne.s32.totalorder %s273, %s276
      %p285 = scmp.eq.s32.totalorder %s22, 5
      %p286 = por %p284, %p285
      %p287 = scmp.ne.s32.totalorder %s276, %s277
      %p288 = scmp.eq.s32.totalorder %s22, 0
      %p289 = por %p287, %p288
      %p290 = scmp.ne.s32.totalorder %s276, %s277
      %p291 = scmp.eq.s32.totalorder %s23, 5
      %p292 = por %p290, %p291
      %p294 = scmp.ne.s32.totalorder %s277, %s293
      %p295 = scmp.eq.s32.totalorder %s23, 0
      %p296 = por %p294, %p295
      %s297 = ssub.s32 %s24, %s36
      %p298 = scmp.eq.s32.totalorder %s297, 0
      %s300 = sadd.s32 %s299, 1
      %s301 = scalar_select %p298, %s299, %s300
      %p304 = pneg %p298
      %p305 = scmp.eq.s32.totalorder %s17, 5
      %p306 = por %p304, %p305
      %p307 = scmp.ne.s32.totalorder %s299, %s302
      %p308 = scmp.eq.s32.totalorder %s17, 0
      %p309 = por %p307, %p308
      %p310 = scmp.ne.s32.totalorder %s299, %s302
      %p311 = scmp.eq.s32.totalorder %s22, 5
      %p312 = por %p310, %p311
      %p313 = scmp.ne.s32.totalorder %s302, %s303
      %p314 = scmp.eq.s32.totalorder %s22, 0
      %p315 = por %p313, %p314
      %p316 = scmp.ne.s32.totalorder %s302, %s303
      %p317 = scmp.eq.s32.totalorder %s23, 5
      %p318 = por %p316, %p317
      %p320 = scmp.ne.s32.totalorder %s303, %s319
      %p321 = scmp.eq.s32.totalorder %s23, 0
      %p322 = por %p320, %p321
      %p323 = scmp.le.s32.totalorder 1, %s17
      %p324 = scmp.lt.s32.totalorder %s17, 7
      %p325 = pnand %p323, %p324
      %p326 = pneg %p325
      // Predicated region
      $region9: #{_forward.4} parent=5 // pred_check
        _
      $region10: #{_forward.4} parent=5 // pred_check_branch
        %328 = sbr.rel (%p325) target = $region12
      $region11: #{_forward.4} parent=5 // pred_region
        %s329 = ssub.s32 %s17, 1
        // Predicated region
        $region13: #{_forward.4} parent=11 // pred_check
          %p330 = pneg %p198
        $region14: #{_forward.4} parent=11 // pred_check_branch
          %332 = sbr.rel (%p330) target = $region16
        $region15: #{_forward.4} parent=11 // pred_region
          _
        $region16: #{_forward.4} parent=11 // pred_fallthru
          _
        // Predicated region
        $region17: #{_forward.4} parent=11 // pred_check
          %p333 = pneg %p219
        $region18: #{_forward.4} parent=11 // pred_check_branch
          %335 = sbr.rel (%p333) target = $region20
        $region19: #{_forward.4} parent=11 // pred_region
          _
        $region20: #{_forward.4} parent=11 // pred_fallthru
          _
        // Predicated region
        $region21: #{_forward.4} parent=11 // pred_check
          %p336 = pneg %p240
        $region22: #{_forward.4} parent=11 // pred_check_branch
          %338 = sbr.rel (%p336) target = $region24
        $region23: #{_forward.4} parent=11 // pred_region
          _
        $region24: #{_forward.4} parent=11 // pred_fallthru
          _
        // Predicated region
        $region25: #{_forward.4} parent=11 // pred_check
          %p339 = pneg %p261
        $region26: #{_forward.4} parent=11 // pred_check_branch
          %341 = sbr.rel (%p339) target = $region28
        $region27: #{_forward.4} parent=11 // pred_region
          _
        $region28: #{_forward.4} parent=11 // pred_fallthru
          _
      $region12: #{_forward.4} parent=5 // pred_fallthru
        _
      %p342 = scmp.lt.s32.totalorder %s17, 6
      // Predicated region
      $region29: #{_forward.4} parent=5 // pred_check
        %p343 = pneg %p342
      $region30: #{_forward.4} parent=5 // pred_check_branch
        %345 = sbr.rel (%p343) target = $region32
      $region31: #{_forward.4} parent=5 // pred_region
        // Predicated region
        $region33: #{_forward.4} parent=31 // pred_check
          %p346 = pneg %p51
        $region34: #{_forward.4} parent=31 // pred_check_branch
          %348 = sbr.rel (%p346) target = $region36
        $region35: #{_forward.4} parent=31 // pred_region
          %s349 = sand.u32 %s41, 1
          %s350 = sand.u32 %s41, 1
          %s351 = smul.addr %s350, 64
          %s352 = scalar_lea.vmem [#allocation2], %s351
          %s353 = smul.addr %s24, 48
          %s354 = sadd.s32 %s25, %s353
          %s355 = smul.addr %s354, 4
          %s356 = scalar_lea.vmem %s0, %s355
          // Predicated region
          $region37: #{_forward.4} parent=35 // pred_check
            _
          $region38: #{_forward.4} parent=35 // pred_check_branch
            %358 = sbr.rel (0) target = $region40
          $region39: #{_forward.4} parent=35 // pred_region
            // Predicated region
            $region41: #{_forward.4} parent=39 // pred_check
              _
            $region42: #{_forward.4} parent=39 // pred_check_branch
              %360 = sbr.rel target = $region44
            $region43: #{_forward.4} parent=39 // pred_region
              // Predicated region
              $region56: #{_forward.4} parent=43 // pred_check
                _
              $region57: #{_forward.4} parent=43 // pred_check_branch
                %406 = sbr.rel (0) target = $region59
              $region58: #{_forward.4} parent=43 // pred_region
                loop: start=0, step=1, limit=1
                $region60: #{_forward.4} parent=58 // loop_pre_header
                  _
                $region61: #{_forward.4} parent=58 // loop_header
                  %s408 = sphi 0, %s412
                  %p409 = scmp.ge.s32.totalorder %s408, 1
                  %s413 = sphi %s356, %s356
                  %s414 = sphi %s352, %s352
                $region62: #{_forward.4} parent=58 // loop_header_branch
                  %411 = sbr.rel (%p409) target = $region66
                $region63: #{_forward.4} parent=58 // loop_body
                  _
                $region64: #{_forward.4} parent=58 // loop_footer
                  %s412 = sadd.s32 1, %s408
                $region65: #{_forward.4} parent=58 // loop_footer_branch
                  %407 = sbr.rel target = $region61
                $region66: #{_forward.4} parent=58 // loop_exit
                  _
                %s416 = ssub.s32 16, 1
                loop: start=0, step=1, limit=1
                $region67: #{_forward.4} parent=58 // loop_pre_header
                  _
                $region68: #{_forward.4} parent=58 // loop_header
                  %s418 = sphi 0, %s422
                  %p419 = scmp.ge.s32.totalorder %s418, 1
                  %s423 = sphi %s356, %s356
                  %s424 = sphi %s352, %s352
                $region69: #{_forward.4} parent=58 // loop_header_branch
                  %421 = sbr.rel (%p419) target = $region73
                $region70: #{_forward.4} parent=58 // loop_body
                  %v425 = vld [vmem:[%s423] sm:%s416]
                  %426 = vst [vmem:[%s424] sm:%s416] %v425
                  %v427 = vld [vmem:[%s423 + $0xc] sm:%s416]
                  %428 = vst [vmem:[%s424 + $0x4] sm:%s416] %v427
                  %v429 = vld [vmem:[%s423 + $0x18] sm:%s416]
                  %430 = vst [vmem:[%s424 + $0x8] sm:%s416] %v429
                  %v431 = vld [vmem:[%s423 + $0x24] sm:%s416]
                  %432 = vst [vmem:[%s424 + $0xc] sm:%s416] %v431
                  %v433 = vld [vmem:[%s423 + $0x30] sm:%s416]
                  %434 = vst [vmem:[%s424 + $0x10] sm:%s416] %v433
                  %v435 = vld [vmem:[%s423 + $0x3c] sm:%s416]
                  %436 = vst [vmem:[%s424 + $0x14] sm:%s416] %v435
                  %v437 = vld [vmem:[%s423 + $0x48] sm:%s416]
                  %438 = vst [vmem:[%s424 + $0x18] sm:%s416] %v437
                  %v439 = vld [vmem:[%s423 + $0x54] sm:%s416]
                  %440 = vst [vmem:[%s424 + $0x1c] sm:%s416] %v439
                  %v441 = vld [vmem:[%s423 + $0x60] sm:%s416]
                  %442 = vst [vmem:[%s424 + $0x20] sm:%s416] %v441
                  %v443 = vld [vmem:[%s423 + $0x6c] sm:%s416]
                  %444 = vst [vmem:[%s424 + $0x24] sm:%s416] %v443
                  %v445 = vld [vmem:[%s423 + $0x78] sm:%s416]
                  %446 = vst [vmem:[%s424 + $0x28] sm:%s416] %v445
                  %v447 = vld [vmem:[%s423 + $0x84] sm:%s416]
                  %448 = vst [vmem:[%s424 + $0x2c] sm:%s416] %v447
                  %v449 = vld [vmem:[%s423 + $0x90] sm:%s416]
                  %450 = vst [vmem:[%s424 + $0x30] sm:%s416] %v449
                  %v451 = vld [vmem:[%s423 + $0x9c] sm:%s416]
                  %452 = vst [vmem:[%s424 + $0x34] sm:%s416] %v451
                  %v453 = vld [vmem:[%s423 + $0xa8] sm:%s416]
                  %454 = vst [vmem:[%s424 + $0x38] sm:%s416] %v453
                  %v455 = vld [vmem:[%s423 + $0xb4] sm:%s416]
                  %456 = vst [vmem:[%s424 + $0x3c] sm:%s416] %v455
                $region71: #{_forward.4} parent=58 // loop_footer
                  %s422 = sadd.s32 1, %s418
                $region72: #{_forward.4} parent=58 // loop_footer_branch
                  %417 = sbr.rel target = $region68
                $region73: #{_forward.4} parent=58 // loop_exit
                  _
              $region59: #{_forward.4} parent=43 // pred_fallthru
                _
            $region44: #{_forward.4} parent=39 // pred_fallthru
              _
            // Predicated region
            $region45: #{_forward.4} parent=39 // pred_check
              _
            $region46: #{_forward.4} parent=39 // pred_check_branch
              %362 = sbr.rel (0) target = $region48
            $region47: #{_forward.4} parent=39 // pred_region
              %s364 = ssub.s32 16, 1
              loop: start=0, step=1, limit=1
              $region49: #{_forward.4} parent=47 // loop_pre_header
                _
              $region50: #{_forward.4} parent=47 // loop_header
                %s366 = sphi 0, %s370
                %p367 = scmp.ge.s32.totalorder %s366, 1
                %s371 = sphi %s356, %s356
                %s372 = sphi %s352, %s352
              $region51: #{_forward.4} parent=47 // loop_header_branch
                %369 = sbr.rel (%p367) target = $region55
              $region52: #{_forward.4} parent=47 // loop_body
                %v373 = vld [vmem:[%s371] sm:%s364]
                %374 = vst [vmem:[%s372] sm:%s364] %v373
                %v375 = vld [vmem:[%s371 + $0xc] sm:%s364]
                %376 = vst [vmem:[%s372 + $0x4] sm:%s364] %v375
                %v377 = vld [vmem:[%s371 + $0x18] sm:%s364]
                %378 = vst [vmem:[%s372 + $0x8] sm:%s364] %v377
                %v379 = vld [vmem:[%s371 + $0x24] sm:%s364]
                %380 = vst [vmem:[%s372 + $0xc] sm:%s364] %v379
                %v381 = vld [vmem:[%s371 + $0x30] sm:%s364]
                %382 = vst [vmem:[%s372 + $0x10] sm:%s364] %v381
                %v383 = vld [vmem:[%s371 + $0x3c] sm:%s364]
                %384 = vst [vmem:[%s372 + $0x14] sm:%s364] %v383
                %v385 = vld [vmem:[%s371 + $0x48] sm:%s364]
                %386 = vst [vmem:[%s372 + $0x18] sm:%s364] %v385
                %v387 = vld [vmem:[%s371 + $0x54] sm:%s364]
                %388 = vst [vmem:[%s372 + $0x1c] sm:%s364] %v387
                %v389 = vld [vmem:[%s371 + $0x60] sm:%s364]
                %390 = vst [vmem:[%s372 + $0x20] sm:%s364] %v389
                %v391 = vld [vmem:[%s371 + $0x6c] sm:%s364]
                %392 = vst [vmem:[%s372 + $0x24] sm:%s364] %v391
                %v393 = vld [vmem:[%s371 + $0x78] sm:%s364]
                %394 = vst [vmem:[%s372 + $0x28] sm:%s364] %v393
                %v395 = vld [vmem:[%s371 + $0x84] sm:%s364]
                %396 = vst [vmem:[%s372 + $0x2c] sm:%s364] %v395
                %v397 = vld [vmem:[%s371 + $0x90] sm:%s364]
                %398 = vst [vmem:[%s372 + $0x30] sm:%s364] %v397
                %v399 = vld [vmem:[%s371 + $0x9c] sm:%s364]
                %400 = vst [vmem:[%s372 + $0x34] sm:%s364] %v399
                %v401 = vld [vmem:[%s371 + $0xa8] sm:%s364]
                %402 = vst [vmem:[%s372 + $0x38] sm:%s364] %v401
                %v403 = vld [vmem:[%s371 + $0xb4] sm:%s364]
                %404 = vst [vmem:[%s372 + $0x3c] sm:%s364] %v403
              $region53: #{_forward.4} parent=47 // loop_footer
                %s370 = sadd.s32 1, %s366
              $region54: #{_forward.4} parent=47 // loop_footer_branch
                %365 = sbr.rel target = $region50
              $region55: #{_forward.4} parent=47 // loop_exit
                _
            $region48: #{_forward.4} parent=39 // pred_fallthru
              _
          $region40: #{_forward.4} parent=35 // pred_fallthru
            _
          %457 = vnop
        $region36: #{_forward.4} parent=31 // pred_fallthru
          _
        // Predicated region
        $region74: #{_forward.4} parent=31 // pred_check
          %p458 = pneg %p85
        $region75: #{_forward.4} parent=31 // pred_check_branch
          %460 = sbr.rel (%p458) target = $region77
        $region76: #{_forward.4} parent=31 // pred_region
          %s461 = sand.u32 %s75, 1
          %s462 = sand.u32 %s75, 1
          %s463 = smul.addr %s462, 64
          %s464 = scalar_lea.vmem [#allocation3], %s463
          %s465 = ssub.s32 %s25, 1
          %p466 = scmp.gt.s32.totalorder %s465, 0
          %s467 = scalar_select %p466, %s465, 0
          %s468 = smul.addr %s24, 48
          %s469 = sadd.s32 %s467, %s468
          %s470 = smul.addr %s469, 4
          %s471 = scalar_lea.vmem %s1, %s470
          // Predicated region
          $region78: #{_forward.4} parent=76 // pred_check
            _
          $region79: #{_forward.4} parent=76 // pred_check_branch
            %473 = sbr.rel (0) target = $region81
          $region80: #{_forward.4} parent=76 // pred_region
            // Predicated region
            $region82: #{_forward.4} parent=80 // pred_check
              _
            $region83: #{_forward.4} parent=80 // pred_check_branch
              %475 = sbr.rel target = $region85
            $region84: #{_forward.4} parent=80 // pred_region
              // Predicated region
              $region97: #{_forward.4} parent=84 // pred_check
                _
              $region98: #{_forward.4} parent=84 // pred_check_branch
                %521 = sbr.rel (0) target = $region100
              $region99: #{_forward.4} parent=84 // pred_region
                loop: start=0, step=1, limit=1
                $region101: #{_forward.4} parent=99 // loop_pre_header
                  _
                $region102: #{_forward.4} parent=99 // loop_header
                  %s523 = sphi 0, %s527
                  %p524 = scmp.ge.s32.totalorder %s523, 1
                  %s528 = sphi %s471, %s471
                  %s529 = sphi %s464, %s464
                $region103: #{_forward.4} parent=99 // loop_header_branch
                  %526 = sbr.rel (%p524) target = $region107
                $region104: #{_forward.4} parent=99 // loop_body
                  _
                $region105: #{_forward.4} parent=99 // loop_footer
                  %s527 = sadd.s32 1, %s523
                $region106: #{_forward.4} parent=99 // loop_footer_branch
                  %522 = sbr.rel target = $region102
                $region107: #{_forward.4} parent=99 // loop_exit
                  _
                %s531 = ssub.s32 16, 1
                loop: start=0, step=1, limit=1
                $region108: #{_forward.4} parent=99 // loop_pre_header
                  _
                $region109: #{_forward.4} parent=99 // loop_header
                  %s533 = sphi 0, %s537
                  %p534 = scmp.ge.s32.totalorder %s533, 1
                  %s538 = sphi %s471, %s471
                  %s539 = sphi %s464, %s464
                $region110: #{_forward.4} parent=99 // loop_header_branch
                  %536 = sbr.rel (%p534) target = $region114
                $region111: #{_forward.4} parent=99 // loop_body
                  %v540 = vld [vmem:[%s538] sm:%s531]
                  %541 = vst [vmem:[%s539] sm:%s531] %v540
                  %v542 = vld [vmem:[%s538 + $0xc] sm:%s531]
                  %543 = vst [vmem:[%s539 + $0x4] sm:%s531] %v542
                  %v544 = vld [vmem:[%s538 + $0x18] sm:%s531]
                  %545 = vst [vmem:[%s539 + $0x8] sm:%s531] %v544
                  %v546 = vld [vmem:[%s538 + $0x24] sm:%s531]
                  %547 = vst [vmem:[%s539 + $0xc] sm:%s531] %v546
                  %v548 = vld [vmem:[%s538 + $0x30] sm:%s531]
                  %549 = vst [vmem:[%s539 + $0x10] sm:%s531] %v548
                  %v550 = vld [vmem:[%s538 + $0x3c] sm:%s531]
                  %551 = vst [vmem:[%s539 + $0x14] sm:%s531] %v550
                  %v552 = vld [vmem:[%s538 + $0x48] sm:%s531]
                  %553 = vst [vmem:[%s539 + $0x18] sm:%s531] %v552
                  %v554 = vld [vmem:[%s538 + $0x54] sm:%s531]
                  %555 = vst [vmem:[%s539 + $0x1c] sm:%s531] %v554
                  %v556 = vld [vmem:[%s538 + $0x60] sm:%s531]
                  %557 = vst [vmem:[%s539 + $0x20] sm:%s531] %v556
                  %v558 = vld [vmem:[%s538 + $0x6c] sm:%s531]
                  %559 = vst [vmem:[%s539 + $0x24] sm:%s531] %v558
                  %v560 = vld [vmem:[%s538 + $0x78] sm:%s531]
                  %561 = vst [vmem:[%s539 + $0x28] sm:%s531] %v560
                  %v562 = vld [vmem:[%s538 + $0x84] sm:%s531]
                  %563 = vst [vmem:[%s539 + $0x2c] sm:%s531] %v562
                  %v564 = vld [vmem:[%s538 + $0x90] sm:%s531]
                  %565 = vst [vmem:[%s539 + $0x30] sm:%s531] %v564
                  %v566 = vld [vmem:[%s538 + $0x9c] sm:%s531]
                  %567 = vst [vmem:[%s539 + $0x34] sm:%s531] %v566
                  %v568 = vld [vmem:[%s538 + $0xa8] sm:%s531]
                  %569 = vst [vmem:[%s539 + $0x38] sm:%s531] %v568
                  %v570 = vld [vmem:[%s538 + $0xb4] sm:%s531]
                  %571 = vst [vmem:[%s539 + $0x3c] sm:%s531] %v570
                $region112: #{_forward.4} parent=99 // loop_footer
                  %s537 = sadd.s32 1, %s533
                $region113: #{_forward.4} parent=99 // loop_footer_branch
                  %532 = sbr.rel target = $region109
                $region114: #{_forward.4} parent=99 // loop_exit
                  _
              $region100: #{_forward.4} parent=84 // pred_fallthru
                _
            $region85: #{_forward.4} parent=80 // pred_fallthru
              _
            // Predicated region
            $region86: #{_forward.4} parent=80 // pred_check
              _
            $region87: #{_forward.4} parent=80 // pred_check_branch
              %477 = sbr.rel (0) target = $region89
            $region88: #{_forward.4} parent=80 // pred_region
              %s479 = ssub.s32 16, 1
              loop: start=0, step=1, limit=1
              $region90: #{_forward.4} parent=88 // loop_pre_header
                _
              $region91: #{_forward.4} parent=88 // loop_header
                %s481 = sphi 0, %s485
                %p482 = scmp.ge.s32.totalorder %s481, 1
                %s486 = sphi %s471, %s471
                %s487 = sphi %s464, %s464
              $region92: #{_forward.4} parent=88 // loop_header_branch
                %484 = sbr.rel (%p482) target = $region96
              $region93: #{_forward.4} parent=88 // loop_body
                %v488 = vld [vmem:[%s486] sm:%s479]
                %489 = vst [vmem:[%s487] sm:%s479] %v488
                %v490 = vld [vmem:[%s486 + $0xc] sm:%s479]
                %491 = vst [vmem:[%s487 + $0x4] sm:%s479] %v490
                %v492 = vld [vmem:[%s486 + $0x18] sm:%s479]
                %493 = vst [vmem:[%s487 + $0x8] sm:%s479] %v492
                %v494 = vld [vmem:[%s486 + $0x24] sm:%s479]
                %495 = vst [vmem:[%s487 + $0xc] sm:%s479] %v494
                %v496 = vld [vmem:[%s486 + $0x30] sm:%s479]
                %497 = vst [vmem:[%s487 + $0x10] sm:%s479] %v496
                %v498 = vld [vmem:[%s486 + $0x3c] sm:%s479]
                %499 = vst [vmem:[%s487 + $0x14] sm:%s479] %v498
                %v500 = vld [vmem:[%s486 + $0x48] sm:%s479]
                %501 = vst [vmem:[%s487 + $0x18] sm:%s479] %v500
                %v502 = vld [vmem:[%s486 + $0x54] sm:%s479]
                %503 = vst [vmem:[%s487 + $0x1c] sm:%s479] %v502
                %v504 = vld [vmem:[%s486 + $0x60] sm:%s479]
                %505 = vst [vmem:[%s487 + $0x20] sm:%s479] %v504
                %v506 = vld [vmem:[%s486 + $0x6c] sm:%s479]
                %507 = vst [vmem:[%s487 + $0x24] sm:%s479] %v506
                %v508 = vld [vmem:[%s486 + $0x78] sm:%s479]
                %509 = vst [vmem:[%s487 + $0x28] sm:%s479] %v508
                %v510 = vld [vmem:[%s486 + $0x84] sm:%s479]
                %511 = vst [vmem:[%s487 + $0x2c] sm:%s479] %v510
                %v512 = vld [vmem:[%s486 + $0x90] sm:%s479]
                %513 = vst [vmem:[%s487 + $0x30] sm:%s479] %v512
                %v514 = vld [vmem:[%s486 + $0x9c] sm:%s479]
                %515 = vst [vmem:[%s487 + $0x34] sm:%s479] %v514
                %v516 = vld [vmem:[%s486 + $0xa8] sm:%s479]
                %517 = vst [vmem:[%s487 + $0x38] sm:%s479] %v516
                %v518 = vld [vmem:[%s486 + $0xb4] sm:%s479]
                %519 = vst [vmem:[%s487 + $0x3c] sm:%s479] %v518
              $region94: #{_forward.4} parent=88 // loop_footer
                %s485 = sadd.s32 1, %s481
              $region95: #{_forward.4} parent=88 // loop_footer_branch
                %480 = sbr.rel target = $region91
              $region96: #{_forward.4} parent=88 // loop_exit
                _
            $region89: #{_forward.4} parent=80 // pred_fallthru
              _
          $region81: #{_forward.4} parent=76 // pred_fallthru
            _
          %572 = vnop
        $region77: #{_forward.4} parent=31 // pred_fallthru
          _
        // Predicated region
        $region115: #{_forward.4} parent=31 // pred_check
          %p573 = pneg %p119
        $region116: #{_forward.4} parent=31 // pred_check_branch
          %575 = sbr.rel (%p573) target = $region118
        $region117: #{_forward.4} parent=31 // pred_region
          %s576 = sand.u32 %s109, 1
          %s577 = sand.u32 %s109, 1
          %s578 = smul.addr %s577, 64
          %s579 = scalar_lea.vmem [#allocation4], %s578
          %s580 = sadd.s32 %s25, 1
          %p581 = scmp.lt.s32.totalorder %s580, 2
          %s582 = scalar_select %p581, %s580, 2
          %s583 = smul.addr %s24, 48
          %s584 = sadd.s32 %s582, %s583
          %s585 = smul.addr %s584, 4
          %s586 = scalar_lea.vmem %s2, %s585
          // Predicated region
          $region119: #{_forward.4} parent=117 // pred_check
            _
          $region120: #{_forward.4} parent=117 // pred_check_branch
            %588 = sbr.rel (0) target = $region122
          $region121: #{_forward.4} parent=117 // pred_region
            // Predicated region
            $region123: #{_forward.4} parent=121 // pred_check
              _
            $region124: #{_forward.4} parent=121 // pred_check_branch
              %590 = sbr.rel target = $region126
            $region125: #{_forward.4} parent=121 // pred_region
              // Predicated region
              $region138: #{_forward.4} parent=125 // pred_check
                _
              $region139: #{_forward.4} parent=125 // pred_check_branch
                %636 = sbr.rel (0) target = $region141
              $region140: #{_forward.4} parent=125 // pred_region
                loop: start=0, step=1, limit=1
                $region142: #{_forward.4} parent=140 // loop_pre_header
                  _
                $region143: #{_forward.4} parent=140 // loop_header
                  %s638 = sphi 0, %s642
                  %p639 = scmp.ge.s32.totalorder %s638, 1
                  %s643 = sphi %s586, %s586
                  %s644 = sphi %s579, %s579
                $region144: #{_forward.4} parent=140 // loop_header_branch
                  %641 = sbr.rel (%p639) target = $region148
                $region145: #{_forward.4} parent=140 // loop_body
                  _
                $region146: #{_forward.4} parent=140 // loop_footer
                  %s642 = sadd.s32 1, %s638
                $region147: #{_forward.4} parent=140 // loop_footer_branch
                  %637 = sbr.rel target = $region143
                $region148: #{_forward.4} parent=140 // loop_exit
                  _
                %s646 = ssub.s32 16, 1
                loop: start=0, step=1, limit=1
                $region149: #{_forward.4} parent=140 // loop_pre_header
                  _
                $region150: #{_forward.4} parent=140 // loop_header
                  %s648 = sphi 0, %s652
                  %p649 = scmp.ge.s32.totalorder %s648, 1
                  %s653 = sphi %s586, %s586
                  %s654 = sphi %s579, %s579
                $region151: #{_forward.4} parent=140 // loop_header_branch
                  %651 = sbr.rel (%p649) target = $region155
                $region152: #{_forward.4} parent=140 // loop_body
                  %v655 = vld [vmem:[%s653] sm:%s646]
                  %656 = vst [vmem:[%s654] sm:%s646] %v655
                  %v657 = vld [vmem:[%s653 + $0xc] sm:%s646]
                  %658 = vst [vmem:[%s654 + $0x4] sm:%s646] %v657
                  %v659 = vld [vmem:[%s653 + $0x18] sm:%s646]
                  %660 = vst [vmem:[%s654 + $0x8] sm:%s646] %v659
                  %v661 = vld [vmem:[%s653 + $0x24] sm:%s646]
                  %662 = vst [vmem:[%s654 + $0xc] sm:%s646] %v661
                  %v663 = vld [vmem:[%s653 + $0x30] sm:%s646]
                  %664 = vst [vmem:[%s654 + $0x10] sm:%s646] %v663
                  %v665 = vld [vmem:[%s653 + $0x3c] sm:%s646]
                  %666 = vst [vmem:[%s654 + $0x14] sm:%s646] %v665
                  %v667 = vld [vmem:[%s653 + $0x48] sm:%s646]
                  %668 = vst [vmem:[%s654 + $0x18] sm:%s646] %v667
                  %v669 = vld [vmem:[%s653 + $0x54] sm:%s646]
                  %670 = vst [vmem:[%s654 + $0x1c] sm:%s646] %v669
                  %v671 = vld [vmem:[%s653 + $0x60] sm:%s646]
                  %672 = vst [vmem:[%s654 + $0x20] sm:%s646] %v671
                  %v673 = vld [vmem:[%s653 + $0x6c] sm:%s646]
                  %674 = vst [vmem:[%s654 + $0x24] sm:%s646] %v673
                  %v675 = vld [vmem:[%s653 + $0x78] sm:%s646]
                  %676 = vst [vmem:[%s654 + $0x28] sm:%s646] %v675
                  %v677 = vld [vmem:[%s653 + $0x84] sm:%s646]
                  %678 = vst [vmem:[%s654 + $0x2c] sm:%s646] %v677
                  %v679 = vld [vmem:[%s653 + $0x90] sm:%s646]
                  %680 = vst [vmem:[%s654 + $0x30] sm:%s646] %v679
                  %v681 = vld [vmem:[%s653 + $0x9c] sm:%s646]
                  %682 = vst [vmem:[%s654 + $0x34] sm:%s646] %v681
                  %v683 = vld [vmem:[%s653 + $0xa8] sm:%s646]
                  %684 = vst [vmem:[%s654 + $0x38] sm:%s646] %v683
                  %v685 = vld [vmem:[%s653 + $0xb4] sm:%s646]
                  %686 = vst [vmem:[%s654 + $0x3c] sm:%s646] %v685
                $region153: #{_forward.4} parent=140 // loop_footer
                  %s652 = sadd.s32 1, %s648
                $region154: #{_forward.4} parent=140 // loop_footer_branch
                  %647 = sbr.rel target = $region150
                $region155: #{_forward.4} parent=140 // loop_exit
                  _
              $region141: #{_forward.4} parent=125 // pred_fallthru
                _
            $region126: #{_forward.4} parent=121 // pred_fallthru
              _
            // Predicated region
            $region127: #{_forward.4} parent=121 // pred_check
              _
            $region128: #{_forward.4} parent=121 // pred_check_branch
              %592 = sbr.rel (0) target = $region130
            $region129: #{_forward.4} parent=121 // pred_region
              %s594 = ssub.s32 16, 1
              loop: start=0, step=1, limit=1
              $region131: #{_forward.4} parent=129 // loop_pre_header
                _
              $region132: #{_forward.4} parent=129 // loop_header
                %s596 = sphi 0, %s600
                %p597 = scmp.ge.s32.totalorder %s596, 1
                %s601 = sphi %s586, %s586
                %s602 = sphi %s579, %s579
              $region133: #{_forward.4} parent=129 // loop_header_branch
                %599 = sbr.rel (%p597) target = $region137
              $region134: #{_forward.4} parent=129 // loop_body
                %v603 = vld [vmem:[%s601] sm:%s594]
                %604 = vst [vmem:[%s602] sm:%s594] %v603
                %v605 = vld [vmem:[%s601 + $0xc] sm:%s594]
                %606 = vst [vmem:[%s602 + $0x4] sm:%s594] %v605
                %v607 = vld [vmem:[%s601 + $0x18] sm:%s594]
                %608 = vst [vmem:[%s602 + $0x8] sm:%s594] %v607
                %v609 = vld [vmem:[%s601 + $0x24] sm:%s594]
                %610 = vst [vmem:[%s602 + $0xc] sm:%s594] %v609
                %v611 = vld [vmem:[%s601 + $0x30] sm:%s594]
                %612 = vst [vmem:[%s602 + $0x10] sm:%s594] %v611
                %v613 = vld [vmem:[%s601 + $0x3c] sm:%s594]
                %614 = vst [vmem:[%s602 + $0x14] sm:%s594] %v613
                %v615 = vld [vmem:[%s601 + $0x48] sm:%s594]
                %616 = vst [vmem:[%s602 + $0x18] sm:%s594] %v615
                %v617 = vld [vmem:[%s601 + $0x54] sm:%s594]
                %618 = vst [vmem:[%s602 + $0x1c] sm:%s594] %v617
                %v619 = vld [vmem:[%s601 + $0x60] sm:%s594]
                %620 = vst [vmem:[%s602 + $0x20] sm:%s594] %v619
                %v621 = vld [vmem:[%s601 + $0x6c] sm:%s594]
                %622 = vst [vmem:[%s602 + $0x24] sm:%s594] %v621
                %v623 = vld [vmem:[%s601 + $0x78] sm:%s594]
                %624 = vst [vmem:[%s602 + $0x28] sm:%s594] %v623
                %v625 = vld [vmem:[%s601 + $0x84] sm:%s594]
                %626 = vst [vmem:[%s602 + $0x2c] sm:%s594] %v625
                %v627 = vld [vmem:[%s601 + $0x90] sm:%s594]
                %628 = vst [vmem:[%s602 + $0x30] sm:%s594] %v627
                %v629 = vld [vmem:[%s601 + $0x9c] sm:%s594]
                %630 = vst [vmem:[%s602 + $0x34] sm:%s594] %v629
                %v631 = vld [vmem:[%s601 + $0xa8] sm:%s594]
                %632 = vst [vmem:[%s602 + $0x38] sm:%s594] %v631
                %v633 = vld [vmem:[%s601 + $0xb4] sm:%s594]
                %634 = vst [vmem:[%s602 + $0x3c] sm:%s594] %v633
              $region135: #{_forward.4} parent=129 // loop_footer
                %s600 = sadd.s32 1, %s596
              $region136: #{_forward.4} parent=129 // loop_footer_branch
                %595 = sbr.rel target = $region132
              $region137: #{_forward.4} parent=129 // loop_exit
                _
            $region130: #{_forward.4} parent=121 // pred_fallthru
              _
          $region122: #{_forward.4} parent=117 // pred_fallthru
            _
          %687 = vnop
        $region118: #{_forward.4} parent=31 // pred_fallthru
          _
        // Predicated region
        $region156: #{_forward.4} parent=31 // pred_check
          %p688 = pneg %p145
        $region157: #{_forward.4} parent=31 // pred_check_branch
          %690 = sbr.rel (%p688) target = $region159
        $region158: #{_forward.4} parent=31 // pred_region
          %p691 = scmp.lt.s32.totalorder %s24, 1
          %s692 = scalar_select %p691, %s24, 1
          %s693 = smul.addr %s692, 16
          %s694 = smul.addr %s693, 8
          %s695 = scalar_lea.vmem %s3, %s694
        $region159: #{_forward.4} parent=31 // pred_fallthru
          _
        // Predicated region
        $region160: #{_forward.4} parent=31 // pred_check
          %p696 = pneg %p171
        $region161: #{_forward.4} parent=31 // pred_check_branch
          %698 = sbr.rel (%p696) target = $region163
        $region162: #{_forward.4} parent=31 // pred_region
          %p699 = scmp.lt.s32.totalorder %s24, 1
          %s700 = scalar_select %p699, %s24, 1
          %s701 = smul.addr %s700, 16
          %s702 = smul.addr %s701, 8
          %s703 = scalar_lea.vmem %s4, %s702
        $region163: #{_forward.4} parent=31 // pred_fallthru
          _
      $region32: #{_forward.4} parent=5 // pred_fallthru
        _
      %p704 = scmp.le.s32.totalorder 1, %s17
      %p705 = scmp.lt.s32.totalorder %s17, 7
      %p706 = pnand %p704, %p705
      %p707 = pneg %p706
      // Predicated region
      $region164: #{_forward.4} parent=5 // pred_check
        _
      $region165: #{_forward.4} parent=5 // pred_check_branch
        %709 = sbr.rel (%p706) target = $region167
      $region166: #{_forward.4} parent=5 // pred_region
        %s710 = ssub.s32 %s17, 1
        %s711 = sand.u32 %s44, 1
        %s712 = sand.u32 %s44, 1
        %s713 = smul.addr %s712, 64
        %s714 = scalar_lea.vmem [#allocation2], %s713
        // Predicated region
        $region168: #{_forward.4} parent=166 // pred_check
          %p715 = pneg %p57
        $region169: #{_forward.4} parent=166 // pred_check_branch
          %717 = sbr.rel (%p715) target = $region171
        $region170: #{_forward.4} parent=166 // pred_region
          _
        $region171: #{_forward.4} parent=166 // pred_fallthru
          _
        %s718 = sand.u32 %s78, 1
        %s719 = sand.u32 %s78, 1
        %s720 = smul.addr %s719, 64
        %s721 = scalar_lea.vmem [#allocation3], %s720
        // Predicated region
        $region172: #{_forward.4} parent=166 // pred_check
          %p722 = pneg %p91
        $region173: #{_forward.4} parent=166 // pred_check_branch
          %724 = sbr.rel (%p722) target = $region175
        $region174: #{_forward.4} parent=166 // pred_region
          _
        $region175: #{_forward.4} parent=166 // pred_fallthru
          _
        %s725 = sand.u32 %s112, 1
        %s726 = sand.u32 %s112, 1
        %s727 = smul.addr %s726, 64
        %s728 = scalar_lea.vmem [#allocation4], %s727
        // Predicated region
        $region176: #{_forward.4} parent=166 // pred_check
          %p729 = pneg %p125
        $region177: #{_forward.4} parent=166 // pred_check_branch
          %731 = sbr.rel (%p729) target = $region179
        $region178: #{_forward.4} parent=166 // pred_region
          _
        $region179: #{_forward.4} parent=166 // pred_fallthru
          _
        %s732 = sand.u32 %s44, 1
        %s733 = sand.u32 %s44, 1
        %s734 = smul.addr %s733, 64
        %s735 = scalar_lea.vmem [#allocation2], %s734
        %p736 = pneg %p57
        %p737 = pneg %p54
        %s738 = sand.u32 %s78, 1
        %s739 = sand.u32 %s78, 1
        %s740 = smul.addr %s739, 64
        %s741 = scalar_lea.vmem [#allocation3], %s740
        %p742 = pneg %p91
        %p743 = pneg %p88
        %s744 = sand.u32 %s112, 1
        %s745 = sand.u32 %s112, 1
        %s746 = smul.addr %s745, 64
        %s747 = scalar_lea.vmem [#allocation4], %s746
        %p748 = pneg %p125
        %p749 = pneg %p122
        %p750 = scmp.lt.s32.totalorder %s26, 1
        %s751 = scalar_select %p750, %s26, 1
        %s752 = smul.addr %s751, 16
        %s753 = smul.addr %s752, 8
        %s754 = scalar_lea.vmem %s3, %s753
        %p755 = pneg %p151
        %p756 = pneg %p148
        %p757 = scmp.lt.s32.totalorder %s26, 1
        %s758 = scalar_select %p757, %s26, 1
        %s759 = smul.addr %s758, 16
        %s760 = smul.addr %s759, 8
        %s761 = scalar_lea.vmem %s4, %s760
        %p762 = pneg %p177
        %p763 = pneg %p174
        %p764 = pneg %p198
        %p765 = pneg %p195
        %p766 = pneg %p219
        %p767 = pneg %p216
        %p768 = pneg %p240
        %p769 = pneg %p237
        %p770 = pneg %p261
        %p771 = pneg %p258
        %p772 = pneg %p289
        %p773 = pneg %p286
        %s774 = sand.u32 %s276, 1
        %s775 = sand.u32 %s276, 1
        %s776 = smul.addr %s775, 128
        %s777 = scalar_lea.vmem [#allocation5], %s776
        %p778 = pneg %p315
        %p779 = pneg %p312
        %p780 = scmp.lt.s32.totalorder %s26, 1
        %s781 = scalar_select %p780, %s26, 1
        %s782 = smul.addr %s781, 2
        %s783 = scalar_lea.vmem %s10, %s782
        %s784 = ssub.s32 %s27, 1
        %p785 = scmp.gt.s32.totalorder %s784, 0
        %s786 = scalar_select %p785, %s784, 0
        %s787 = sadd.s32 %s27, 1
        %p788 = scmp.lt.s32.totalorder %s787, 2
        %s789 = scalar_select %p788, %s787, 2
        %p790 = scmp.lt.s32.totalorder %s26, 1
        %s791 = scalar_select %p790, %s26, 1
        %s792 = smul.addr %s791, 16
        %s793 = smul.addr %s792, 8
        %s794 = scalar_lea.vmem %s3, %s793
        %p795 = scmp.lt.s32.totalorder %s26, 1
        %s796 = scalar_select %p795, %s26, 1
        %s797 = smul.addr %s796, 16
        %s798 = smul.addr %s797, 8
        %s799 = scalar_lea.vmem %s4, %s798
        %p800 = scmp.lt.s32.totalorder %s26, 1
        %s801 = scalar_select %p800, %s26, 1
        %s802 = smul.addr %s801, 2
        %s803 = scalar_lea.vmem %s10, %s802
        %v805 = vld [vmem:[%s794] sm:$0xff]
        %v806 = vld [vmem:[%s794 + $0x8] sm:$0xff]
        %v807 = vld [vmem:[%s794 + $0x10] sm:$0xff]
        %v808 = vld [vmem:[%s794 + $0x18] sm:$0xff]
        %v809 = vld [vmem:[%s794 + $0x20] sm:$0xff]
        %v810 = vld [vmem:[%s794 + $0x28] sm:$0xff]
        %v811 = vld [vmem:[%s794 + $0x30] sm:$0xff]
        %v812 = vld [vmem:[%s794 + $0x38] sm:$0xff]
        %v813 = vld [vmem:[%s794 + $0x40] sm:$0xff]
        %v814 = vld [vmem:[%s794 + $0x48] sm:$0xff]
        %v815 = vld [vmem:[%s794 + $0x50] sm:$0xff]
        %v816 = vld [vmem:[%s794 + $0x58] sm:$0xff]
        %v817 = vld [vmem:[%s794 + $0x60] sm:$0xff]
        %v818 = vld [vmem:[%s794 + $0x68] sm:$0xff]
        %v819 = vld [vmem:[%s794 + $0x70] sm:$0xff]
        %v820 = vld [vmem:[%s794 + $0x78] sm:$0xff]
        %v821 = vld [vmem:[%s799] sm:$0xff]
        %v822 = vld [vmem:[%s799 + $0x8] sm:$0xff]
        %v823 = vld [vmem:[%s799 + $0x10] sm:$0xff]
        %v824 = vld [vmem:[%s799 + $0x18] sm:$0xff]
        %v825 = vld [vmem:[%s799 + $0x20] sm:$0xff]
        %v826 = vld [vmem:[%s799 + $0x28] sm:$0xff]
        %v827 = vld [vmem:[%s799 + $0x30] sm:$0xff]
        %v828 = vld [vmem:[%s799 + $0x38] sm:$0xff]
        %v829 = vld [vmem:[%s799 + $0x40] sm:$0xff]
        %v830 = vld [vmem:[%s799 + $0x48] sm:$0xff]
        %v831 = vld [vmem:[%s799 + $0x50] sm:$0xff]
        %v832 = vld [vmem:[%s799 + $0x58] sm:$0xff]
        %v833 = vld [vmem:[%s799 + $0x60] sm:$0xff]
        %v834 = vld [vmem:[%s799 + $0x68] sm:$0xff]
        %v835 = vld [vmem:[%s799 + $0x70] sm:$0xff]
        %v836 = vld [vmem:[%s799 + $0x78] sm:$0xff]
        %v837 = vld [vmem:[%s5] sm:$0xf]
        %v838 = vld [vmem:[%s5 + $0x4] sm:$0xf]
        %v839 = vld [vmem:[%s5 + $0x8] sm:$0xf]
        %v840 = vld [vmem:[%s5 + $0xc] sm:$0xf]
        %v841 = vld [vmem:[%s5 + $0x10] sm:$0xf]
        %v842 = vld [vmem:[%s5 + $0x14] sm:$0xf]
        %v843 = vld [vmem:[%s5 + $0x18] sm:$0xf]
        %v844 = vld [vmem:[%s5 + $0x1c] sm:$0xf]
        %v845 = vld [vmem:[%s5 + $0x20] sm:$0xf]
        %v846 = vld [vmem:[%s5 + $0x24] sm:$0xf]
        %v847 = vld [vmem:[%s5 + $0x28] sm:$0xf]
        %v848 = vld [vmem:[%s5 + $0x2c] sm:$0xf]
        %v849 = vld [vmem:[%s5 + $0x30] sm:$0xf]
        %v850 = vld [vmem:[%s5 + $0x34] sm:$0xf]
        %v851 = vld [vmem:[%s5 + $0x38] sm:$0xf]
        %v852 = vld [vmem:[%s5 + $0x3c] sm:$0xf]
        %v853 = vlaneseq
        %v854 = vand.u32 %v853, 127
        %s855 = smul.u32 %s27, 128
        %v856 = vstv %s855
        %v857 = vadd.s32 %v854, %v856
        %vm858 = vcmp.lt.s32.totalorder %v857, 300
        %v859 = vld [vmem:[%s714] sm:$0xf]
        %v860 = vld [vmem:[%s714 + $0x4] sm:$0xf]
        %v861 = vld [vmem:[%s714 + $0x8] sm:$0xf]
        %v862 = vld [vmem:[%s714 + $0xc] sm:$0xf]
        %v863 = vld [vmem:[%s714 + $0x10] sm:$0xf]
        %v864 = vld [vmem:[%s714 + $0x14] sm:$0xf]
        %v865 = vld [vmem:[%s714 + $0x18] sm:$0xf]
        %v866 = vld [vmem:[%s714 + $0x1c] sm:$0xf]
        %v867 = vld [vmem:[%s714 + $0x20] sm:$0xf]
        %v868 = vld [vmem:[%s714 + $0x24] sm:$0xf]
        %v869 = vld [vmem:[%s714 + $0x28] sm:$0xf]
        %v870 = vld [vmem:[%s714 + $0x2c] sm:$0xf]
        %v871 = vld [vmem:[%s714 + $0x30] sm:$0xf]
        %v872 = vld [vmem:[%s714 + $0x34] sm:$0xf]
        %v873 = vld [vmem:[%s714 + $0x38] sm:$0xf]
        %v874 = vld [vmem:[%s714 + $0x3c] sm:$0xf]
        %v891 = vunpack.c.l.b16 %v837
        %v892 = vunpack.c.l.b16 %v838
        %v893 = vunpack.c.l.b16 %v839
        %v894 = vunpack.c.l.b16 %v840
        %v895 = vunpack.c.l.b16 %v841
        %v896 = vunpack.c.l.b16 %v842
        %v897 = vunpack.c.l.b16 %v843
        %v898 = vunpack.c.l.b16 %v844
        %v899 = vunpack.c.l.b16 %v845
        %v900 = vunpack.c.l.b16 %v846
        %v901 = vunpack.c.l.b16 %v847
        %v902 = vunpack.c.l.b16 %v848
        %v903 = vunpack.c.l.b16 %v849
        %v904 = vunpack.c.l.b16 %v850
        %v905 = vunpack.c.l.b16 %v851
        %v906 = vunpack.c.l.b16 %v852
        %v907 = vpack.c.b16 %v892, %v891
        %v908 = vpack.c.b16 %v894, %v893
        %v909 = vpack.c.b16 %v896, %v895
        %v910 = vpack.c.b16 %v898, %v897
        %v911 = vpack.c.b16 %v900, %v899
        %v912 = vpack.c.b16 %v902, %v901
        %v913 = vpack.c.b16 %v904, %v903
        %v914 = vpack.c.b16 %v906, %v905
        %v939 = vunpack.c.l.b16 %v859
        %v940 = vunpack.c.l.b16 %v860
        %v941 = vunpack.c.l.b16 %v861
        %v942 = vunpack.c.l.b16 %v862
        %v943 = vunpack.c.l.b16 %v863
        %v944 = vunpack.c.l.b16 %v864
        %v945 = vunpack.c.l.b16 %v865
        %v946 = vunpack.c.l.b16 %v866
        %v947 = vunpack.c.l.b16 %v867
        %v948 = vunpack.c.l.b16 %v868
        %v949 = vunpack.c.l.b16 %v869
        %v950 = vunpack.c.l.b16 %v870
        %v951 = vunpack.c.l.b16 %v871
        %v952 = vunpack.c.l.b16 %v872
        %v953 = vunpack.c.l.b16 %v873
        %v954 = vunpack.c.l.b16 %v874
        %v955 = vpack.c.b16 %v940, %v939
        %v956 = vpack.c.b16 %v942, %v941
        %v957 = vpack.c.b16 %v944, %v943
        %v958 = vpack.c.b16 %v946, %v945
        %v959 = vpack.c.b16 %v948, %v947
        %v960 = vpack.c.b16 %v950, %v949
        %v961 = vpack.c.b16 %v952, %v951
        %v962 = vpack.c.b16 %v954, %v953
        %971 = vmatprep.subr.bf16.mxu0 0
        %972 = vmatpush1.bf16.msra.mxu0 %v962
        %973 = vmatprep.subr.bf16.mxu0 0
        %974 = vmatpush1.bf16.msra.mxu0 %v961
        %975 = vmatprep.subr.bf16.mxu0 0
        %976 = vmatpush1.bf16.msra.mxu0 %v960
        %977 = vmatprep.subr.bf16.mxu0 0
        %978 = vmatpush1.bf16.msra.mxu0 %v959
        %979 = vmatprep.subr.bf16.mxu0 0
        %980 = vmatpush1.bf16.msra.mxu0 %v958
        %981 = vmatprep.subr.bf16.mxu0 0
        %982 = vmatpush1.bf16.msra.mxu0 %v957
        %983 = vmatprep.subr.bf16.mxu0 0
        %984 = vmatpush1.bf16.msra.mxu0 %v956
        %985 = vmatprep.subr.bf16.mxu0 0
        %986 = vmatpush1.bf16.msra.mxu0 %v955
        %987 = vmatprep.subr.bf16.mxu0 0
        %988 = vmatpush2.bf16.msra.mxu0 0
        %989 = vmatprep.subr.bf16.mxu0 0
        %990 = vmatpush2.bf16.msra.mxu0 0
        %991 = vmatprep.subr.bf16.mxu0 0
        %992 = vmatpush2.bf16.msra.mxu0 0
        %993 = vmatprep.subr.bf16.mxu0 0
        %994 = vmatpush2.bf16.msra.mxu0 0
        %995 = vmatprep.subr.bf16.mxu0 0
        %996 = vmatpush2.bf16.msra.mxu0 0
        %997 = vmatprep.subr.bf16.mxu0 0
        %998 = vmatpush2.bf16.msra.mxu0 0
        %999 = vmatprep.subr.bf16.mxu0 0
        %1000 = vmatpush2.bf16.msra.mxu0 0
        %1001 = vmatprep.subr.bf16.mxu0 0
        %1002 = vmatpush2.bf16.msra.mxu0 0
        %1003 = vmatprep.mubr.bf16.mxu0 0
        %1004 = vmatmul.mubr.bf16.gmra.mxu0 %v907
        %v1005 = vpop.f32.mrf.mxu0
        %v1006 = vadd.f32 0.0, %v1005
        %v1007 = vpop.f32.mrf.mxu0
        %v1008 = vpop.f32.mrf.mxu0
        %v1009 = vadd.f32 0.0, %v1008
        %v1010 = vpop.f32.mrf.mxu0
        %1011 = vmatprep.mubr.bf16.mxu0 0
        %1012 = vmatmul.mubr.bf16.gmra.mxu0 %v908
        %v1013 = vpop.f32.mrf.mxu0
        %v1014 = vadd.f32 0.0, %v1013
        %v1015 = vpop.f32.mrf.mxu0
        %v1016 = vpop.f32.mrf.mxu0
        %v1017 = vadd.f32 0.0, %v1016
        %v1018 = vpop.f32.mrf.mxu0
        %1019 = vmatprep.mubr.bf16.mxu0 0
        %1020 = vmatmul.mubr.bf16.gmra.mxu0 %v909
        %v1021 = vpop.f32.mrf.mxu0
        %v1022 = vadd.f32 0.0, %v1021
        %v1023 = vpop.f32.mrf.mxu0
        %v1024 = vpop.f32.mrf.mxu0
        %v1025 = vadd.f32 0.0, %v1024
        %v1026 = vpop.f32.mrf.mxu0
        %1027 = vmatprep.mubr.bf16.mxu0 0
        %1028 = vmatmul.mubr.bf16.gmra.mxu0 %v910
        %v1029 = vpop.f32.mrf.mxu0
        %v1030 = vadd.f32 0.0, %v1029
        %v1031 = vpop.f32.mrf.mxu0
        %v1032 = vpop.f32.mrf.mxu0
        %v1033 = vadd.f32 0.0, %v1032
        %v1034 = vpop.f32.mrf.mxu0
        %1035 = vmatprep.mubr.bf16.mxu0 0
        %1036 = vmatmul.mubr.bf16.gmra.mxu0 %v911
        %v1037 = vpop.f32.mrf.mxu0
        %v1038 = vadd.f32 0.0, %v1037
        %v1039 = vpop.f32.mrf.mxu0
        %v1040 = vpop.f32.mrf.mxu0
        %v1041 = vadd.f32 0.0, %v1040
        %v1042 = vpop.f32.mrf.mxu0
        %1043 = vmatprep.mubr.bf16.mxu0 0
        %1044 = vmatmul.mubr.bf16.gmra.mxu0 %v912
        %v1045 = vpop.f32.mrf.mxu0
        %v1046 = vadd.f32 0.0, %v1045
        %v1047 = vpop.f32.mrf.mxu0
        %v1048 = vpop.f32.mrf.mxu0
        %v1049 = vadd.f32 0.0, %v1048
        %v1050 = vpop.f32.mrf.mxu0
        %1051 = vmatprep.mubr.bf16.mxu0 0
        %1052 = vmatmul.mubr.bf16.gmra.mxu0 %v913
        %v1053 = vpop.f32.mrf.mxu0
        %v1054 = vadd.f32 0.0, %v1053
        %v1055 = vpop.f32.mrf.mxu0
        %v1056 = vpop.f32.mrf.mxu0
        %v1057 = vadd.f32 0.0, %v1056
        %v1058 = vpop.f32.mrf.mxu0
        %1059 = vmatprep.mubr.bf16.mxu0 0
        %1060 = vmatmul.mubr.bf16.gmra.mxu0 %v914
        %v1061 = vpop.f32.mrf.mxu0
        %v1062 = vadd.f32 0.0, %v1061
        %v1063 = vpop.f32.mrf.mxu0
        %v1064 = vpop.f32.mrf.mxu0
        %v1065 = vadd.f32 0.0, %v1064
        %v1066 = vpop.f32.mrf.mxu0
        %1067 = vdwg.mxu0
        %1069 = vset.pattern.permute.xlu0 0
        %1070 = vperm.xlu0 %1069, %v805
        %v1071 = vpop.permute.xlu0 %1070
        %1074 = vset.pattern.permute.xlu0 0
        %1075 = vperm.xlu0 %1074, %v806
        %v1076 = vpop.permute.xlu0 %1075
        %1079 = vset.pattern.permute.xlu0 0
        %1080 = vperm.xlu0 %1079, %v807
        %v1081 = vpop.permute.xlu0 %1080
        %1084 = vset.pattern.permute.xlu0 0
        %1085 = vperm.xlu0 %1084, %v808
        %v1086 = vpop.permute.xlu0 %1085
        %1089 = vset.pattern.permute.xlu0 0
        %1090 = vperm.xlu0 %1089, %v809
        %v1091 = vpop.permute.xlu0 %1090
        %1094 = vset.pattern.permute.xlu0 0
        %1095 = vperm.xlu0 %1094, %v810
        %v1096 = vpop.permute.xlu0 %1095
        %1099 = vset.pattern.permute.xlu0 0
        %1100 = vperm.xlu0 %1099, %v811
        %v1101 = vpop.permute.xlu0 %1100
        %1104 = vset.pattern.permute.xlu0 0
        %1105 = vperm.xlu0 %1104, %v812
        %v1106 = vpop.permute.xlu0 %1105
        %1109 = vset.pattern.permute.xlu0 0
        %1110 = vperm.xlu0 %1109, %v813
        %v1111 = vpop.permute.xlu0 %1110
        %1114 = vset.pattern.permute.xlu0 0
        %1115 = vperm.xlu0 %1114, %v814
        %v1116 = vpop.permute.xlu0 %1115
        %1119 = vset.pattern.permute.xlu0 0
        %1120 = vperm.xlu0 %1119, %v815
        %v1121 = vpop.permute.xlu0 %1120
        %1124 = vset.pattern.permute.xlu0 0
        %1125 = vperm.xlu0 %1124, %v816
        %v1126 = vpop.permute.xlu0 %1125
        %1129 = vset.pattern.permute.xlu0 0
        %1130 = vperm.xlu0 %1129, %v817
        %v1131 = vpop.permute.xlu0 %1130
        %1134 = vset.pattern.permute.xlu0 0
        %1135 = vperm.xlu0 %1134, %v818
        %v1136 = vpop.permute.xlu0 %1135
        %1139 = vset.pattern.permute.xlu0 0
        %1140 = vperm.xlu0 %1139, %v819
        %v1141 = vpop.permute.xlu0 %1140
        %1144 = vset.pattern.permute.xlu0 0
        %1145 = vperm.xlu0 %1144, %v820
        %v1146 = vpop.permute.xlu0 %1145
        %v1148 = vmul.f32 %v1006, %v1071
        %v1149 = vmul.f32 %v1009, %v1076
        %v1150 = vmul.f32 %v1014, %v1081
        %v1151 = vmul.f32 %v1017, %v1086
        %v1152 = vmul.f32 %v1022, %v1091
        %v1153 = vmul.f32 %v1025, %v1096
        %v1154 = vmul.f32 %v1030, %v1101
        %v1155 = vmul.f32 %v1033, %v1106
        %v1156 = vmul.f32 %v1038, %v1111
        %v1157 = vmul.f32 %v1041, %v1116
        %v1158 = vmul.f32 %v1046, %v1121
        %v1159 = vmul.f32 %v1049, %v1126
        %v1160 = vmul.f32 %v1054, %v1131
        %v1161 = vmul.f32 %v1057, %v1136
        %v1162 = vmul.f32 %v1062, %v1141
        %v1163 = vmul.f32 %v1065, %v1146
        %1165 = vset.pattern.permute.xlu0 0
        %1166 = vperm.xlu0 %1165, %v821
        %v1167 = vpop.permute.xlu0 %1166
        %1170 = vset.pattern.permute.xlu0 0
        %1171 = vperm.xlu0 %1170, %v822
        %v1172 = vpop.permute.xlu0 %1171
        %1175 = vset.pattern.permute.xlu0 0
        %1176 = vperm.xlu0 %1175, %v823
        %v1177 = vpop.permute.xlu0 %1176
        %1180 = vset.pattern.permute.xlu0 0
        %1181 = vperm.xlu0 %1180, %v824
        %v1182 = vpop.permute.xlu0 %1181
        %1185 = vset.pattern.permute.xlu0 0
        %1186 = vperm.xlu0 %1185, %v825
        %v1187 = vpop.permute.xlu0 %1186
        %1190 = vset.pattern.permute.xlu0 0
        %1191 = vperm.xlu0 %1190, %v826
        %v1192 = vpop.permute.xlu0 %1191
        %1195 = vset.pattern.permute.xlu0 0
        %1196 = vperm.xlu0 %1195, %v827
        %v1197 = vpop.permute.xlu0 %1196
        %1200 = vset.pattern.permute.xlu0 0
        %1201 = vperm.xlu0 %1200, %v828
        %v1202 = vpop.permute.xlu0 %1201
        %1205 = vset.pattern.permute.xlu0 0
        %1206 = vperm.xlu0 %1205, %v829
        %v1207 = vpop.permute.xlu0 %1206
        %1210 = vset.pattern.permute.xlu0 0
        %1211 = vperm.xlu0 %1210, %v830
        %v1212 = vpop.permute.xlu0 %1211
        %1215 = vset.pattern.permute.xlu0 0
        %1216 = vperm.xlu0 %1215, %v831
        %v1217 = vpop.permute.xlu0 %1216
        %1220 = vset.pattern.permute.xlu0 0
        %1221 = vperm.xlu0 %1220, %v832
        %v1222 = vpop.permute.xlu0 %1221
        %1225 = vset.pattern.permute.xlu0 0
        %1226 = vperm.xlu0 %1225, %v833
        %v1227 = vpop.permute.xlu0 %1226
        %1230 = vset.pattern.permute.xlu0 0
        %1231 = vperm.xlu0 %1230, %v834
        %v1232 = vpop.permute.xlu0 %1231
        %1235 = vset.pattern.permute.xlu0 0
        %1236 = vperm.xlu0 %1235, %v835
        %v1237 = vpop.permute.xlu0 %1236
        %1240 = vset.pattern.permute.xlu0 0
        %1241 = vperm.xlu0 %1240, %v836
        %v1242 = vpop.permute.xlu0 %1241
        %v1244 = vadd.f32 %v1148, %v1167
        %v1245 = vadd.f32 %v1149, %v1172
        %v1246 = vadd.f32 %v1150, %v1177
        %v1247 = vadd.f32 %v1151, %v1182
        %v1248 = vadd.f32 %v1152, %v1187
        %v1249 = vadd.f32 %v1153, %v1192
        %v1250 = vadd.f32 %v1154, %v1197
        %v1251 = vadd.f32 %v1155, %v1202
        %v1252 = vadd.f32 %v1156, %v1207
        %v1253 = vadd.f32 %v1157, %v1212
        %v1254 = vadd.f32 %v1158, %v1217
        %v1255 = vadd.f32 %v1159, %v1222
        %v1256 = vadd.f32 %v1160, %v1227
        %v1257 = vadd.f32 %v1161, %v1232
        %v1258 = vadd.f32 %v1162, %v1237
        %v1259 = vadd.f32 %v1163, %v1242
        %v1260 = vsel %vm858, %v1244, 0.0
        %v1261 = vsel %vm858, %v1245, 0.0
        %v1262 = vsel %vm858, %v1246, 0.0
        %v1263 = vsel %vm858, %v1247, 0.0
        %v1264 = vsel %vm858, %v1248, 0.0
        %v1265 = vsel %vm858, %v1249, 0.0
        %v1266 = vsel %vm858, %v1250, 0.0
        %v1267 = vsel %vm858, %v1251, 0.0
        %v1268 = vsel %vm858, %v1252, 0.0
        %v1269 = vsel %vm858, %v1253, 0.0
        %v1270 = vsel %vm858, %v1254, 0.0
        %v1271 = vsel %vm858, %v1255, 0.0
        %v1272 = vsel %vm858, %v1256, 0.0
        %v1273 = vsel %vm858, %v1257, 0.0
        %v1274 = vsel %vm858, %v1258, 0.0
        %v1275 = vsel %vm858, %v1259, 0.0
        %v1276 = vld [vmem:[%s721] sm:$0xf]
        %v1277 = vld [vmem:[%s721 + $0x4] sm:$0xf]
        %v1278 = vld [vmem:[%s721 + $0x8] sm:$0xf]
        %v1279 = vld [vmem:[%s721 + $0xc] sm:$0xf]
        %v1280 = vld [vmem:[%s721 + $0x10] sm:$0xf]
        %v1281 = vld [vmem:[%s721 + $0x14] sm:$0xf]
        %v1282 = vld [vmem:[%s721 + $0x18] sm:$0xf]
        %v1283 = vld [vmem:[%s721 + $0x1c] sm:$0xf]
        %v1284 = vld [vmem:[%s721 + $0x20] sm:$0xf]
        %v1285 = vld [vmem:[%s721 + $0x24] sm:$0xf]
        %v1286 = vld [vmem:[%s721 + $0x28] sm:$0xf]
        %v1287 = vld [vmem:[%s721 + $0x2c] sm:$0xf]
        %v1288 = vld [vmem:[%s721 + $0x30] sm:$0xf]
        %v1289 = vld [vmem:[%s721 + $0x34] sm:$0xf]
        %v1290 = vld [vmem:[%s721 + $0x38] sm:$0xf]
        %v1291 = vld [vmem:[%s721 + $0x3c] sm:$0xf]
        %v1308 = vunpack.c.l.b16 %v1276
        %v1309 = vunpack.c.l.b16 %v1277
        %v1310 = vunpack.c.l.b16 %v1278
        %v1311 = vunpack.c.l.b16 %v1279
        %v1312 = vunpack.c.l.b16 %v1280
        %v1313 = vunpack.c.l.b16 %v1281
        %v1314 = vunpack.c.l.b16 %v1282
        %v1315 = vunpack.c.l.b16 %v1283
        %v1316 = vunpack.c.l.b16 %v1284
        %v1317 = vunpack.c.l.b16 %v1285
        %v1318 = vunpack.c.l.b16 %v1286
        %v1319 = vunpack.c.l.b16 %v1287
        %v1320 = vunpack.c.l.b16 %v1288
        %v1321 = vunpack.c.l.b16 %v1289
        %v1322 = vunpack.c.l.b16 %v1290
        %v1323 = vunpack.c.l.b16 %v1291
        %v1324 = vpack.c.b16 %v1309, %v1308
        %v1325 = vpack.c.b16 %v1311, %v1310
        %v1326 = vpack.c.b16 %v1313, %v1312
        %v1327 = vpack.c.b16 %v1315, %v1314
        %v1328 = vpack.c.b16 %v1317, %v1316
        %v1329 = vpack.c.b16 %v1319, %v1318
        %v1330 = vpack.c.b16 %v1321, %v1320
        %v1331 = vpack.c.b16 %v1323, %v1322
        %1340 = vmatprep.subr.bf16.mxu0 0
        %1341 = vmatpush1.bf16.msra.mxu0 %v1331
        %1342 = vmatprep.subr.bf16.mxu0 0
        %1343 = vmatpush1.bf16.msra.mxu0 %v1330
        %1344 = vmatprep.subr.bf16.mxu0 0
        %1345 = vmatpush1.bf16.msra.mxu0 %v1329
        %1346 = vmatprep.subr.bf16.mxu0 0
        %1347 = vmatpush1.bf16.msra.mxu0 %v1328
        %1348 = vmatprep.subr.bf16.mxu0 0
        %1349 = vmatpush1.bf16.msra.mxu0 %v1327
        %1350 = vmatprep.subr.bf16.mxu0 0
        %1351 = vmatpush1.bf16.msra.mxu0 %v1326
        %1352 = vmatprep.subr.bf16.mxu0 0
        %1353 = vmatpush1.bf16.msra.mxu0 %v1325
        %1354 = vmatprep.subr.bf16.mxu0 0
        %1355 = vmatpush1.bf16.msra.mxu0 %v1324
        %1356 = vmatprep.subr.bf16.mxu0 0
        %1357 = vmatpush2.bf16.msra.mxu0 0
        %1358 = vmatprep.subr.bf16.mxu0 0
        %1359 = vmatpush2.bf16.msra.mxu0 0
        %1360 = vmatprep.subr.bf16.mxu0 0
        %1361 = vmatpush2.bf16.msra.mxu0 0
        %1362 = vmatprep.subr.bf16.mxu0 0
        %1363 = vmatpush2.bf16.msra.mxu0 0
        %1364 = vmatprep.subr.bf16.mxu0 0
        %1365 = vmatpush2.bf16.msra.mxu0 0
        %1366 = vmatprep.subr.bf16.mxu0 0
        %1367 = vmatpush2.bf16.msra.mxu0 0
        %1368 = vmatprep.subr.bf16.mxu0 0
        %1369 = vmatpush2.bf16.msra.mxu0 0
        %1370 = vmatprep.subr.bf16.mxu0 0
        %1371 = vmatpush2.bf16.msra.mxu0 0
        %1372 = vmatprep.mubr.bf16.mxu0 0
        %1373 = vmatmul.mubr.bf16.gmra.mxu0 %v907
        %v1374 = vpop.f32.mrf.mxu0
        %v1375 = vadd.f32 0.0, %v1374
        %v1376 = vpop.f32.mrf.mxu0
        %v1377 = vpop.f32.mrf.mxu0
        %v1378 = vadd.f32 0.0, %v1377
        %v1379 = vpop.f32.mrf.mxu0
        %1380 = vmatprep.mubr.bf16.mxu0 0
        %1381 = vmatmul.mubr.bf16.gmra.mxu0 %v908
        %v1382 = vpop.f32.mrf.mxu0
        %v1383 = vadd.f32 0.0, %v1382
        %v1384 = vpop.f32.mrf.mxu0
        %v1385 = vpop.f32.mrf.mxu0
        %v1386 = vadd.f32 0.0, %v1385
        %v1387 = vpop.f32.mrf.mxu0
        %1388 = vmatprep.mubr.bf16.mxu0 0
        %1389 = vmatmul.mubr.bf16.gmra.mxu0 %v909
        %v1390 = vpop.f32.mrf.mxu0
        %v1391 = vadd.f32 0.0, %v1390
        %v1392 = vpop.f32.mrf.mxu0
        %v1393 = vpop.f32.mrf.mxu0
        %v1394 = vadd.f32 0.0, %v1393
        %v1395 = vpop.f32.mrf.mxu0
        %1396 = vmatprep.mubr.bf16.mxu0 0
        %1397 = vmatmul.mubr.bf16.gmra.mxu0 %v910
        %v1398 = vpop.f32.mrf.mxu0
        %v1399 = vadd.f32 0.0, %v1398
        %v1400 = vpop.f32.mrf.mxu0
        %v1401 = vpop.f32.mrf.mxu0
        %v1402 = vadd.f32 0.0, %v1401
        %v1403 = vpop.f32.mrf.mxu0
        %1404 = vmatprep.mubr.bf16.mxu0 0
        %1405 = vmatmul.mubr.bf16.gmra.mxu0 %v911
        %v1406 = vpop.f32.mrf.mxu0
        %v1407 = vadd.f32 0.0, %v1406
        %v1408 = vpop.f32.mrf.mxu0
        %v1409 = vpop.f32.mrf.mxu0
        %v1410 = vadd.f32 0.0, %v1409
        %v1411 = vpop.f32.mrf.mxu0
        %1412 = vmatprep.mubr.bf16.mxu0 0
        %1413 = vmatmul.mubr.bf16.gmra.mxu0 %v912
        %v1414 = vpop.f32.mrf.mxu0
        %v1415 = vadd.f32 0.0, %v1414
        %v1416 = vpop.f32.mrf.mxu0
        %v1417 = vpop.f32.mrf.mxu0
        %v1418 = vadd.f32 0.0, %v1417
        %v1419 = vpop.f32.mrf.mxu0
        %1420 = vmatprep.mubr.bf16.mxu0 0
        %1421 = vmatmul.mubr.bf16.gmra.mxu0 %v913
        %v1422 = vpop.f32.mrf.mxu0
        %v1423 = vadd.f32 0.0, %v1422
        %v1424 = vpop.f32.mrf.mxu0
        %v1425 = vpop.f32.mrf.mxu0
        %v1426 = vadd.f32 0.0, %v1425
        %v1427 = vpop.f32.mrf.mxu0
        %1428 = vmatprep.mubr.bf16.mxu0 0
        %1429 = vmatmul.mubr.bf16.gmra.mxu0 %v914
        %v1430 = vpop.f32.mrf.mxu0
        %v1431 = vadd.f32 0.0, %v1430
        %v1432 = vpop.f32.mrf.mxu0
        %v1433 = vpop.f32.mrf.mxu0
        %v1434 = vadd.f32 0.0, %v1433
        %v1435 = vpop.f32.mrf.mxu0
        %1436 = vdwg.mxu0
        %v1437 = vld [vmem:[%s728] sm:$0xf]
        %v1438 = vld [vmem:[%s728 + $0x4] sm:$0xf]
        %v1439 = vld [vmem:[%s728 + $0x8] sm:$0xf]
        %v1440 = vld [vmem:[%s728 + $0xc] sm:$0xf]
        %v1441 = vld [vmem:[%s728 + $0x10] sm:$0xf]
        %v1442 = vld [vmem:[%s728 + $0x14] sm:$0xf]
        %v1443 = vld [vmem:[%s728 + $0x18] sm:$0xf]
        %v1444 = vld [vmem:[%s728 + $0x1c] sm:$0xf]
        %v1445 = vld [vmem:[%s728 + $0x20] sm:$0xf]
        %v1446 = vld [vmem:[%s728 + $0x24] sm:$0xf]
        %v1447 = vld [vmem:[%s728 + $0x28] sm:$0xf]
        %v1448 = vld [vmem:[%s728 + $0x2c] sm:$0xf]
        %v1449 = vld [vmem:[%s728 + $0x30] sm:$0xf]
        %v1450 = vld [vmem:[%s728 + $0x34] sm:$0xf]
        %v1451 = vld [vmem:[%s728 + $0x38] sm:$0xf]
        %v1452 = vld [vmem:[%s728 + $0x3c] sm:$0xf]
        %v1469 = vunpack.c.l.b16 %v1437
        %v1470 = vunpack.c.l.b16 %v1438
        %v1471 = vunpack.c.l.b16 %v1439
        %v1472 = vunpack.c.l.b16 %v1440
        %v1473 = vunpack.c.l.b16 %v1441
        %v1474 = vunpack.c.l.b16 %v1442
        %v1475 = vunpack.c.l.b16 %v1443
        %v1476 = vunpack.c.l.b16 %v1444
        %v1477 = vunpack.c.l.b16 %v1445
        %v1478 = vunpack.c.l.b16 %v1446
        %v1479 = vunpack.c.l.b16 %v1447
        %v1480 = vunpack.c.l.b16 %v1448
        %v1481 = vunpack.c.l.b16 %v1449
        %v1482 = vunpack.c.l.b16 %v1450
        %v1483 = vunpack.c.l.b16 %v1451
        %v1484 = vunpack.c.l.b16 %v1452
        %v1485 = vpack.c.b16 %v1470, %v1469
        %v1486 = vpack.c.b16 %v1472, %v1471
        %v1487 = vpack.c.b16 %v1474, %v1473
        %v1488 = vpack.c.b16 %v1476, %v1475
        %v1489 = vpack.c.b16 %v1478, %v1477
        %v1490 = vpack.c.b16 %v1480, %v1479
        %v1491 = vpack.c.b16 %v1482, %v1481
        %v1492 = vpack.c.b16 %v1484, %v1483
        %1501 = vmatprep.subr.bf16.mxu0 0
        %1502 = vmatpush1.bf16.msra.mxu0 %v1492
        %1503 = vmatprep.subr.bf16.mxu0 0
        %1504 = vmatpush1.bf16.msra.mxu0 %v1491
        %1505 = vmatprep.subr.bf16.mxu0 0
        %1506 = vmatpush1.bf16.msra.mxu0 %v1490
        %1507 = vmatprep.subr.bf16.mxu0 0
        %1508 = vmatpush1.bf16.msra.mxu0 %v1489
        %1509 = vmatprep.subr.bf16.mxu0 0
        %1510 = vmatpush1.bf16.msra.mxu0 %v1488
        %1511 = vmatprep.subr.bf16.mxu0 0
        %1512 = vmatpush1.bf16.msra.mxu0 %v1487
        %1513 = vmatprep.subr.bf16.mxu0 0
        %1514 = vmatpush1.bf16.msra.mxu0 %v1486
        %1515 = vmatprep.subr.bf16.mxu0 0
        %1516 = vmatpush1.bf16.msra.mxu0 %v1485
        %1517 = vmatprep.subr.bf16.mxu0 0
        %1518 = vmatpush2.bf16.msra.mxu0 0
        %1519 = vmatprep.subr.bf16.mxu0 0
        %1520 = vmatpush2.bf16.msra.mxu0 0
        %1521 = vmatprep.subr.bf16.mxu0 0
        %1522 = vmatpush2.bf16.msra.mxu0 0
        %1523 = vmatprep.subr.bf16.mxu0 0
        %1524 = vmatpush2.bf16.msra.mxu0 0
        %1525 = vmatprep.subr.bf16.mxu0 0
        %1526 = vmatpush2.bf16.msra.mxu0 0
        %1527 = vmatprep.subr.bf16.mxu0 0
        %1528 = vmatpush2.bf16.msra.mxu0 0
        %1529 = vmatprep.subr.bf16.mxu0 0
        %1530 = vmatpush2.bf16.msra.mxu0 0
        %1531 = vmatprep.subr.bf16.mxu0 0
        %1532 = vmatpush2.bf16.msra.mxu0 0
        %1533 = vmatprep.mubr.bf16.mxu0 0
        %1534 = vmatmul.mubr.bf16.gmra.mxu0 %v907
        %v1535 = vpop.f32.mrf.mxu0
        %v1536 = vadd.f32 0.0, %v1535
        %v1537 = vpop.f32.mrf.mxu0
        %v1538 = vpop.f32.mrf.mxu0
        %v1539 = vadd.f32 0.0, %v1538
        %v1540 = vpop.f32.mrf.mxu0
        %1541 = vmatprep.mubr.bf16.mxu0 0
        %1542 = vmatmul.mubr.bf16.gmra.mxu0 %v908
        %v1543 = vpop.f32.mrf.mxu0
        %v1544 = vadd.f32 0.0, %v1543
        %v1545 = vpop.f32.mrf.mxu0
        %v1546 = vpop.f32.mrf.mxu0
        %v1547 = vadd.f32 0.0, %v1546
        %v1548 = vpop.f32.mrf.mxu0
        %1549 = vmatprep.mubr.bf16.mxu0 0
        %1550 = vmatmul.mubr.bf16.gmra.mxu0 %v909
        %v1551 = vpop.f32.mrf.mxu0
        %v1552 = vadd.f32 0.0, %v1551
        %v1553 = vpop.f32.mrf.mxu0
        %v1554 = vpop.f32.mrf.mxu0
        %v1555 = vadd.f32 0.0, %v1554
        %v1556 = vpop.f32.mrf.mxu0
        %1557 = vmatprep.mubr.bf16.mxu0 0
        %1558 = vmatmul.mubr.bf16.gmra.mxu0 %v910
        %v1559 = vpop.f32.mrf.mxu0
        %v1560 = vadd.f32 0.0, %v1559
        %v1561 = vpop.f32.mrf.mxu0
        %v1562 = vpop.f32.mrf.mxu0
        %v1563 = vadd.f32 0.0, %v1562
        %v1564 = vpop.f32.mrf.mxu0
        %1565 = vmatprep.mubr.bf16.mxu0 0
        %1566 = vmatmul.mubr.bf16.gmra.mxu0 %v911
        %v1567 = vpop.f32.mrf.mxu0
        %v1568 = vadd.f32 0.0, %v1567
        %v1569 = vpop.f32.mrf.mxu0
        %v1570 = vpop.f32.mrf.mxu0
        %v1571 = vadd.f32 0.0, %v1570
        %v1572 = vpop.f32.mrf.mxu0
        %1573 = vmatprep.mubr.bf16.mxu0 0
        %1574 = vmatmul.mubr.bf16.gmra.mxu0 %v912
        %v1575 = vpop.f32.mrf.mxu0
        %v1576 = vadd.f32 0.0, %v1575
        %v1577 = vpop.f32.mrf.mxu0
        %v1578 = vpop.f32.mrf.mxu0
        %v1579 = vadd.f32 0.0, %v1578
        %v1580 = vpop.f32.mrf.mxu0
        %1581 = vmatprep.mubr.bf16.mxu0 0
        %1582 = vmatmul.mubr.bf16.gmra.mxu0 %v913
        %v1583 = vpop.f32.mrf.mxu0
        %v1584 = vadd.f32 0.0, %v1583
        %v1585 = vpop.f32.mrf.mxu0
        %v1586 = vpop.f32.mrf.mxu0
        %v1587 = vadd.f32 0.0, %v1586
        %v1588 = vpop.f32.mrf.mxu0
        %1589 = vmatprep.mubr.bf16.mxu0 0
        %1590 = vmatmul.mubr.bf16.gmra.mxu0 %v914
        %v1591 = vpop.f32.mrf.mxu0
        %v1592 = vadd.f32 0.0, %v1591
        %v1593 = vpop.f32.mrf.mxu0
        %v1594 = vpop.f32.mrf.mxu0
        %v1595 = vadd.f32 0.0, %v1594
        %v1596 = vpop.f32.mrf.mxu0
        %1597 = vdwg.mxu0
        %p1598 = scmp.gt.s32.totalorder %s27, 0
        %v1599 = vmul.f32 %v1375, %v1071
        %v1600 = vmul.f32 %v1378, %v1076
        %v1601 = vmul.f32 %v1383, %v1081
        %v1602 = vmul.f32 %v1386, %v1086
        %v1603 = vmul.f32 %v1391, %v1091
        %v1604 = vmul.f32 %v1394, %v1096
        %v1605 = vmul.f32 %v1399, %v1101
        %v1606 = vmul.f32 %v1402, %v1106
        %v1607 = vmul.f32 %v1407, %v1111
        %v1608 = vmul.f32 %v1410, %v1116
        %v1609 = vmul.f32 %v1415, %v1121
        %v1610 = vmul.f32 %v1418, %v1126
        %v1611 = vmul.f32 %v1423, %v1131
        %v1612 = vmul.f32 %v1426, %v1136
        %v1613 = vmul.f32 %v1431, %v1141
        %v1614 = vmul.f32 %v1434, %v1146
        %v1615 = vadd.f32 %v1599, %v1167
        %v1616 = vadd.f32 %v1600, %v1172
        %v1617 = vadd.f32 %v1601, %v1177
        %v1618 = vadd.f32 %v1602, %v1182
        %v1619 = vadd.f32 %v1603, %v1187
        %v1620 = vadd.f32 %v1604, %v1192
        %v1621 = vadd.f32 %v1605, %v1197
        %v1622 = vadd.f32 %v1606, %v1202
        %v1623 = vadd.f32 %v1607, %v1207
        %v1624 = vadd.f32 %v1608, %v1212
        %v1625 = vadd.f32 %v1609, %v1217
        %v1626 = vadd.f32 %v1610, %v1222
        %v1627 = vadd.f32 %v1611, %v1227
        %v1628 = vadd.f32 %v1612, %v1232
        %v1629 = vadd.f32 %v1613, %v1237
        %v1630 = vadd.f32 %v1614, %v1242
        %s1631 = scalar_select %p1598, 1, 0
        %v1632 = vstv %s1631
        %vm1633 = vcmp.eq.s32.totalorder %v1632, 1
        %v1634 = vsel %vm1633, %v1615, 0.0
        %v1635 = vsel %vm1633, %v1616, 0.0
        %v1636 = vsel %vm1633, %v1617, 0.0
        %v1637 = vsel %vm1633, %v1618, 0.0
        %v1638 = vsel %vm1633, %v1619, 0.0
        %v1639 = vsel %vm1633, %v1620, 0.0
        %v1640 = vsel %vm1633, %v1621, 0.0
        %v1641 = vsel %vm1633, %v1622, 0.0
        %v1642 = vsel %vm1633, %v1623, 0.0
        %v1643 = vsel %vm1633, %v1624, 0.0
        %v1644 = vsel %vm1633, %v1625, 0.0
        %v1645 = vsel %vm1633, %v1626, 0.0
        %v1646 = vsel %vm1633, %v1627, 0.0
        %v1647 = vsel %vm1633, %v1628, 0.0
        %v1648 = vsel %vm1633, %v1629, 0.0
        %v1649 = vsel %vm1633, %v1630, 0.0
        %s1650 = sadd.s32 %s27, 1
        %s1651 = smul.u32 %s1650, 128
        %v1652 = vstv %s1651
        %v1653 = vadd.s32 %v854, %v1652
        %vm1654 = vcmp.lt.s32.totalorder %v1653, 300
        %v1655 = vmul.f32 %v1536, %v1071
        %v1656 = vmul.f32 %v1539, %v1076
        %v1657 = vmul.f32 %v1544, %v1081
        %v1658 = vmul.f32 %v1547, %v1086
        %v1659 = vmul.f32 %v1552, %v1091
        %v1660 = vmul.f32 %v1555, %v1096
        %v1661 = vmul.f32 %v1560, %v1101
        %v1662 = vmul.f32 %v1563, %v1106
        %v1663 = vmul.f32 %v1568, %v1111
        %v1664 = vmul.f32 %v1571, %v1116
        %v1665 = vmul.f32 %v1576, %v1121
        %v1666 = vmul.f32 %v1579, %v1126
        %v1667 = vmul.f32 %v1584, %v1131
        %v1668 = vmul.f32 %v1587, %v1136
        %v1669 = vmul.f32 %v1592, %v1141
        %v1670 = vmul.f32 %v1595, %v1146
        %v1671 = vadd.f32 %v1655, %v1167
        %v1672 = vadd.f32 %v1656, %v1172
        %v1673 = vadd.f32 %v1657, %v1177
        %v1674 = vadd.f32 %v1658, %v1182
        %v1675 = vadd.f32 %v1659, %v1187
        %v1676 = vadd.f32 %v1660, %v1192
        %v1677 = vadd.f32 %v1661, %v1197
        %v1678 = vadd.f32 %v1662, %v1202
        %v1679 = vadd.f32 %v1663, %v1207
        %v1680 = vadd.f32 %v1664, %v1212
        %v1681 = vadd.f32 %v1665, %v1217
        %v1682 = vadd.f32 %v1666, %v1222
        %v1683 = vadd.f32 %v1667, %v1227
        %v1684 = vadd.f32 %v1668, %v1232
        %v1685 = vadd.f32 %v1669, %v1237
        %v1686 = vadd.f32 %v1670, %v1242
        %v1687 = vsel %vm1654, %v1671, 0.0
        %v1688 = vsel %vm1654, %v1672, 0.0
        %v1689 = vsel %vm1654, %v1673, 0.0
        %v1690 = vsel %vm1654, %v1674, 0.0
        %v1691 = vsel %vm1654, %v1675, 0.0
        %v1692 = vsel %vm1654, %v1676, 0.0
        %v1693 = vsel %vm1654, %v1677, 0.0
        %v1694 = vsel %vm1654, %v1678, 0.0
        %v1695 = vsel %vm1654, %v1679, 0.0
        %v1696 = vsel %vm1654, %v1680, 0.0
        %v1697 = vsel %vm1654, %v1681, 0.0
        %v1698 = vsel %vm1654, %v1682, 0.0
        %v1699 = vsel %vm1654, %v1683, 0.0
        %v1700 = vsel %vm1654, %v1684, 0.0
        %v1701 = vsel %vm1654, %v1685, 0.0
        %v1702 = vsel %vm1654, %v1686, 0.0
        %v1703 = vld [vmem:[%s6] sm:$0xff]
        %v1704 = vld [vmem:[%s6 + $0x8] sm:$0xff]
        %v1705 = vld [vmem:[%s6 + $0x10] sm:$0xff]
        %v1706 = vld [vmem:[%s6 + $0x18] sm:$0xff]
        %v1707 = vld [vmem:[%s6 + $0x20] sm:$0xff]
        %v1708 = vld [vmem:[%s6 + $0x28] sm:$0xff]
        %v1709 = vld [vmem:[%s6 + $0x30] sm:$0xff]
        %v1710 = vld [vmem:[%s6 + $0x38] sm:$0xff]
        %v1711 = vld [vmem:[%s6 + $0x40] sm:$0xff]
        %v1712 = vld [vmem:[%s6 + $0x48] sm:$0xff]
        %v1713 = vld [vmem:[%s6 + $0x50] sm:$0xff]
        %v1714 = vld [vmem:[%s6 + $0x58] sm:$0xff]
        %v1715 = vld [vmem:[%s6 + $0x60] sm:$0xff]
        %v1716 = vld [vmem:[%s6 + $0x68] sm:$0xff]
        %v1717 = vld [vmem:[%s6 + $0x70] sm:$0xff]
        %v1718 = vld [vmem:[%s6 + $0x78] sm:$0xff]
        %1720 = vset.pattern.permute.xlu0 2
        %1721 = vperm.xlu0 %1720, %v1703
        %v1722 = vpop.permute.xlu0 %1721
        %1725 = vset.pattern.permute.xlu0 2
        %1726 = vperm.xlu0 %1725, %v1704
        %v1727 = vpop.permute.xlu0 %1726
        %1730 = vset.pattern.permute.xlu0 2
        %1731 = vperm.xlu0 %1730, %v1705
        %v1732 = vpop.permute.xlu0 %1731
        %1735 = vset.pattern.permute.xlu0 2
        %1736 = vperm.xlu0 %1735, %v1706
        %v1737 = vpop.permute.xlu0 %1736
        %1740 = vset.pattern.permute.xlu0 2
        %1741 = vperm.xlu0 %1740, %v1707
        %v1742 = vpop.permute.xlu0 %1741
        %1745 = vset.pattern.permute.xlu0 2
        %1746 = vperm.xlu0 %1745, %v1708
        %v1747 = vpop.permute.xlu0 %1746
        %1750 = vset.pattern.permute.xlu0 2
        %1751 = vperm.xlu0 %1750, %v1709
        %v1752 = vpop.permute.xlu0 %1751
        %1755 = vset.pattern.permute.xlu0 2
        %1756 = vperm.xlu0 %1755, %v1710
        %v1757 = vpop.permute.xlu0 %1756
        %1760 = vset.pattern.permute.xlu0 2
        %1761 = vperm.xlu0 %1760, %v1711
        %v1762 = vpop.permute.xlu0 %1761
        %1765 = vset.pattern.permute.xlu0 2
        %1766 = vperm.xlu0 %1765, %v1712
        %v1767 = vpop.permute.xlu0 %1766
        %1770 = vset.pattern.permute.xlu0 2
        %1771 = vperm.xlu0 %1770, %v1713
        %v1772 = vpop.permute.xlu0 %1771
        %1775 = vset.pattern.permute.xlu0 2
        %1776 = vperm.xlu0 %1775, %v1714
        %v1777 = vpop.permute.xlu0 %1776
        %1780 = vset.pattern.permute.xlu0 2
        %1781 = vperm.xlu0 %1780, %v1715
        %v1782 = vpop.permute.xlu0 %1781
        %1785 = vset.pattern.permute.xlu0 2
        %1786 = vperm.xlu0 %1785, %v1716
        %v1787 = vpop.permute.xlu0 %1786
        %1790 = vset.pattern.permute.xlu0 2
        %1791 = vperm.xlu0 %1790, %v1717
        %v1792 = vpop.permute.xlu0 %1791
        %1795 = vset.pattern.permute.xlu0 2
        %1796 = vperm.xlu0 %1795, %v1718
        %v1797 = vpop.permute.xlu0 %1796
        %v1799 = vmul.f32 %v1722, %v1260
        %v1800 = vmul.f32 %v1727, %v1261
        %v1801 = vmul.f32 %v1732, %v1262
        %v1802 = vmul.f32 %v1737, %v1263
        %v1803 = vmul.f32 %v1742, %v1264
        %v1804 = vmul.f32 %v1747, %v1265
        %v1805 = vmul.f32 %v1752, %v1266
        %v1806 = vmul.f32 %v1757, %v1267
        %v1807 = vmul.f32 %v1762, %v1268
        %v1808 = vmul.f32 %v1767, %v1269
        %v1809 = vmul.f32 %v1772, %v1270
        %v1810 = vmul.f32 %v1777, %v1271
        %v1811 = vmul.f32 %v1782, %v1272
        %v1812 = vmul.f32 %v1787, %v1273
        %v1813 = vmul.f32 %v1792, %v1274
        %v1814 = vmul.f32 %v1797, %v1275
        %1815 = vrot.lane.b32.xlu0 %v1260, 2
        %v1816 = vpop.permute.xlu0 %1815
        %1817 = vrot.lane.b32.xlu0 %v1261, 2
        %v1818 = vpop.permute.xlu0 %1817
        %1819 = vrot.lane.b32.xlu0 %v1262, 2
        %v1820 = vpop.permute.xlu0 %1819
        %1821 = vrot.lane.b32.xlu0 %v1263, 2
        %v1822 = vpop.permute.xlu0 %1821
        %1823 = vrot.lane.b32.xlu0 %v1264, 2
        %v1824 = vpop.permute.xlu0 %1823
        %1825 = vrot.lane.b32.xlu0 %v1265, 2
        %v1826 = vpop.permute.xlu0 %1825
        %1827 = vrot.lane.b32.xlu0 %v1266, 2
        %v1828 = vpop.permute.xlu0 %1827
        %1829 = vrot.lane.b32.xlu0 %v1267, 2
        %v1830 = vpop.permute.xlu0 %1829
        %1831 = vrot.lane.b32.xlu0 %v1268, 2
        %v1832 = vpop.permute.xlu0 %1831
        %1833 = vrot.lane.b32.xlu0 %v1269, 2
        %v1834 = vpop.permute.xlu0 %1833
        %1835 = vrot.lane.b32.xlu0 %v1270, 2
        %v1836 = vpop.permute.xlu0 %1835
        %1837 = vrot.lane.b32.xlu0 %v1271, 2
        %v1838 = vpop.permute.xlu0 %1837
        %1839 = vrot.lane.b32.xlu0 %v1272, 2
        %v1840 = vpop.permute.xlu0 %1839
        %1841 = vrot.lane.b32.xlu0 %v1273, 2
        %v1842 = vpop.permute.xlu0 %1841
        %1843 = vrot.lane.b32.xlu0 %v1274, 2
        %v1844 = vpop.permute.xlu0 %1843
        %1845 = vrot.lane.b32.xlu0 %v1275, 2
        %v1846 = vpop.permute.xlu0 %1845
        %vm1847 = vcmp.eq.s32.totalorder %v854, 0
        %1849 = vset.pattern.permute.xlu0 126
        %1850 = vperm.xlu0 %1849, %v1634
        %v1851 = vpop.permute.xlu0 %1850
        %1854 = vset.pattern.permute.xlu0 126
        %1855 = vperm.xlu0 %1854, %v1635
        %v1856 = vpop.permute.xlu0 %1855
        %1859 = vset.pattern.permute.xlu0 126
        %1860 = vperm.xlu0 %1859, %v1636
        %v1861 = vpop.permute.xlu0 %1860
        %1864 = vset.pattern.permute.xlu0 126
        %1865 = vperm.xlu0 %1864, %v1637
        %v1866 = vpop.permute.xlu0 %1865
        %1869 = vset.pattern.permute.xlu0 126
        %1870 = vperm.xlu0 %1869, %v1638
        %v1871 = vpop.permute.xlu0 %1870
        %1874 = vset.pattern.permute.xlu0 126
        %1875 = vperm.xlu0 %1874, %v1639
        %v1876 = vpop.permute.xlu0 %1875
        %1879 = vset.pattern.permute.xlu0 126
        %1880 = vperm.xlu0 %1879, %v1640
        %v1881 = vpop.permute.xlu0 %1880
        %1884 = vset.pattern.permute.xlu0 126
        %1885 = vperm.xlu0 %1884, %v1641
        %v1886 = vpop.permute.xlu0 %1885
        %1889 = vset.pattern.permute.xlu0 126
        %1890 = vperm.xlu0 %1889, %v1642
        %v1891 = vpop.permute.xlu0 %1890
        %1894 = vset.pattern.permute.xlu0 126
        %1895 = vperm.xlu0 %1894, %v1643
        %v1896 = vpop.permute.xlu0 %1895
        %1899 = vset.pattern.permute.xlu0 126
        %1900 = vperm.xlu0 %1899, %v1644
        %v1901 = vpop.permute.xlu0 %1900
        %1904 = vset.pattern.permute.xlu0 126
        %1905 = vperm.xlu0 %1904, %v1645
        %v1906 = vpop.permute.xlu0 %1905
        %1909 = vset.pattern.permute.xlu0 126
        %1910 = vperm.xlu0 %1909, %v1646
        %v1911 = vpop.permute.xlu0 %1910
        %1914 = vset.pattern.permute.xlu0 126
        %1915 = vperm.xlu0 %1914, %v1647
        %v1916 = vpop.permute.xlu0 %1915
        %1919 = vset.pattern.permute.xlu0 126
        %1920 = vperm.xlu0 %1919, %v1648
        %v1921 = vpop.permute.xlu0 %1920
        %1924 = vset.pattern.permute.xlu0 126
        %1925 = vperm.xlu0 %1924, %v1649
        %v1926 = vpop.permute.xlu0 %1925
        %v1928 = vsel %vm1847, %v1851, %v1816
        %v1929 = vsel %vm1847, %v1856, %v1818
        %v1930 = vsel %vm1847, %v1861, %v1820
        %v1931 = vsel %vm1847, %v1866, %v1822
        %v1932 = vsel %vm1847, %v1871, %v1824
        %v1933 = vsel %vm1847, %v1876, %v1826
        %v1934 = vsel %vm1847, %v1881, %v1828
        %v1935 = vsel %vm1847, %v1886, %v1830
        %v1936 = vsel %vm1847, %v1891, %v1832
        %v1937 = vsel %vm1847, %v1896, %v1834
        %v1938 = vsel %vm1847, %v1901, %v1836
        %v1939 = vsel %vm1847, %v1906, %v1838
        %v1940 = vsel %vm1847, %v1911, %v1840
        %v1941 = vsel %vm1847, %v1916, %v1842
        %v1942 = vsel %vm1847, %v1921, %v1844
        %v1943 = vsel %vm1847, %v1926, %v1846
        %vm1944 = vcmp.eq.s32.totalorder %v854, 1
        %1945 = vset.pattern.permute.xlu0 127
        %1946 = vperm.xlu0 %1945, %v1634
        %v1947 = vpop.permute.xlu0 %1946
        %1949 = vset.pattern.permute.xlu0 127
        %1950 = vperm.xlu0 %1949, %v1635
        %v1951 = vpop.permute.xlu0 %1950
        %1953 = vset.pattern.permute.xlu0 127
        %1954 = vperm.xlu0 %1953, %v1636
        %v1955 = vpop.permute.xlu0 %1954
        %1957 = vset.pattern.permute.xlu0 127
        %1958 = vperm.xlu0 %1957, %v1637
        %v1959 = vpop.permute.xlu0 %1958
        %1961 = vset.pattern.permute.xlu0 127
        %1962 = vperm.xlu0 %1961, %v1638
        %v1963 = vpop.permute.xlu0 %1962
        %1965 = vset.pattern.permute.xlu0 127
        %1966 = vperm.xlu0 %1965, %v1639
        %v1967 = vpop.permute.xlu0 %1966
        %1969 = vset.pattern.permute.xlu0 127
        %1970 = vperm.xlu0 %1969, %v1640
        %v1971 = vpop.permute.xlu0 %1970
        %1973 = vset.pattern.permute.xlu0 127
        %1974 = vperm.xlu0 %1973, %v1641
        %v1975 = vpop.permute.xlu0 %1974
        %1977 = vset.pattern.permute.xlu0 127
        %1978 = vperm.xlu0 %1977, %v1642
        %v1979 = vpop.permute.xlu0 %1978
        %1981 = vset.pattern.permute.xlu0 127
        %1982 = vperm.xlu0 %1981, %v1643
        %v1983 = vpop.permute.xlu0 %1982
        %1985 = vset.pattern.permute.xlu0 127
        %1986 = vperm.xlu0 %1985, %v1644
        %v1987 = vpop.permute.xlu0 %1986
        %1989 = vset.pattern.permute.xlu0 127
        %1990 = vperm.xlu0 %1989, %v1645
        %v1991 = vpop.permute.xlu0 %1990
        %1993 = vset.pattern.permute.xlu0 127
        %1994 = vperm.xlu0 %1993, %v1646
        %v1995 = vpop.permute.xlu0 %1994
        %1997 = vset.pattern.permute.xlu0 127
        %1998 = vperm.xlu0 %1997, %v1647
        %v1999 = vpop.permute.xlu0 %1998
        %2001 = vset.pattern.permute.xlu0 127
        %2002 = vperm.xlu0 %2001, %v1648
        %v2003 = vpop.permute.xlu0 %2002
        %2005 = vset.pattern.permute.xlu0 127
        %2006 = vperm.xlu0 %2005, %v1649
        %v2007 = vpop.permute.xlu0 %2006
        %v2009 = vsel %vm1944, %v1947, %v1928
        %v2010 = vsel %vm1944, %v1951, %v1929
        %v2011 = vsel %vm1944, %v1955, %v1930
        %v2012 = vsel %vm1944, %v1959, %v1931
        %v2013 = vsel %vm1944, %v1963, %v1932
        %v2014 = vsel %vm1944, %v1967, %v1933
        %v2015 = vsel %vm1944, %v1971, %v1934
        %v2016 = vsel %vm1944, %v1975, %v1935
        %v2017 = vsel %vm1944, %v1979, %v1936
        %v2018 = vsel %vm1944, %v1983, %v1937
        %v2019 = vsel %vm1944, %v1987, %v1938
        %v2020 = vsel %vm1944, %v1991, %v1939
        %v2021 = vsel %vm1944, %v1995, %v1940
        %v2022 = vsel %vm1944, %v1999, %v1941
        %v2023 = vsel %vm1944, %v2003, %v1942
        %v2024 = vsel %vm1944, %v2007, %v1943
        %2025 = vset.pattern.permute.xlu0 0
        %2026 = vperm.xlu0 %2025, %v1703
        %v2027 = vpop.permute.xlu0 %2026
        %2029 = vset.pattern.permute.xlu0 0
        %2030 = vperm.xlu0 %2029, %v1704
        %v2031 = vpop.permute.xlu0 %2030
        %2033 = vset.pattern.permute.xlu0 0
        %2034 = vperm.xlu0 %2033, %v1705
        %v2035 = vpop.permute.xlu0 %2034
        %2037 = vset.pattern.permute.xlu0 0
        %2038 = vperm.xlu0 %2037, %v1706
        %v2039 = vpop.permute.xlu0 %2038
        %2041 = vset.pattern.permute.xlu0 0
        %2042 = vperm.xlu0 %2041, %v1707
        %v2043 = vpop.permute.xlu0 %2042
        %2045 = vset.pattern.permute.xlu0 0
        %2046 = vperm.xlu0 %2045, %v1708
        %v2047 = vpop.permute.xlu0 %2046
        %2049 = vset.pattern.permute.xlu0 0
        %2050 = vperm.xlu0 %2049, %v1709
        %v2051 = vpop.permute.xlu0 %2050
        %2053 = vset.pattern.permute.xlu0 0
        %2054 = vperm.xlu0 %2053, %v1710
        %v2055 = vpop.permute.xlu0 %2054
        %2057 = vset.pattern.permute.xlu0 0
        %2058 = vperm.xlu0 %2057, %v1711
        %v2059 = vpop.permute.xlu0 %2058
        %2061 = vset.pattern.permute.xlu0 0
        %2062 = vperm.xlu0 %2061, %v1712
        %v2063 = vpop.permute.xlu0 %2062
        %2065 = vset.pattern.permute.xlu0 0
        %2066 = vperm.xlu0 %2065, %v1713
        %v2067 = vpop.permute.xlu0 %2066
        %2069 = vset.pattern.permute.xlu0 0
        %2070 = vperm.xlu0 %2069, %v1714
        %v2071 = vpop.permute.xlu0 %2070
        %2073 = vset.pattern.permute.xlu0 0
        %2074 = vperm.xlu0 %2073, %v1715
        %v2075 = vpop.permute.xlu0 %2074
        %2077 = vset.pattern.permute.xlu0 0
        %2078 = vperm.xlu0 %2077, %v1716
        %v2079 = vpop.permute.xlu0 %2078
        %2081 = vset.pattern.permute.xlu0 0
        %2082 = vperm.xlu0 %2081, %v1717
        %v2083 = vpop.permute.xlu0 %2082
        %2085 = vset.pattern.permute.xlu0 0
        %2086 = vperm.xlu0 %2085, %v1718
        %v2087 = vpop.permute.xlu0 %2086
        %v2089 = vmul.f32 %v2027, %v2009
        %v2090 = vmul.f32 %v2031, %v2010
        %v2091 = vmul.f32 %v2035, %v2011
        %v2092 = vmul.f32 %v2039, %v2012
        %v2093 = vmul.f32 %v2043, %v2013
        %v2094 = vmul.f32 %v2047, %v2014
        %v2095 = vmul.f32 %v2051, %v2015
        %v2096 = vmul.f32 %v2055, %v2016
        %v2097 = vmul.f32 %v2059, %v2017
        %v2098 = vmul.f32 %v2063, %v2018
        %v2099 = vmul.f32 %v2067, %v2019
        %v2100 = vmul.f32 %v2071, %v2020
        %v2101 = vmul.f32 %v2075, %v2021
        %v2102 = vmul.f32 %v2079, %v2022
        %v2103 = vmul.f32 %v2083, %v2023
        %v2104 = vmul.f32 %v2087, %v2024
        %v2105 = vadd.f32 %v1799, %v2089
        %v2106 = vadd.f32 %v1800, %v2090
        %v2107 = vadd.f32 %v1801, %v2091
        %v2108 = vadd.f32 %v1802, %v2092
        %v2109 = vadd.f32 %v1803, %v2093
        %v2110 = vadd.f32 %v1804, %v2094
        %v2111 = vadd.f32 %v1805, %v2095
        %v2112 = vadd.f32 %v1806, %v2096
        %v2113 = vadd.f32 %v1807, %v2097
        %v2114 = vadd.f32 %v1808, %v2098
        %v2115 = vadd.f32 %v1809, %v2099
        %v2116 = vadd.f32 %v1810, %v2100
        %v2117 = vadd.f32 %v1811, %v2101
        %v2118 = vadd.f32 %v1812, %v2102
        %v2119 = vadd.f32 %v1813, %v2103
        %v2120 = vadd.f32 %v1814, %v2104
        %2121 = vrot.lane.b32.xlu0 %v1260, 1
        %v2122 = vpop.permute.xlu0 %2121
        %2123 = vrot.lane.b32.xlu0 %v1261, 1
        %v2124 = vpop.permute.xlu0 %2123
        %2125 = vrot.lane.b32.xlu0 %v1262, 1
        %v2126 = vpop.permute.xlu0 %2125
        %2127 = vrot.lane.b32.xlu0 %v1263, 1
        %v2128 = vpop.permute.xlu0 %2127
        %2129 = vrot.lane.b32.xlu0 %v1264, 1
        %v2130 = vpop.permute.xlu0 %2129
        %2131 = vrot.lane.b32.xlu0 %v1265, 1
        %v2132 = vpop.permute.xlu0 %2131
        %2133 = vrot.lane.b32.xlu0 %v1266, 1
        %v2134 = vpop.permute.xlu0 %2133
        %2135 = vrot.lane.b32.xlu0 %v1267, 1
        %v2136 = vpop.permute.xlu0 %2135
        %2137 = vrot.lane.b32.xlu0 %v1268, 1
        %v2138 = vpop.permute.xlu0 %2137
        %2139 = vrot.lane.b32.xlu0 %v1269, 1
        %v2140 = vpop.permute.xlu0 %2139
        %2141 = vrot.lane.b32.xlu0 %v1270, 1
        %v2142 = vpop.permute.xlu0 %2141
        %2143 = vrot.lane.b32.xlu0 %v1271, 1
        %v2144 = vpop.permute.xlu0 %2143
        %2145 = vrot.lane.b32.xlu0 %v1272, 1
        %v2146 = vpop.permute.xlu0 %2145
        %2147 = vrot.lane.b32.xlu0 %v1273, 1
        %v2148 = vpop.permute.xlu0 %2147
        %2149 = vrot.lane.b32.xlu0 %v1274, 1
        %v2150 = vpop.permute.xlu0 %2149
        %2151 = vrot.lane.b32.xlu0 %v1275, 1
        %v2152 = vpop.permute.xlu0 %2151
        %v2153 = vsel %vm1847, %v1947, %v2122
        %v2154 = vsel %vm1847, %v1951, %v2124
        %v2155 = vsel %vm1847, %v1955, %v2126
        %v2156 = vsel %vm1847, %v1959, %v2128
        %v2157 = vsel %vm1847, %v1963, %v2130
        %v2158 = vsel %vm1847, %v1967, %v2132
        %v2159 = vsel %vm1847, %v1971, %v2134
        %v2160 = vsel %vm1847, %v1975, %v2136
        %v2161 = vsel %vm1847, %v1979, %v2138
        %v2162 = vsel %vm1847, %v1983, %v2140
        %v2163 = vsel %vm1847, %v1987, %v2142
        %v2164 = vsel %vm1847, %v1991, %v2144
        %v2165 = vsel %vm1847, %v1995, %v2146
        %v2166 = vsel %vm1847, %v1999, %v2148
        %v2167 = vsel %vm1847, %v2003, %v2150
        %v2168 = vsel %vm1847, %v2007, %v2152
        %2169 = vset.pattern.permute.xlu0 1
        %2170 = vperm.xlu0 %2169, %v1703
        %v2171 = vpop.permute.xlu0 %2170
        %2173 = vset.pattern.permute.xlu0 1
        %2174 = vperm.xlu0 %2173, %v1704
        %v2175 = vpop.permute.xlu0 %2174
        %2177 = vset.pattern.permute.xlu0 1
        %2178 = vperm.xlu0 %2177, %v1705
        %v2179 = vpop.permute.xlu0 %2178
        %2181 = vset.pattern.permute.xlu0 1
        %2182 = vperm.xlu0 %2181, %v1706
        %v2183 = vpop.permute.xlu0 %2182
        %2185 = vset.pattern.permute.xlu0 1
        %2186 = vperm.xlu0 %2185, %v1707
        %v2187 = vpop.permute.xlu0 %2186
        %2189 = vset.pattern.permute.xlu0 1
        %2190 = vperm.xlu0 %2189, %v1708
        %v2191 = vpop.permute.xlu0 %2190
        %2193 = vset.pattern.permute.xlu0 1
        %2194 = vperm.xlu0 %2193, %v1709
        %v2195 = vpop.permute.xlu0 %2194
        %2197 = vset.pattern.permute.xlu0 1
        %2198 = vperm.xlu0 %2197, %v1710
        %v2199 = vpop.permute.xlu0 %2198
        %2201 = vset.pattern.permute.xlu0 1
        %2202 = vperm.xlu0 %2201, %v1711
        %v2203 = vpop.permute.xlu0 %2202
        %2205 = vset.pattern.permute.xlu0 1
        %2206 = vperm.xlu0 %2205, %v1712
        %v2207 = vpop.permute.xlu0 %2206
        %2209 = vset.pattern.permute.xlu0 1
        %2210 = vperm.xlu0 %2209, %v1713
        %v2211 = vpop.permute.xlu0 %2210
        %2213 = vset.pattern.permute.xlu0 1
        %2214 = vperm.xlu0 %2213, %v1714
        %v2215 = vpop.permute.xlu0 %2214
        %2217 = vset.pattern.permute.xlu0 1
        %2218 = vperm.xlu0 %2217, %v1715
        %v2219 = vpop.permute.xlu0 %2218
        %2221 = vset.pattern.permute.xlu0 1
        %2222 = vperm.xlu0 %2221, %v1716
        %v2223 = vpop.permute.xlu0 %2222
        %2225 = vset.pattern.permute.xlu0 1
        %2226 = vperm.xlu0 %2225, %v1717
        %v2227 = vpop.permute.xlu0 %2226
        %2229 = vset.pattern.permute.xlu0 1
        %2230 = vperm.xlu0 %2229, %v1718
        %v2231 = vpop.permute.xlu0 %2230
        %v2233 = vmul.f32 %v2171, %v2153
        %v2234 = vmul.f32 %v2175, %v2154
        %v2235 = vmul.f32 %v2179, %v2155
        %v2236 = vmul.f32 %v2183, %v2156
        %v2237 = vmul.f32 %v2187, %v2157
        %v2238 = vmul.f32 %v2191, %v2158
        %v2239 = vmul.f32 %v2195, %v2159
        %v2240 = vmul.f32 %v2199, %v2160
        %v2241 = vmul.f32 %v2203, %v2161
        %v2242 = vmul.f32 %v2207, %v2162
        %v2243 = vmul.f32 %v2211, %v2163
        %v2244 = vmul.f32 %v2215, %v2164
        %v2245 = vmul.f32 %v2219, %v2165
        %v2246 = vmul.f32 %v2223, %v2166
        %v2247 = vmul.f32 %v2227, %v2167
        %v2248 = vmul.f32 %v2231, %v2168
        %v2249 = vadd.f32 %v2105, %v2233
        %v2250 = vadd.f32 %v2106, %v2234
        %v2251 = vadd.f32 %v2107, %v2235
        %v2252 = vadd.f32 %v2108, %v2236
        %v2253 = vadd.f32 %v2109, %v2237
        %v2254 = vadd.f32 %v2110, %v2238
        %v2255 = vadd.f32 %v2111, %v2239
        %v2256 = vadd.f32 %v2112, %v2240
        %v2257 = vadd.f32 %v2113, %v2241
        %v2258 = vadd.f32 %v2114, %v2242
        %v2259 = vadd.f32 %v2115, %v2243
        %v2260 = vadd.f32 %v2116, %v2244
        %v2261 = vadd.f32 %v2117, %v2245
        %v2262 = vadd.f32 %v2118, %v2246
        %v2263 = vadd.f32 %v2119, %v2247
        %v2264 = vadd.f32 %v2120, %v2248
        %2265 = vrot.lane.b32.xlu0 %v1260, 127
        %v2266 = vpop.permute.xlu0 %2265
        %2267 = vrot.lane.b32.xlu0 %v1261, 127
        %v2268 = vpop.permute.xlu0 %2267
        %2269 = vrot.lane.b32.xlu0 %v1262, 127
        %v2270 = vpop.permute.xlu0 %2269
        %2271 = vrot.lane.b32.xlu0 %v1263, 127
        %v2272 = vpop.permute.xlu0 %2271
        %2273 = vrot.lane.b32.xlu0 %v1264, 127
        %v2274 = vpop.permute.xlu0 %2273
        %2275 = vrot.lane.b32.xlu0 %v1265, 127
        %v2276 = vpop.permute.xlu0 %2275
        %2277 = vrot.lane.b32.xlu0 %v1266, 127
        %v2278 = vpop.permute.xlu0 %2277
        %2279 = vrot.lane.b32.xlu0 %v1267, 127
        %v2280 = vpop.permute.xlu0 %2279
        %2281 = vrot.lane.b32.xlu0 %v1268, 127
        %v2282 = vpop.permute.xlu0 %2281
        %2283 = vrot.lane.b32.xlu0 %v1269, 127
        %v2284 = vpop.permute.xlu0 %2283
        %2285 = vrot.lane.b32.xlu0 %v1270, 127
        %v2286 = vpop.permute.xlu0 %2285
        %2287 = vrot.lane.b32.xlu0 %v1271, 127
        %v2288 = vpop.permute.xlu0 %2287
        %2289 = vrot.lane.b32.xlu0 %v1272, 127
        %v2290 = vpop.permute.xlu0 %2289
        %2291 = vrot.lane.b32.xlu0 %v1273, 127
        %v2292 = vpop.permute.xlu0 %2291
        %2293 = vrot.lane.b32.xlu0 %v1274, 127
        %v2294 = vpop.permute.xlu0 %2293
        %2295 = vrot.lane.b32.xlu0 %v1275, 127
        %v2296 = vpop.permute.xlu0 %2295
        %vm2297 = vcmp.eq.s32.totalorder %v854, 127
        %2299 = vset.pattern.permute.xlu0 0
        %2300 = vperm.xlu0 %2299, %v1687
        %v2301 = vpop.permute.xlu0 %2300
        %2304 = vset.pattern.permute.xlu0 0
        %2305 = vperm.xlu0 %2304, %v1688
        %v2306 = vpop.permute.xlu0 %2305
        %2309 = vset.pattern.permute.xlu0 0
        %2310 = vperm.xlu0 %2309, %v1689
        %v2311 = vpop.permute.xlu0 %2310
        %2314 = vset.pattern.permute.xlu0 0
        %2315 = vperm.xlu0 %2314, %v1690
        %v2316 = vpop.permute.xlu0 %2315
        %2319 = vset.pattern.permute.xlu0 0
        %2320 = vperm.xlu0 %2319, %v1691
        %v2321 = vpop.permute.xlu0 %2320
        %2324 = vset.pattern.permute.xlu0 0
        %2325 = vperm.xlu0 %2324, %v1692
        %v2326 = vpop.permute.xlu0 %2325
        %2329 = vset.pattern.permute.xlu0 0
        %2330 = vperm.xlu0 %2329, %v1693
        %v2331 = vpop.permute.xlu0 %2330
        %2334 = vset.pattern.permute.xlu0 0
        %2335 = vperm.xlu0 %2334, %v1694
        %v2336 = vpop.permute.xlu0 %2335
        %2339 = vset.pattern.permute.xlu0 0
        %2340 = vperm.xlu0 %2339, %v1695
        %v2341 = vpop.permute.xlu0 %2340
        %2344 = vset.pattern.permute.xlu0 0
        %2345 = vperm.xlu0 %2344, %v1696
        %v2346 = vpop.permute.xlu0 %2345
        %2349 = vset.pattern.permute.xlu0 0
        %2350 = vperm.xlu0 %2349, %v1697
        %v2351 = vpop.permute.xlu0 %2350
        %2354 = vset.pattern.permute.xlu0 0
        %2355 = vperm.xlu0 %2354, %v1698
        %v2356 = vpop.permute.xlu0 %2355
        %2359 = vset.pattern.permute.xlu0 0
        %2360 = vperm.xlu0 %2359, %v1699
        %v2361 = vpop.permute.xlu0 %2360
        %2364 = vset.pattern.permute.xlu0 0
        %2365 = vperm.xlu0 %2364, %v1700
        %v2366 = vpop.permute.xlu0 %2365
        %2369 = vset.pattern.permute.xlu0 0
        %2370 = vperm.xlu0 %2369, %v1701
        %v2371 = vpop.permute.xlu0 %2370
        %2374 = vset.pattern.permute.xlu0 0
        %2375 = vperm.xlu0 %2374, %v1702
        %v2376 = vpop.permute.xlu0 %2375
        %v2378 = vsel %vm2297, %v2301, %v2266
        %v2379 = vsel %vm2297, %v2306, %v2268
        %v2380 = vsel %vm2297, %v2311, %v2270
        %v2381 = vsel %vm2297, %v2316, %v2272
        %v2382 = vsel %vm2297, %v2321, %v2274
        %v2383 = vsel %vm2297, %v2326, %v2276
        %v2384 = vsel %vm2297, %v2331, %v2278
        %v2385 = vsel %vm2297, %v2336, %v2280
        %v2386 = vsel %vm2297, %v2341, %v2282
        %v2387 = vsel %vm2297, %v2346, %v2284
        %v2388 = vsel %vm2297, %v2351, %v2286
        %v2389 = vsel %vm2297, %v2356, %v2288
        %v2390 = vsel %vm2297, %v2361, %v2290
        %v2391 = vsel %vm2297, %v2366, %v2292
        %v2392 = vsel %vm2297, %v2371, %v2294
        %v2393 = vsel %vm2297, %v2376, %v2296
        %2394 = vset.pattern.permute.xlu0 3
        %2395 = vperm.xlu0 %2394, %v1703
        %v2396 = vpop.permute.xlu0 %2395
        %2398 = vset.pattern.permute.xlu0 3
        %2399 = vperm.xlu0 %2398, %v1704
        %v2400 = vpop.permute.xlu0 %2399
        %2402 = vset.pattern.permute.xlu0 3
        %2403 = vperm.xlu0 %2402, %v1705
        %v2404 = vpop.permute.xlu0 %2403
        %2406 = vset.pattern.permute.xlu0 3
        %2407 = vperm.xlu0 %2406, %v1706
        %v2408 = vpop.permute.xlu0 %2407
        %2410 = vset.pattern.permute.xlu0 3
        %2411 = vperm.xlu0 %2410, %v1707
        %v2412 = vpop.permute.xlu0 %2411
        %2414 = vset.pattern.permute.xlu0 3
        %2415 = vperm.xlu0 %2414, %v1708
        %v2416 = vpop.permute.xlu0 %2415
        %2418 = vset.pattern.permute.xlu0 3
        %2419 = vperm.xlu0 %2418, %v1709
        %v2420 = vpop.permute.xlu0 %2419
        %2422 = vset.pattern.permute.xlu0 3
        %2423 = vperm.xlu0 %2422, %v1710
        %v2424 = vpop.permute.xlu0 %2423
        %2426 = vset.pattern.permute.xlu0 3
        %2427 = vperm.xlu0 %2426, %v1711
        %v2428 = vpop.permute.xlu0 %2427
        %2430 = vset.pattern.permute.xlu0 3
        %2431 = vperm.xlu0 %2430, %v1712
        %v2432 = vpop.permute.xlu0 %2431
        %2434 = vset.pattern.permute.xlu0 3
        %2435 = vperm.xlu0 %2434, %v1713
        %v2436 = vpop.permute.xlu0 %2435
        %2438 = vset.pattern.permute.xlu0 3
        %2439 = vperm.xlu0 %2438, %v1714
        %v2440 = vpop.permute.xlu0 %2439
        %2442 = vset.pattern.permute.xlu0 3
        %2443 = vperm.xlu0 %2442, %v1715
        %v2444 = vpop.permute.xlu0 %2443
        %2446 = vset.pattern.permute.xlu0 3
        %2447 = vperm.xlu0 %2446, %v1716
        %v2448 = vpop.permute.xlu0 %2447
        %2450 = vset.pattern.permute.xlu0 3
        %2451 = vperm.xlu0 %2450, %v1717
        %v2452 = vpop.permute.xlu0 %2451
        %2454 = vset.pattern.permute.xlu0 3
        %2455 = vperm.xlu0 %2454, %v1718
        %v2456 = vpop.permute.xlu0 %2455
        %v2458 = vmul.f32 %v2396, %v2378
        %v2459 = vmul.f32 %v2400, %v2379
        %v2460 = vmul.f32 %v2404, %v2380
        %v2461 = vmul.f32 %v2408, %v2381
        %v2462 = vmul.f32 %v2412, %v2382
        %v2463 = vmul.f32 %v2416, %v2383
        %v2464 = vmul.f32 %v2420, %v2384
        %v2465 = vmul.f32 %v2424, %v2385
        %v2466 = vmul.f32 %v2428, %v2386
        %v2467 = vmul.f32 %v2432, %v2387
        %v2468 = vmul.f32 %v2436, %v2388
        %v2469 = vmul.f32 %v2440, %v2389
        %v2470 = vmul.f32 %v2444, %v2390
        %v2471 = vmul.f32 %v2448, %v2391
        %v2472 = vmul.f32 %v2452, %v2392
        %v2473 = vmul.f32 %v2456, %v2393
        %v2474 = vadd.f32 %v2249, %v2458
        %v2475 = vadd.f32 %v2250, %v2459
        %v2476 = vadd.f32 %v2251, %v2460
        %v2477 = vadd.f32 %v2252, %v2461
        %v2478 = vadd.f32 %v2253, %v2462
        %v2479 = vadd.f32 %v2254, %v2463
        %v2480 = vadd.f32 %v2255, %v2464
        %v2481 = vadd.f32 %v2256, %v2465
        %v2482 = vadd.f32 %v2257, %v2466
        %v2483 = vadd.f32 %v2258, %v2467
        %v2484 = vadd.f32 %v2259, %v2468
        %v2485 = vadd.f32 %v2260, %v2469
        %v2486 = vadd.f32 %v2261, %v2470
        %v2487 = vadd.f32 %v2262, %v2471
        %v2488 = vadd.f32 %v2263, %v2472
        %v2489 = vadd.f32 %v2264, %v2473
        %2490 = vrot.lane.b32.xlu0 %v1260, 126
        %v2491 = vpop.permute.xlu0 %2490
        %2492 = vrot.lane.b32.xlu0 %v1261, 126
        %v2493 = vpop.permute.xlu0 %2492
        %2494 = vrot.lane.b32.xlu0 %v1262, 126
        %v2495 = vpop.permute.xlu0 %2494
        %2496 = vrot.lane.b32.xlu0 %v1263, 126
        %v2497 = vpop.permute.xlu0 %2496
        %2498 = vrot.lane.b32.xlu0 %v1264, 126
        %v2499 = vpop.permute.xlu0 %2498
        %2500 = vrot.lane.b32.xlu0 %v1265, 126
        %v2501 = vpop.permute.xlu0 %2500
        %2502 = vrot.lane.b32.xlu0 %v1266, 126
        %v2503 = vpop.permute.xlu0 %2502
        %2504 = vrot.lane.b32.xlu0 %v1267, 126
        %v2505 = vpop.permute.xlu0 %2504
        %2506 = vrot.lane.b32.xlu0 %v1268, 126
        %v2507 = vpop.permute.xlu0 %2506
        %2508 = vrot.lane.b32.xlu0 %v1269, 126
        %v2509 = vpop.permute.xlu0 %2508
        %2510 = vrot.lane.b32.xlu0 %v1270, 126
        %v2511 = vpop.permute.xlu0 %2510
        %2512 = vrot.lane.b32.xlu0 %v1271, 126
        %v2513 = vpop.permute.xlu0 %2512
        %2514 = vrot.lane.b32.xlu0 %v1272, 126
        %v2515 = vpop.permute.xlu0 %2514
        %2516 = vrot.lane.b32.xlu0 %v1273, 126
        %v2517 = vpop.permute.xlu0 %2516
        %2518 = vrot.lane.b32.xlu0 %v1274, 126
        %v2519 = vpop.permute.xlu0 %2518
        %2520 = vrot.lane.b32.xlu0 %v1275, 126
        %v2521 = vpop.permute.xlu0 %2520
        %vm2522 = vcmp.eq.s32.totalorder %v854, 126
        %v2523 = vsel %vm2522, %v2301, %v2491
        %v2524 = vsel %vm2522, %v2306, %v2493
        %v2525 = vsel %vm2522, %v2311, %v2495
        %v2526 = vsel %vm2522, %v2316, %v2497
        %v2527 = vsel %vm2522, %v2321, %v2499
        %v2528 = vsel %vm2522, %v2326, %v2501
        %v2529 = vsel %vm2522, %v2331, %v2503
        %v2530 = vsel %vm2522, %v2336, %v2505
        %v2531 = vsel %vm2522, %v2341, %v2507
        %v2532 = vsel %vm2522, %v2346, %v2509
        %v2533 = vsel %vm2522, %v2351, %v2511
        %v2534 = vsel %vm2522, %v2356, %v2513
        %v2535 = vsel %vm2522, %v2361, %v2515
        %v2536 = vsel %vm2522, %v2366, %v2517
        %v2537 = vsel %vm2522, %v2371, %v2519
        %v2538 = vsel %vm2522, %v2376, %v2521
        %2539 = vset.pattern.permute.xlu0 1
        %2540 = vperm.xlu0 %2539, %v1687
        %v2541 = vpop.permute.xlu0 %2540
        %2543 = vset.pattern.permute.xlu0 1
        %2544 = vperm.xlu0 %2543, %v1688
        %v2545 = vpop.permute.xlu0 %2544
        %2547 = vset.pattern.permute.xlu0 1
        %2548 = vperm.xlu0 %2547, %v1689
        %v2549 = vpop.permute.xlu0 %2548
        %2551 = vset.pattern.permute.xlu0 1
        %2552 = vperm.xlu0 %2551, %v1690
        %v2553 = vpop.permute.xlu0 %2552
        %2555 = vset.pattern.permute.xlu0 1
        %2556 = vperm.xlu0 %2555, %v1691
        %v2557 = vpop.permute.xlu0 %2556
        %2559 = vset.pattern.permute.xlu0 1
        %2560 = vperm.xlu0 %2559, %v1692
        %v2561 = vpop.permute.xlu0 %2560
        %2563 = vset.pattern.permute.xlu0 1
        %2564 = vperm.xlu0 %2563, %v1693
        %v2565 = vpop.permute.xlu0 %2564
        %2567 = vset.pattern.permute.xlu0 1
        %2568 = vperm.xlu0 %2567, %v1694
        %v2569 = vpop.permute.xlu0 %2568
        %2571 = vset.pattern.permute.xlu0 1
        %2572 = vperm.xlu0 %2571, %v1695
        %v2573 = vpop.permute.xlu0 %2572
        %2575 = vset.pattern.permute.xlu0 1
        %2576 = vperm.xlu0 %2575, %v1696
        %v2577 = vpop.permute.xlu0 %2576
        %2579 = vset.pattern.permute.xlu0 1
        %2580 = vperm.xlu0 %2579, %v1697
        %v2581 = vpop.permute.xlu0 %2580
        %2583 = vset.pattern.permute.xlu0 1
        %2584 = vperm.xlu0 %2583, %v1698
        %v2585 = vpop.permute.xlu0 %2584
        %2587 = vset.pattern.permute.xlu0 1
        %2588 = vperm.xlu0 %2587, %v1699
        %v2589 = vpop.permute.xlu0 %2588
        %2591 = vset.pattern.permute.xlu0 1
        %2592 = vperm.xlu0 %2591, %v1700
        %v2593 = vpop.permute.xlu0 %2592
        %2595 = vset.pattern.permute.xlu0 1
        %2596 = vperm.xlu0 %2595, %v1701
        %v2597 = vpop.permute.xlu0 %2596
        %2599 = vset.pattern.permute.xlu0 1
        %2600 = vperm.xlu0 %2599, %v1702
        %v2601 = vpop.permute.xlu0 %2600
        %v2603 = vsel %vm2297, %v2541, %v2523
        %v2604 = vsel %vm2297, %v2545, %v2524
        %v2605 = vsel %vm2297, %v2549, %v2525
        %v2606 = vsel %vm2297, %v2553, %v2526
        %v2607 = vsel %vm2297, %v2557, %v2527
        %v2608 = vsel %vm2297, %v2561, %v2528
        %v2609 = vsel %vm2297, %v2565, %v2529
        %v2610 = vsel %vm2297, %v2569, %v2530
        %v2611 = vsel %vm2297, %v2573, %v2531
        %v2612 = vsel %vm2297, %v2577, %v2532
        %v2613 = vsel %vm2297, %v2581, %v2533
        %v2614 = vsel %vm2297, %v2585, %v2534
        %v2615 = vsel %vm2297, %v2589, %v2535
        %v2616 = vsel %vm2297, %v2593, %v2536
        %v2617 = vsel %vm2297, %v2597, %v2537
        %v2618 = vsel %vm2297, %v2601, %v2538
        %2619 = vset.pattern.permute.xlu0 4
        %2620 = vperm.xlu0 %2619, %v1703
        %v2621 = vpop.permute.xlu0 %2620
        %2623 = vset.pattern.permute.xlu0 4
        %2624 = vperm.xlu0 %2623, %v1704
        %v2625 = vpop.permute.xlu0 %2624
        %2627 = vset.pattern.permute.xlu0 4
        %2628 = vperm.xlu0 %2627, %v1705
        %v2629 = vpop.permute.xlu0 %2628
        %2631 = vset.pattern.permute.xlu0 4
        %2632 = vperm.xlu0 %2631, %v1706
        %v2633 = vpop.permute.xlu0 %2632
        %2635 = vset.pattern.permute.xlu0 4
        %2636 = vperm.xlu0 %2635, %v1707
        %v2637 = vpop.permute.xlu0 %2636
        %2639 = vset.pattern.permute.xlu0 4
        %2640 = vperm.xlu0 %2639, %v1708
        %v2641 = vpop.permute.xlu0 %2640
        %2643 = vset.pattern.permute.xlu0 4
        %2644 = vperm.xlu0 %2643, %v1709
        %v2645 = vpop.permute.xlu0 %2644
        %2647 = vset.pattern.permute.xlu0 4
        %2648 = vperm.xlu0 %2647, %v1710
        %v2649 = vpop.permute.xlu0 %2648
        %2651 = vset.pattern.permute.xlu0 4
        %2652 = vperm.xlu0 %2651, %v1711
        %v2653 = vpop.permute.xlu0 %2652
        %2655 = vset.pattern.permute.xlu0 4
        %2656 = vperm.xlu0 %2655, %v1712
        %v2657 = vpop.permute.xlu0 %2656
        %2659 = vset.pattern.permute.xlu0 4
        %2660 = vperm.xlu0 %2659, %v1713
        %v2661 = vpop.permute.xlu0 %2660
        %2663 = vset.pattern.permute.xlu0 4
        %2664 = vperm.xlu0 %2663, %v1714
        %v2665 = vpop.permute.xlu0 %2664
        %2667 = vset.pattern.permute.xlu0 4
        %2668 = vperm.xlu0 %2667, %v1715
        %v2669 = vpop.permute.xlu0 %2668
        %2671 = vset.pattern.permute.xlu0 4
        %2672 = vperm.xlu0 %2671, %v1716
        %v2673 = vpop.permute.xlu0 %2672
        %2675 = vset.pattern.permute.xlu0 4
        %2676 = vperm.xlu0 %2675, %v1717
        %v2677 = vpop.permute.xlu0 %2676
        %2679 = vset.pattern.permute.xlu0 4
        %2680 = vperm.xlu0 %2679, %v1718
        %v2681 = vpop.permute.xlu0 %2680
        %v2683 = vmul.f32 %v2621, %v2603
        %v2684 = vmul.f32 %v2625, %v2604
        %v2685 = vmul.f32 %v2629, %v2605
        %v2686 = vmul.f32 %v2633, %v2606
        %v2687 = vmul.f32 %v2637, %v2607
        %v2688 = vmul.f32 %v2641, %v2608
        %v2689 = vmul.f32 %v2645, %v2609
        %v2690 = vmul.f32 %v2649, %v2610
        %v2691 = vmul.f32 %v2653, %v2611
        %v2692 = vmul.f32 %v2657, %v2612
        %v2693 = vmul.f32 %v2661, %v2613
        %v2694 = vmul.f32 %v2665, %v2614
        %v2695 = vmul.f32 %v2669, %v2615
        %v2696 = vmul.f32 %v2673, %v2616
        %v2697 = vmul.f32 %v2677, %v2617
        %v2698 = vmul.f32 %v2681, %v2618
        %v2699 = vadd.f32 %v2474, %v2683
        %v2700 = vadd.f32 %v2475, %v2684
        %v2701 = vadd.f32 %v2476, %v2685
        %v2702 = vadd.f32 %v2477, %v2686
        %v2703 = vadd.f32 %v2478, %v2687
        %v2704 = vadd.f32 %v2479, %v2688
        %v2705 = vadd.f32 %v2480, %v2689
        %v2706 = vadd.f32 %v2481, %v2690
        %v2707 = vadd.f32 %v2482, %v2691
        %v2708 = vadd.f32 %v2483, %v2692
        %v2709 = vadd.f32 %v2484, %v2693
        %v2710 = vadd.f32 %v2485, %v2694
        %v2711 = vadd.f32 %v2486, %v2695
        %v2712 = vadd.f32 %v2487, %v2696
        %v2713 = vadd.f32 %v2488, %v2697
        %v2714 = vadd.f32 %v2489, %v2698
        %v2715 = vld [vmem:[%s7] sm:$0xff]
        %v2716 = vld [vmem:[%s7 + $0x8] sm:$0xff]
        %v2717 = vld [vmem:[%s7 + $0x10] sm:$0xff]
        %v2718 = vld [vmem:[%s7 + $0x18] sm:$0xff]
        %v2719 = vld [vmem:[%s7 + $0x20] sm:$0xff]
        %v2720 = vld [vmem:[%s7 + $0x28] sm:$0xff]
        %v2721 = vld [vmem:[%s7 + $0x30] sm:$0xff]
        %v2722 = vld [vmem:[%s7 + $0x38] sm:$0xff]
        %v2723 = vld [vmem:[%s7 + $0x40] sm:$0xff]
        %v2724 = vld [vmem:[%s7 + $0x48] sm:$0xff]
        %v2725 = vld [vmem:[%s7 + $0x50] sm:$0xff]
        %v2726 = vld [vmem:[%s7 + $0x58] sm:$0xff]
        %v2727 = vld [vmem:[%s7 + $0x60] sm:$0xff]
        %v2728 = vld [vmem:[%s7 + $0x68] sm:$0xff]
        %v2729 = vld [vmem:[%s7 + $0x70] sm:$0xff]
        %v2730 = vld [vmem:[%s7 + $0x78] sm:$0xff]
        %2732 = vset.pattern.permute.xlu0 0
        %2733 = vperm.xlu0 %2732, %v2715
        %v2734 = vpop.permute.xlu0 %2733
        %2737 = vset.pattern.permute.xlu0 0
        %2738 = vperm.xlu0 %2737, %v2716
        %v2739 = vpop.permute.xlu0 %2738
        %2742 = vset.pattern.permute.xlu0 0
        %2743 = vperm.xlu0 %2742, %v2717
        %v2744 = vpop.permute.xlu0 %2743
        %2747 = vset.pattern.permute.xlu0 0
        %2748 = vperm.xlu0 %2747, %v2718
        %v2749 = vpop.permute.xlu0 %2748
        %2752 = vset.pattern.permute.xlu0 0
        %2753 = vperm.xlu0 %2752, %v2719
        %v2754 = vpop.permute.xlu0 %2753
        %2757 = vset.pattern.permute.xlu0 0
        %2758 = vperm.xlu0 %2757, %v2720
        %v2759 = vpop.permute.xlu0 %2758
        %2762 = vset.pattern.permute.xlu0 0
        %2763 = vperm.xlu0 %2762, %v2721
        %v2764 = vpop.permute.xlu0 %2763
        %2767 = vset.pattern.permute.xlu0 0
        %2768 = vperm.xlu0 %2767, %v2722
        %v2769 = vpop.permute.xlu0 %2768
        %2772 = vset.pattern.permute.xlu0 0
        %2773 = vperm.xlu0 %2772, %v2723
        %v2774 = vpop.permute.xlu0 %2773
        %2777 = vset.pattern.permute.xlu0 0
        %2778 = vperm.xlu0 %2777, %v2724
        %v2779 = vpop.permute.xlu0 %2778
        %2782 = vset.pattern.permute.xlu0 0
        %2783 = vperm.xlu0 %2782, %v2725
        %v2784 = vpop.permute.xlu0 %2783
        %2787 = vset.pattern.permute.xlu0 0
        %2788 = vperm.xlu0 %2787, %v2726
        %v2789 = vpop.permute.xlu0 %2788
        %2792 = vset.pattern.permute.xlu0 0
        %2793 = vperm.xlu0 %2792, %v2727
        %v2794 = vpop.permute.xlu0 %2793
        %2797 = vset.pattern.permute.xlu0 0
        %2798 = vperm.xlu0 %2797, %v2728
        %v2799 = vpop.permute.xlu0 %2798
        %2802 = vset.pattern.permute.xlu0 0
        %2803 = vperm.xlu0 %2802, %v2729
        %v2804 = vpop.permute.xlu0 %2803
        %2807 = vset.pattern.permute.xlu0 0
        %2808 = vperm.xlu0 %2807, %v2730
        %v2809 = vpop.permute.xlu0 %2808
        %v2811 = vadd.f32 %v2699, %v2734
        %v2812 = vadd.f32 %v2700, %v2739
        %v2813 = vadd.f32 %v2701, %v2744
        %v2814 = vadd.f32 %v2702, %v2749
        %v2815 = vadd.f32 %v2703, %v2754
        %v2816 = vadd.f32 %v2704, %v2759
        %v2817 = vadd.f32 %v2705, %v2764
        %v2818 = vadd.f32 %v2706, %v2769
        %v2819 = vadd.f32 %v2707, %v2774
        %v2820 = vadd.f32 %v2708, %v2779
        %v2821 = vadd.f32 %v2709, %v2784
        %v2822 = vadd.f32 %v2710, %v2789
        %v2823 = vadd.f32 %v2711, %v2794
        %v2824 = vadd.f32 %v2712, %v2799
        %v2825 = vadd.f32 %v2713, %v2804
        %v2826 = vadd.f32 %v2714, %v2809
        %v2827 = vmax.f32 %v2811, 0.0
        %v2828 = vmax.f32 %v2812, 0.0
        %v2829 = vmax.f32 %v2813, 0.0
        %v2830 = vmax.f32 %v2814, 0.0
        %v2831 = vmax.f32 %v2815, 0.0
        %v2832 = vmax.f32 %v2816, 0.0
        %v2833 = vmax.f32 %v2817, 0.0
        %v2834 = vmax.f32 %v2818, 0.0
        %v2835 = vmax.f32 %v2819, 0.0
        %v2836 = vmax.f32 %v2820, 0.0
        %v2837 = vmax.f32 %v2821, 0.0
        %v2838 = vmax.f32 %v2822, 0.0
        %v2839 = vmax.f32 %v2823, 0.0
        %v2840 = vmax.f32 %v2824, 0.0
        %v2841 = vmax.f32 %v2825, 0.0
        %v2842 = vmax.f32 %v2826, 0.0
        %v2843 = vsel %vm858, %v2827, 0.0
        %v2844 = vsel %vm858, %v2828, 0.0
        %v2845 = vsel %vm858, %v2829, 0.0
        %v2846 = vsel %vm858, %v2830, 0.0
        %v2847 = vsel %vm858, %v2831, 0.0
        %v2848 = vsel %vm858, %v2832, 0.0
        %v2849 = vsel %vm858, %v2833, 0.0
        %v2850 = vsel %vm858, %v2834, 0.0
        %v2851 = vsel %vm858, %v2835, 0.0
        %v2852 = vsel %vm858, %v2836, 0.0
        %v2853 = vsel %vm858, %v2837, 0.0
        %v2854 = vsel %vm858, %v2838, 0.0
        %v2855 = vsel %vm858, %v2839, 0.0
        %v2856 = vsel %vm858, %v2840, 0.0
        %v2857 = vsel %vm858, %v2841, 0.0
        %v2858 = vsel %vm858, %v2842, 0.0
        %v2859 = vld [vmem:[%s8] sm:$0xf]
        %v2860 = vld [vmem:[%s8 + $0x4] sm:$0xf]
        %v2861 = vld [vmem:[%s8 + $0x8] sm:$0xf]
        %v2862 = vld [vmem:[%s8 + $0xc] sm:$0xf]
        %v2863 = vld [vmem:[%s8 + $0x10] sm:$0xf]
        %v2864 = vld [vmem:[%s8 + $0x14] sm:$0xf]
        %v2865 = vld [vmem:[%s8 + $0x18] sm:$0xf]
        %v2866 = vld [vmem:[%s8 + $0x1c] sm:$0xf]
        %v2867 = vld [vmem:[%s8 + $0x20] sm:$0xf]
        %v2868 = vld [vmem:[%s8 + $0x24] sm:$0xf]
        %v2869 = vld [vmem:[%s8 + $0x28] sm:$0xf]
        %v2870 = vld [vmem:[%s8 + $0x2c] sm:$0xf]
        %v2871 = vld [vmem:[%s8 + $0x30] sm:$0xf]
        %v2872 = vld [vmem:[%s8 + $0x34] sm:$0xf]
        %v2873 = vld [vmem:[%s8 + $0x38] sm:$0xf]
        %v2874 = vld [vmem:[%s8 + $0x3c] sm:$0xf]
        %v2875 = vpack.c.bf16 %v2844, %v2843
        %v2876 = vpack.c.bf16 %v2846, %v2845
        %v2877 = vpack.c.bf16 %v2848, %v2847
        %v2878 = vpack.c.bf16 %v2850, %v2849
        %v2879 = vpack.c.bf16 %v2852, %v2851
        %v2880 = vpack.c.bf16 %v2854, %v2853
        %v2881 = vpack.c.bf16 %v2856, %v2855
        %v2882 = vpack.c.bf16 %v2858, %v2857
        %v2899 = vunpack.c.l.b16 %v2859
        %v2900 = vunpack.c.l.b16 %v2860
        %v2901 = vunpack.c.l.b16 %v2861
        %v2902 = vunpack.c.l.b16 %v2862
        %v2903 = vunpack.c.l.b16 %v2863
        %v2904 = vunpack.c.l.b16 %v2864
        %v2905 = vunpack.c.l.b16 %v2865
        %v2906 = vunpack.c.l.b16 %v2866
        %v2907 = vunpack.c.l.b16 %v2867
        %v2908 = vunpack.c.l.b16 %v2868
        %v2909 = vunpack.c.l.b16 %v2869
        %v2910 = vunpack.c.l.b16 %v2870
        %v2911 = vunpack.c.l.b16 %v2871
        %v2912 = vunpack.c.l.b16 %v2872
        %v2913 = vunpack.c.l.b16 %v2873
        %v2914 = vunpack.c.l.b16 %v2874
        %v2915 = vpack.c.b16 %v2900, %v2899
        %v2916 = vpack.c.b16 %v2902, %v2901
        %v2917 = vpack.c.b16 %v2904, %v2903
        %v2918 = vpack.c.b16 %v2906, %v2905
        %v2919 = vpack.c.b16 %v2908, %v2907
        %v2920 = vpack.c.b16 %v2910, %v2909
        %v2921 = vpack.c.b16 %v2912, %v2911
        %v2922 = vpack.c.b16 %v2914, %v2913
        %2931 = vmatprep.subr.bf16.mxu0 0
        %2932 = vmatpush1.bf16.msra.mxu0 %v2882
        %2933 = vmatprep.subr.bf16.mxu0 0
        %2934 = vmatpush1.bf16.msra.mxu0 %v2881
        %2935 = vmatprep.subr.bf16.mxu0 0
        %2936 = vmatpush1.bf16.msra.mxu0 %v2880
        %2937 = vmatprep.subr.bf16.mxu0 0
        %2938 = vmatpush1.bf16.msra.mxu0 %v2879
        %2939 = vmatprep.subr.bf16.mxu0 0
        %2940 = vmatpush1.bf16.msra.mxu0 %v2878
        %2941 = vmatprep.subr.bf16.mxu0 0
        %2942 = vmatpush1.bf16.msra.mxu0 %v2877
        %2943 = vmatprep.subr.bf16.mxu0 0
        %2944 = vmatpush1.bf16.msra.mxu0 %v2876
        %2945 = vmatprep.subr.bf16.mxu0 0
        %2946 = vmatpush1.bf16.msra.mxu0 %v2875
        %2947 = vmatprep.subr.bf16.mxu0 0
        %2948 = vmatpush2.bf16.msra.mxu0 0
        %2949 = vmatprep.subr.bf16.mxu0 0
        %2950 = vmatpush2.bf16.msra.mxu0 0
        %2951 = vmatprep.subr.bf16.mxu0 0
        %2952 = vmatpush2.bf16.msra.mxu0 0
        %2953 = vmatprep.subr.bf16.mxu0 0
        %2954 = vmatpush2.bf16.msra.mxu0 0
        %2955 = vmatprep.subr.bf16.mxu0 0
        %2956 = vmatpush2.bf16.msra.mxu0 0
        %2957 = vmatprep.subr.bf16.mxu0 0
        %2958 = vmatpush2.bf16.msra.mxu0 0
        %2959 = vmatprep.subr.bf16.mxu0 0
        %2960 = vmatpush2.bf16.msra.mxu0 0
        %2961 = vmatprep.subr.bf16.mxu0 0
        %2962 = vmatpush2.bf16.msra.mxu0 0
        %2963 = vmatprep.mubr.bf16.mxu0 0
        %2964 = vmatmul.mubr.bf16.gmra.mxu0 %v2915
        %v2965 = vpop.f32.mrf.mxu0
        %v2966 = vadd.f32 0.0, %v2965
        %v2967 = vpop.f32.mrf.mxu0
        %v2968 = vpop.f32.mrf.mxu0
        %v2969 = vadd.f32 0.0, %v2968
        %v2970 = vpop.f32.mrf.mxu0
        %2971 = vmatprep.mubr.bf16.mxu0 0
        %2972 = vmatmul.mubr.bf16.gmra.mxu0 %v2916
        %v2973 = vpop.f32.mrf.mxu0
        %v2974 = vadd.f32 0.0, %v2973
        %v2975 = vpop.f32.mrf.mxu0
        %v2976 = vpop.f32.mrf.mxu0
        %v2977 = vadd.f32 0.0, %v2976
        %v2978 = vpop.f32.mrf.mxu0
        %2979 = vmatprep.mubr.bf16.mxu0 0
        %2980 = vmatmul.mubr.bf16.gmra.mxu0 %v2917
        %v2981 = vpop.f32.mrf.mxu0
        %v2982 = vadd.f32 0.0, %v2981
        %v2983 = vpop.f32.mrf.mxu0
        %v2984 = vpop.f32.mrf.mxu0
        %v2985 = vadd.f32 0.0, %v2984
        %v2986 = vpop.f32.mrf.mxu0
        %2987 = vmatprep.mubr.bf16.mxu0 0
        %2988 = vmatmul.mubr.bf16.gmra.mxu0 %v2918
        %v2989 = vpop.f32.mrf.mxu0
        %v2990 = vadd.f32 0.0, %v2989
        %v2991 = vpop.f32.mrf.mxu0
        %v2992 = vpop.f32.mrf.mxu0
        %v2993 = vadd.f32 0.0, %v2992
        %v2994 = vpop.f32.mrf.mxu0
        %2995 = vmatprep.mubr.bf16.mxu0 0
        %2996 = vmatmul.mubr.bf16.gmra.mxu0 %v2919
        %v2997 = vpop.f32.mrf.mxu0
        %v2998 = vadd.f32 0.0, %v2997
        %v2999 = vpop.f32.mrf.mxu0
        %v3000 = vpop.f32.mrf.mxu0
        %v3001 = vadd.f32 0.0, %v3000
        %v3002 = vpop.f32.mrf.mxu0
        %3003 = vmatprep.mubr.bf16.mxu0 0
        %3004 = vmatmul.mubr.bf16.gmra.mxu0 %v2920
        %v3005 = vpop.f32.mrf.mxu0
        %v3006 = vadd.f32 0.0, %v3005
        %v3007 = vpop.f32.mrf.mxu0
        %v3008 = vpop.f32.mrf.mxu0
        %v3009 = vadd.f32 0.0, %v3008
        %v3010 = vpop.f32.mrf.mxu0
        %3011 = vmatprep.mubr.bf16.mxu0 0
        %3012 = vmatmul.mubr.bf16.gmra.mxu0 %v2921
        %v3013 = vpop.f32.mrf.mxu0
        %v3014 = vadd.f32 0.0, %v3013
        %v3015 = vpop.f32.mrf.mxu0
        %v3016 = vpop.f32.mrf.mxu0
        %v3017 = vadd.f32 0.0, %v3016
        %v3018 = vpop.f32.mrf.mxu0
        %3019 = vmatprep.mubr.bf16.mxu0 0
        %3020 = vmatmul.mubr.bf16.gmra.mxu0 %v2922
        %v3021 = vpop.f32.mrf.mxu0
        %v3022 = vadd.f32 0.0, %v3021
        %v3023 = vpop.f32.mrf.mxu0
        %v3024 = vpop.f32.mrf.mxu0
        %v3025 = vadd.f32 0.0, %v3024
        %v3026 = vpop.f32.mrf.mxu0
        %3027 = vdwg.mxu0
        %3028 = vst [vmem:[%s777] sm:$0xff] %v2966
        %3029 = vst [vmem:[%s777 + $0x8] sm:$0xff] %v2969
        %3030 = vst [vmem:[%s777 + $0x10] sm:$0xff] %v2974
        %3031 = vst [vmem:[%s777 + $0x18] sm:$0xff] %v2977
        %3032 = vst [vmem:[%s777 + $0x20] sm:$0xff] %v2982
        %3033 = vst [vmem:[%s777 + $0x28] sm:$0xff] %v2985
        %3034 = vst [vmem:[%s777 + $0x30] sm:$0xff] %v2990
        %3035 = vst [vmem:[%s777 + $0x38] sm:$0xff] %v2993
        %3036 = vst [vmem:[%s777 + $0x40] sm:$0xff] %v2998
        %3037 = vst [vmem:[%s777 + $0x48] sm:$0xff] %v3001
        %3038 = vst [vmem:[%s777 + $0x50] sm:$0xff] %v3006
        %3039 = vst [vmem:[%s777 + $0x58] sm:$0xff] %v3009
        %3040 = vst [vmem:[%s777 + $0x60] sm:$0xff] %v3014
        %3041 = vst [vmem:[%s777 + $0x68] sm:$0xff] %v3017
        %3042 = vst [vmem:[%s777 + $0x70] sm:$0xff] %v3022
        %3043 = vst [vmem:[%s777 + $0x78] sm:$0xff] %v3025
        %v3044 = vlaneseq
        %v3045 = vshrl.u32 %v3044, 7
        %p3046 = scmp.eq.s32.totalorder %s27, 0
        // Predicated region
        $region180: #{_forward.4} parent=166 // pred_check
          %p3047 = pneg %p3046
        $region181: #{_forward.4} parent=166 // pred_check_branch
          %3049 = sbr.rel (%p3047) target = $region183
        $region182: #{_forward.4} parent=166 // pred_region
          %3050 = vst [vmem:[%s803] sm:$0x3] 0.0
        $region183: #{_forward.4} parent=166 // pred_fallthru
          _
        %v3051 = vld [vmem:[%s803] sm:$0x3]
        %vm3052 = vcmp.eq.s32.totalorder %v3045, 0
        %v3053 = vadd.f32 %v2966, %v2969
        %v3054 = vadd.f32 %v3053, %v2974
        %v3055 = vadd.f32 %v3054, %v2977
        %v3056 = vadd.f32 %v3055, %v2982
        %v3057 = vadd.f32 %v3056, %v2985
        %v3058 = vadd.f32 %v3057, %v2990
        %v3059 = vadd.f32 %v3058, %v2993
        %v3060 = vadd.f32 %v3059, %v2998
        %v3061 = vadd.f32 %v3060, %v3001
        %v3062 = vadd.f32 %v3061, %v3006
        %v3063 = vadd.f32 %v3062, %v3009
        %v3064 = vadd.f32 %v3063, %v3014
        %v3065 = vadd.f32 %v3064, %v3017
        %v3066 = vadd.f32 %v3065, %v3022
        %v3067 = vadd.f32 %v3066, %v3025
        %3068 = vadd.xlane.f32.xlu0 %v3067
        %v3069 = vpop.xlane.xlu0 %3068
        %v3070 = vrot.slane %v3069, 4
        %v3071 = vadd.f32 %v3069, %v3070
        %v3072 = vrot.slane %v3071, 2
        %v3073 = vadd.f32 %v3071, %v3072
        %v3074 = vrot.slane %v3073, 1
        %v3075 = vadd.f32 %v3073, %v3074
        %s3076 = vtos %v3075
        %v3077 = vmul.f32 %v2966, %v2966
        %v3078 = vmul.f32 %v2969, %v2969
        %v3079 = vmul.f32 %v2974, %v2974
        %v3080 = vmul.f32 %v2977, %v2977
        %v3081 = vmul.f32 %v2982, %v2982
        %v3082 = vmul.f32 %v2985, %v2985
        %v3083 = vmul.f32 %v2990, %v2990
        %v3084 = vmul.f32 %v2993, %v2993
        %v3085 = vmul.f32 %v2998, %v2998
        %v3086 = vmul.f32 %v3001, %v3001
        %v3087 = vmul.f32 %v3006, %v3006
        %v3088 = vmul.f32 %v3009, %v3009
        %v3089 = vmul.f32 %v3014, %v3014
        %v3090 = vmul.f32 %v3017, %v3017
        %v3091 = vmul.f32 %v3022, %v3022
        %v3092 = vmul.f32 %v3025, %v3025
        %v3093 = vadd.f32 %v3077, %v3078
        %v3094 = vadd.f32 %v3093, %v3079
        %v3095 = vadd.f32 %v3094, %v3080
        %v3096 = vadd.f32 %v3095, %v3081
        %v3097 = vadd.f32 %v3096, %v3082
        %v3098 = vadd.f32 %v3097, %v3083
        %v3099 = vadd.f32 %v3098, %v3084
        %v3100 = vadd.f32 %v3099, %v3085
        %v3101 = vadd.f32 %v3100, %v3086
        %v3102 = vadd.f32 %v3101, %v3087
        %v3103 = vadd.f32 %v3102, %v3088
        %v3104 = vadd.f32 %v3103, %v3089
        %v3105 = vadd.f32 %v3104, %v3090
        %v3106 = vadd.f32 %v3105, %v3091
        %v3107 = vadd.f32 %v3106, %v3092
        %3108 = vadd.xlane.f32.xlu0 %v3107
        %v3109 = vpop.xlane.xlu0 %3108
        %v3110 = vrot.slane %v3109, 4
        %v3111 = vadd.f32 %v3109, %v3110
        %v3112 = vrot.slane %v3111, 2
        %v3113 = vadd.f32 %v3111, %v3112
        %v3114 = vrot.slane %v3113, 1
        %v3115 = vadd.f32 %v3113, %v3114
        %s3116 = vtos %v3115
        %v3117 = vstv %s3076
        %v3118 = vstv %s3116
        %v3119 = vsel %vm3052, %v3117, %v3118
        %v3120 = vadd.f32 %v3051, %v3119
        %3121 = vst [vmem:[%s803] sm:$0x3] %v3120
        %s3122 = sand.u32 %s276, 1
        %s3123 = sand.u32 %s276, 1
        %s3124 = smul.addr %s3123, 128
        %s3125 = scalar_lea.vmem [#allocation5], %s3124
        %p3126 = scmp.lt.s32.totalorder %s26, 1
        %s3127 = scalar_select %p3126, %s26, 1
        %s3128 = smul.addr %s3127, 2
        %s3129 = scalar_lea.vmem %s10, %s3128
        // Predicated region
        $region184: #{_forward.4} parent=166 // pred_check
          %p3130 = pneg %p286
        $region185: #{_forward.4} parent=166 // pred_check_branch
          %3132 = sbr.rel (%p3130) target = $region187
        $region186: #{_forward.4} parent=166 // pred_region
          %s3133 = smul.addr %s26, 48
          %s3134 = sadd.s32 %s27, %s3133
          %s3135 = smul.addr %s3134, 8
          %s3136 = scalar_lea.vmem %s9, %s3135
          // Predicated region
          $region188: #{_forward.4} parent=186 // pred_check
            _
          $region189: #{_forward.4} parent=186 // pred_check_branch
            %3138 = sbr.rel (0) target = $region191
          $region190: #{_forward.4} parent=186 // pred_region
            // Predicated region
            $region192: #{_forward.4} parent=190 // pred_check
              _
            $region193: #{_forward.4} parent=190 // pred_check_branch
              %3140 = sbr.rel (0) target = $region195
            $region194: #{_forward.4} parent=190 // pred_region
              // Predicated region
              $region207: #{_forward.4} parent=194 // pred_check
                _
              $region208: #{_forward.4} parent=194 // pred_check_branch
                %3186 = sbr.rel (0) target = $region210
              $region209: #{_forward.4} parent=194 // pred_region
                loop: start=0, step=1, limit=1
                $region211: #{_forward.4} parent=209 // loop_pre_header
                  _
                $region212: #{_forward.4} parent=209 // loop_header
                  %s3188 = sphi 0, %s3192
                  %p3189 = scmp.ge.s32.totalorder %s3188, 1
                  %s3193 = sphi %s3125, %s3125
                  %s3194 = sphi %s3136, %s3136
                $region213: #{_forward.4} parent=209 // loop_header_branch
                  %3191 = sbr.rel (%p3189) target = $region217
                $region214: #{_forward.4} parent=209 // loop_body
                  %v3195 = vld [vmem:[%s3193] sm:$0xff]
                  %3196 = vst [vmem:[%s3194] sm:$0xff] %v3195
                  %v3197 = vld [vmem:[%s3193 + $0x8] sm:$0xff]
                  %3198 = vst [vmem:[%s3194 + $0x18] sm:$0xff] %v3197
                  %v3199 = vld [vmem:[%s3193 + $0x10] sm:$0xff]
                  %3200 = vst [vmem:[%s3194 + $0x30] sm:$0xff] %v3199
                  %v3201 = vld [vmem:[%s3193 + $0x18] sm:$0xff]
                  %3202 = vst [vmem:[%s3194 + $0x48] sm:$0xff] %v3201
                  %v3203 = vld [vmem:[%s3193 + $0x20] sm:$0xff]
                  %3204 = vst [vmem:[%s3194 + $0x60] sm:$0xff] %v3203
                  %v3205 = vld [vmem:[%s3193 + $0x28] sm:$0xff]
                  %3206 = vst [vmem:[%s3194 + $0x78] sm:$0xff] %v3205
                  %v3207 = vld [vmem:[%s3193 + $0x30] sm:$0xff]
                  %3208 = vst [vmem:[%s3194 + $0x90] sm:$0xff] %v3207
                  %v3209 = vld [vmem:[%s3193 + $0x38] sm:$0xff]
                  %3210 = vst [vmem:[%s3194 + $0xa8] sm:$0xff] %v3209
                  %v3211 = vld [vmem:[%s3193 + $0x40] sm:$0xff]
                  %3212 = vst [vmem:[%s3194 + $0xc0] sm:$0xff] %v3211
                  %v3213 = vld [vmem:[%s3193 + $0x48] sm:$0xff]
                  %3214 = vst [vmem:[%s3194 + $0xd8] sm:$0xff] %v3213
                  %v3215 = vld [vmem:[%s3193 + $0x50] sm:$0xff]
                  %3216 = vst [vmem:[%s3194 + $0xf0] sm:$0xff] %v3215
                  %v3217 = vld [vmem:[%s3193 + $0x58] sm:$0xff]
                  %3218 = vst [vmem:[%s3194 + $0x108] sm:$0xff] %v3217
                  %v3219 = vld [vmem:[%s3193 + $0x60] sm:$0xff]
                  %3220 = vst [vmem:[%s3194 + $0x120] sm:$0xff] %v3219
                  %v3221 = vld [vmem:[%s3193 + $0x68] sm:$0xff]
                  %3222 = vst [vmem:[%s3194 + $0x138] sm:$0xff] %v3221
                  %v3223 = vld [vmem:[%s3193 + $0x70] sm:$0xff]
                  %3224 = vst [vmem:[%s3194 + $0x150] sm:$0xff] %v3223
                  %v3225 = vld [vmem:[%s3193 + $0x78] sm:$0xff]
                  %3226 = vst [vmem:[%s3194 + $0x168] sm:$0xff] %v3225
                $region215: #{_forward.4} parent=209 // loop_footer
                  %s3192 = sadd.s32 1, %s3188
                $region216: #{_forward.4} parent=209 // loop_footer_branch
                  %3187 = sbr.rel target = $region212
                $region217: #{_forward.4} parent=209 // loop_exit
                  _
              $region210: #{_forward.4} parent=194 // pred_fallthru
                _
              // Predicated region
              $region218: #{_forward.4} parent=194 // pred_check
                _
              $region219: #{_forward.4} parent=194 // pred_check_branch
                %3228 = sbr.rel target = $region221
              $region220: #{_forward.4} parent=194 // pred_region
                _
              $region221: #{_forward.4} parent=194 // pred_fallthru
                _
            $region195: #{_forward.4} parent=190 // pred_fallthru
              _
            // Predicated region
            $region196: #{_forward.4} parent=190 // pred_check
              _
            $region197: #{_forward.4} parent=190 // pred_check_branch
              %3142 = sbr.rel target = $region199
            $region198: #{_forward.4} parent=190 // pred_region
              %s3144 = ssub.s32 256, 1
              loop: start=0, step=1, limit=1
              $region200: #{_forward.4} parent=198 // loop_pre_header
                _
              $region201: #{_forward.4} parent=198 // loop_header
                %s3146 = sphi 0, %s3150
                %p3147 = scmp.ge.s32.totalorder %s3146, 1
                %s3151 = sphi %s3125, %s3125
                %s3152 = sphi %s3136, %s3136
              $region202: #{_forward.4} parent=198 // loop_header_branch
                %3149 = sbr.rel (%p3147) target = $region206
              $region203: #{_forward.4} parent=198 // loop_body
                %v3153 = vld [vmem:[%s3151] sm:%s3144]
                %3154 = vst [vmem:[%s3152] sm:%s3144] %v3153
                %v3155 = vld [vmem:[%s3151 + $0x8] sm:%s3144]
                %3156 = vst [vmem:[%s3152 + $0x18] sm:%s3144] %v3155
                %v3157 = vld [vmem:[%s3151 + $0x10] sm:%s3144]
                %3158 = vst [vmem:[%s3152 + $0x30] sm:%s3144] %v3157
                %v3159 = vld [vmem:[%s3151 + $0x18] sm:%s3144]
                %3160 = vst [vmem:[%s3152 + $0x48] sm:%s3144] %v3159
                %v3161 = vld [vmem:[%s3151 + $0x20] sm:%s3144]
                %3162 = vst [vmem:[%s3152 + $0x60] sm:%s3144] %v3161
                %v3163 = vld [vmem:[%s3151 + $0x28] sm:%s3144]
                %3164 = vst [vmem:[%s3152 + $0x78] sm:%s3144] %v3163
                %v3165 = vld [vmem:[%s3151 + $0x30] sm:%s3144]
                %3166 = vst [vmem:[%s3152 + $0x90] sm:%s3144] %v3165
                %v3167 = vld [vmem:[%s3151 + $0x38] sm:%s3144]
                %3168 = vst [vmem:[%s3152 + $0xa8] sm:%s3144] %v3167
                %v3169 = vld [vmem:[%s3151 + $0x40] sm:%s3144]
                %3170 = vst [vmem:[%s3152 + $0xc0] sm:%s3144] %v3169
                %v3171 = vld [vmem:[%s3151 + $0x48] sm:%s3144]
                %3172 = vst [vmem:[%s3152 + $0xd8] sm:%s3144] %v3171
                %v3173 = vld [vmem:[%s3151 + $0x50] sm:%s3144]
                %3174 = vst [vmem:[%s3152 + $0xf0] sm:%s3144] %v3173
                %v3175 = vld [vmem:[%s3151 + $0x58] sm:%s3144]
                %3176 = vst [vmem:[%s3152 + $0x108] sm:%s3144] %v3175
                %v3177 = vld [vmem:[%s3151 + $0x60] sm:%s3144]
                %3178 = vst [vmem:[%s3152 + $0x120] sm:%s3144] %v3177
                %v3179 = vld [vmem:[%s3151 + $0x68] sm:%s3144]
                %3180 = vst [vmem:[%s3152 + $0x138] sm:%s3144] %v3179
                %v3181 = vld [vmem:[%s3151 + $0x70] sm:%s3144]
                %3182 = vst [vmem:[%s3152 + $0x150] sm:%s3144] %v3181
                %v3183 = vld [vmem:[%s3151 + $0x78] sm:%s3144]
                %3184 = vst [vmem:[%s3152 + $0x168] sm:%s3144] %v3183
              $region204: #{_forward.4} parent=198 // loop_footer
                %s3150 = sadd.s32 1, %s3146
              $region205: #{_forward.4} parent=198 // loop_footer_branch
                %3145 = sbr.rel target = $region201
              $region206: #{_forward.4} parent=198 // loop_exit
                _
            $region199: #{_forward.4} parent=190 // pred_fallthru
              _
          $region191: #{_forward.4} parent=186 // pred_fallthru
            _
          %3229 = vnop
        $region187: #{_forward.4} parent=166 // pred_fallthru
          _
        // Predicated region
        $region222: #{_forward.4} parent=166 // pred_check
          %p3230 = pneg %p312
        $region223: #{_forward.4} parent=166 // pred_check_branch
          %3232 = sbr.rel (%p3230) target = $region225
        $region224: #{_forward.4} parent=166 // pred_region
          _
        $region225: #{_forward.4} parent=166 // pred_fallthru
          _
      $region167: #{_forward.4} parent=5 // pred_fallthru
        _
      %p3233 = scmp.le.s32.totalorder 2, %s17
      // Predicated region
      $region226: #{_forward.4} parent=5 // pred_check
        %p3234 = pneg %p3233
      $region227: #{_forward.4} parent=5 // pred_check_branch
        %3236 = sbr.rel (%p3234) target = $region229
      $region228: #{_forward.4} parent=5 // pred_region
        %s3237 = ssub.s32 %s17, 2
        // Predicated region
        $region230: #{_forward.4} parent=228 // pred_check
          %p3238 = pneg %p292
        $region231: #{_forward.4} parent=228 // pred_check_branch
          %3240 = sbr.rel (%p3238) target = $region233
        $region232: #{_forward.4} parent=228 // pred_region
          %s3241 = sand.u32 %s277, 1
          %s3242 = sand.u32 %s277, 1
          %s3243 = smul.addr %s3242, 128
          %s3244 = scalar_lea.vmem [#allocation5], %s3243
        $region233: #{_forward.4} parent=228 // pred_fallthru
          _
        // Predicated region
        $region234: #{_forward.4} parent=228 // pred_check
          %p3245 = pneg %p318
        $region235: #{_forward.4} parent=228 // pred_check_branch
          %3247 = sbr.rel (%p3245) target = $region237
        $region236: #{_forward.4} parent=228 // pred_region
          %p3248 = scmp.lt.s32.totalorder %s28, 1
          %s3249 = scalar_select %p3248, %s28, 1
          %s3250 = smul.addr %s3249, 2
          %s3251 = scalar_lea.vmem %s10, %s3250
        $region237: #{_forward.4} parent=228 // pred_fallthru
          _
      $region229: #{_forward.4} parent=5 // pred_fallthru
        _
    $region6: #{_forward.4} parent=1 // loop_footer
      %s21 = sadd.s32 1, %s17
    $region7: #{_forward.4} parent=1 // loop_footer_branch
      %16 = sbr.rel target = $region3
    $region8: #{_forward.4} parent=1 // loop_exit
      _

</llo_original>
